<compile_context>
chip_gen: v7x
topology: tpu7x:2x2x1
jax: 0.10.0
libtpu: 0.0.40
codegen_flags: <defaults>
</compile_context>

<pallas_src>
import jax
import jax.numpy as jnp
from jax.experimental import pallas as pl
from jax.experimental.pallas import tpu as pltpu

_VMEM = pl.BlockSpec(memory_space=pltpu.MemorySpace.VMEM)
_SMEM = pl.BlockSpec(memory_space=pltpu.MemorySpace.SMEM)
_BN_EPS = 1e-5
_BETA = 0.2


# -----------------------------------------------------------------------------
# Fused Pallas kernel
# -----------------------------------------------------------------------------
def _vqvae_kernel(x_ref,
                  r1_ref, m1_ref, a1_ref,
                  r2_ref, m2_ref, a2_ref,
                  mpre_ref, mpost_ref,
                  r3_ref, m3_ref, a3_ref,
                  r4_ref, m4_ref,
                  vec_ref, scal_ref,
                  out_ref, loss_ref):
    f32 = jnp.float32

    def conv(x, r_ref, mcat_ref):
        # conv / convT in the (n,h)x(c,w) layout with taps fused on the M side:
        #   Ycat = X @ [M_0 | ... | M_{T-1}];  out = sum_t R_t @ Ycat[:, t*cw:(t+1)*cw]
        ntaps = r_ref.shape[0]
        cw = mcat_ref.shape[1] // ntaps
        ycat = jnp.dot(x, mcat_ref[...], preferred_element_type=f32)
        acc = None
        for t in range(ntaps):
            y = jnp.dot(r_ref[t], ycat[:, t * cw:(t + 1) * cw],
                        preferred_element_type=f32)
            acc = y if acc is None else acc + y
        return acc

    def bn_relu(y, a_ref, gamma_c, beta_c):
        # Training-mode BatchNorm, single pass (E[y], E[y^2]).  The per-channel
        # averaging matrix A and the column-broadcast gamma/beta are host-side
        # constants, so this is 2 small matmuls + rsqrt + one FMA + ReLU.
        csum = jnp.sum(y, axis=0, keepdims=True)
        csq = jnp.sum(y * y, axis=0, keepdims=True)
        mean = jnp.dot(csum, a_ref[...], preferred_element_type=f32)
        msq = jnp.dot(csq, a_ref[...], preferred_element_type=f32)
        var = msq - mean * mean
        scale = gamma_c * jax.lax.rsqrt(var + _BN_EPS)
        shift = beta_c - mean * scale
        return jnp.maximum(y * scale + shift, 0.0)

    # ---- encoder: (N*16, 1*16) -> (N*8, 16*8) -> (N*4, 4*4) ----
    x = x_ref[...]
    h = bn_relu(conv(x, r1_ref, m1_ref), a1_ref,
                vec_ref[0:1, :], vec_ref[1:2, :])
    h = bn_relu(conv(h, r2_ref, m2_ref), a2_ref,
                vec_ref[4:5, 0:16], vec_ref[5:6, 0:16])

    # ---- pre-quant 1x1 conv: (N*4, 4*4) -> (N*4, 2*4) ----
    z = jnp.dot(h, mpre_ref[...], preferred_element_type=f32) + vec_ref[6:7, 0:8]
    w4 = z.shape[1] // 2
    z0 = z[:, :w4]            # channel-0 plane (N*H4, W4)
    z1 = z[:, w4:]            # channel-1 plane

    # ---- vector quantization (K=3, D=2), dot-product / argmax form:
    #      argmin_k ||z - e_k||^2 == argmax_k <z, e_k> - 0.5*||e_k||^2 ----
    e00 = scal_ref[0]; e01 = scal_ref[1]
    e10 = scal_ref[2]; e11 = scal_ref[3]
    e20 = scal_ref[4]; e21 = scal_ref[5]
    s0 = z0 * e00 + z1 * e01 - scal_ref[6]
    s1 = z0 * e10 + z1 * e11 - scal_ref[7]
    s2 = z0 * e20 + z1 * e21 - scal_ref[8]
    pick0 = (s0 >= s1) & (s0 >= s2)          # first-min tie break, like torch.argmin
    pick1 = jnp.logical_not(pick0) & (s1 >= s2)
    q0 = jnp.where(pick0, e00, jnp.where(pick1, e10, e20))
    q1 = jnp.where(pick0, e01, jnp.where(pick1, e11, e21))

    # codebook + beta*commitment loss (identical values in the forward pass)
    df0 = q0 - z0
    df1 = q1 - z1
    mse = (jnp.sum(df0 * df0) + jnp.sum(df1 * df1)) / (z.shape[0] * z.shape[1])
    loss_ref[0, 0] = (1.0 + _BETA) * mse

    # ---- post-quant 1x1 conv on the straight-through value (== q in forward);
    #      split the contraction so q never needs re-concatenation ----
    h = (jnp.dot(q0, mpost_ref[0:w4, :], preferred_element_type=f32) +
         jnp.dot(q1, mpost_ref[w4:, :], preferred_element_type=f32) +
         vec_ref[7:8, 0:16])

    # ---- decoder: convT+BN+ReLU -> lane-dense convT + bias + tanh ----
    h = bn_relu(conv(h, r3_ref, m3_ref), a3_ref,
                vec_ref[2:3, :], vec_ref[3:4, :])
    y = conv(h, r4_ref, m4_ref) + scal_ref[9]    # (N, Ho*Wo) lane-dense
    out_ref[...] = jnp.tanh(y)


# -----------------------------------------------------------------------------
# Weight repackaging (outside the kernel): conv -> (R taps, fused Mcat)
# -----------------------------------------------------------------------------
def _conv_rm(w, n, hi, wi, stride, pad):
    """Conv2d weight (Cout,Cin,k,k) -> R (k, N*Ho, N*Hi), Mcat (Cin*Wi, k*Cout*Wo)."""
    cout, cin, k, _ = w.shape
    ho = (hi + 2 * pad - k) // stride + 1
    wo = (wi + 2 * pad - k) // stride + 1
    eye_n = jnp.eye(n, dtype=jnp.float32)
    hi_idx = jnp.arange(hi)[None, :]
    ho_idx = jnp.arange(ho)[:, None]
    w_idx = jnp.arange(wi)[:, None]
    wo_idx = jnp.arange(wo)[None, :]
    j = w_idx - stride * wo_idx + pad                      # kernel col index (Wi, Wo)
    j_ok = ((j >= 0) & (j < k)).astype(jnp.float32)
    jc = jnp.clip(j, 0, k - 1)
    rs, ms = [], []
    for i in range(k):
        tgt = stride * ho_idx + i - pad                    # input row index (Ho, 1)
        r1 = ((hi_idx == tgt) & (tgt >= 0) & (tgt < hi)).astype(jnp.float32)
        rs.append(jnp.kron(eye_n, r1))                     # (N*Ho, N*Hi)
        blk = w[:, :, i, :][:, :, jc] * j_ok[None, None]   # (Cout, Cin, Wi, Wo)
        ms.append(blk.transpose(1, 2, 0, 3).reshape(cin * wi, cout * wo))
    return jnp.stack(rs), jnp.concatenate(ms, axis=1), ho, wo


def _convT_rm(w, n, hi, wi, stride, pad):
    """ConvTranspose2d weight (Cin,Cout,k,k) -> R (k, N*Ho, N*Hi), Mcat (Cin*Wi, k*Cout*Wo)."""
    cin, cout, k, _ = w.shape
    ho = (hi - 1) * stride - 2 * pad + k
    wo = (wi - 1) * stride - 2 * pad + k
    eye_n = jnp.eye(n, dtype=jnp.float32)
    hi_idx = jnp.arange(hi)[None, :]
    ho_idx = jnp.arange(ho)[:, None]
    wi_idx = jnp.arange(wi)[:, None]
    wo_idx = jnp.arange(wo)[None, :]
    kw = wo_idx - stride * wi_idx + pad                    # kernel col index (Wi, Wo)
    kw_ok = ((kw >= 0) & (kw < k)).astype(jnp.float32)
    kwc = jnp.clip(kw, 0, k - 1)
    rs, ms = [], []
    for a in range(k):
        r1 = ((ho_idx - stride * hi_idx + pad) == a).astype(jnp.float32)   # (Ho, Hi)
        rs.append(jnp.kron(eye_n, r1))
        blk = w[:, :, a, :][:, :, kwc] * kw_ok[None, None]  # (Cin, Cout, Wi, Wo)
        ms.append(blk.transpose(0, 2, 1, 3).reshape(cin * wi, cout * wo))
    return jnp.stack(rs), jnp.concatenate(ms, axis=1), ho, wo


def _convT_rm_lanedense(w, n, hi, wi, stride, pad):
    """ConvTranspose2d with output emitted lane-dense as (N, Cout*Ho*Wo):
       out = sum_h S_h @ (X @ P_h);  S_h (N, N*Hi) row pick, Pcat (Cin*Wi, Hi*Cout*Ho*Wo)."""
    cin, cout, k, _ = w.shape
    ho = (hi - 1) * stride - 2 * pad + k
    wo = (wi - 1) * stride - 2 * pad + k
    ho_idx = jnp.arange(ho)
    wi_idx = jnp.arange(wi)[:, None]
    wo_idx = jnp.arange(wo)[None, :]
    kw = wo_idx - stride * wi_idx + pad                    # (Wi, Wo)
    kw_ok = ((kw >= 0) & (kw < k)).astype(jnp.float32)
    kwc = jnp.clip(kw, 0, k - 1)
    rs, ps = [], []
    for h in range(hi):
        s = jnp.zeros((n, n * hi), jnp.float32)
        s = s.at[jnp.arange(n), jnp.arange(n) * hi + h].set(1.0)
        rs.append(s)
        kh = ho_idx - stride * h + pad                     # (Ho,)
        kh_ok = ((kh >= 0) & (kh < k)).astype(jnp.float32)
        khc = jnp.clip(kh, 0, k - 1)
        blk = w[:, :, khc, :][:, :, :, kwc]                # (Cin, Cout, Ho, Wi, Wo)
        blk = blk * kh_ok[None, None, :, None, None] * kw_ok[None, None, None, :, :]
        ps.append(blk.transpose(0, 3, 1, 2, 4).reshape(cin * wi, cout * ho * wo))
    return jnp.stack(rs), jnp.concatenate(ps, axis=1), ho, wo


def _conv1x1_m(w, wsp):
    """1x1 Conv2d weight (Cout,Cin,1,1) -> (Cin*wsp, Cout*wsp) channel-mix matrix."""
    wm = w[:, :, 0, 0]                                     # (Cout, Cin)
    eye_w = jnp.eye(wsp, dtype=jnp.float32)
    return jnp.einsum("oc,wv->cwov", wm, eye_w).reshape(w.shape[1] * wsp,
                                                        w.shape[0] * wsp)


def _bn_avg(cout, wsp, rows):
    """Per-channel averaging matrix A (cout*wsp, cout*wsp): mean_c = csum @ A."""
    ch = jnp.arange(cout * wsp) // wsp
    return (ch[:, None] == ch[None, :]).astype(jnp.float32) / float(rows * wsp)


# -----------------------------------------------------------------------------
# Forward pass (single pallas_call)
# -----------------------------------------------------------------------------
def vqvae_forward(x, p):
    n, cin, hin, win = x.shape
    f32 = jnp.float32

    # Tiny weight-derived constants (pure function of params + static shapes).
    r1, m1, h1, w1 = _conv_rm(p["enc1_w"], n, hin, win, 2, 1)
    a1 = _bn_avg(16, w1, n * h1)
    r2, m2, h2, w2 = _conv_rm(p["enc2_w"], n, h1, w1, 2, 1)
    a2 = _bn_avg(4, w2, n * h2)
    mpre = _conv1x1_m(p["pre_w"], w2)
    mpost = _conv1x1_m(p["post_w"], w2)
    r3, m3, h3, w3 = _convT_rm(p["dec1_w"], n, h2, w2, 2, 1)
    a3 = _bn_avg(16, w3, n * h3)
    r4, m4, h4, w4 = _convT_rm_lanedense(p["dec2_w"], n, h3, w3, 2, 1)

    # NOTE: enc1/enc2/dec1 conv biases are intentionally omitted: a per-channel
    # constant added before training-mode BatchNorm is exactly cancelled by the
    # mean subtraction, so forward values are unchanged.

    # All tiny per-channel vectors packed into one (8, 128) VMEM input.
    def row(v):
        return jnp.pad(v, (0, 128 - v.shape[0]))

    vec = jnp.stack([
        row(jnp.repeat(p["bn1_g"], w1)),   # row 0: gamma1 (128)
        row(jnp.repeat(p["bn1_b"], w1)),   # row 1: beta1  (128)
        row(jnp.repeat(p["bn3_g"], w3)),   # row 2: gamma3 (128)
        row(jnp.repeat(p["bn3_b"], w3)),   # row 3: beta3  (128)
        row(jnp.repeat(p["bn2_g"], w2)),   # row 4: gamma2 (16)
        row(jnp.repeat(p["bn2_b"], w2)),   # row 5: beta2  (16)
        row(jnp.repeat(p["pre_b"], w2)),   # row 6: pre-quant bias (8)
        row(jnp.repeat(p["post_b"], w2)),  # row 7: post-quant bias (16)
    ])

    # Codebook, 0.5*||e_k||^2 and the final conv bias as SMEM scalars.
    halfnorm = 0.5 * jnp.sum(p["emb"] * p["emb"], axis=1)
    scal = jnp.concatenate([p["emb"].reshape(-1), halfnorm,
                            p["dec2_b"].reshape(-1), jnp.zeros((2,), f32)])

    # (N, Cin, H, W) -> rows=(n,h), cols=(ci,w) channel-major (Cin == 1 here).
    x2d = x.transpose(0, 2, 1, 3).reshape(n * hin, cin * win)

    out2d, loss = pl.pallas_call(
        _vqvae_kernel,
        out_shape=(jax.ShapeDtypeStruct((n, h4 * w4), f32),   # lane-dense output
                   jax.ShapeDtypeStruct((1, 1), f32)),        # scalar loss (SMEM)
        in_specs=[_VMEM] * 15 + [_SMEM],
        out_specs=(_VMEM, _SMEM),
    )(x2d, r1, m1, a1, r2, m2, a2, mpre, mpost, r3, m3, a3, r4, m4, vec, scal)

    out = out2d.reshape(n, 1, h4, w4)                       # back to NCHW (Cout == 1)
    return out, loss[0, 0]


# -----------------------------------------------------------------------------
# Parameter init (PyTorch-like) and demo
# -----------------------------------------------------------------------------
def init_params(key):
    ks = jax.random.split(key, 16)

    def u(k, shape, fan_in):
        bound = 1.0 / float(fan_in) ** 0.5
        return jax.random.uniform(k, shape, jnp.float32, -bound, bound)

    p = {}
    p["enc1_w"] = u(ks[0], (16, 1, 4, 4), 1 * 16)
    p["enc1_b"] = u(ks[1], (16,), 1 * 16)       # unused: cancelled by training-mode BN
    p["bn1_g"] = jnp.ones((16,), jnp.float32)
    p["bn1_b"] = jnp.zeros((16,), jnp.float32)
    p["enc2_w"] = u(ks[2], (4, 16, 4, 4), 16 * 16)
    p["enc2_b"] = u(ks[3], (4,), 16 * 16)       # unused: cancelled by training-mode BN
    p["bn2_g"] = jnp.ones((4,), jnp.float32)
    p["bn2_b"] = jnp.zeros((4,), jnp.float32)
    p["pre_w"] = u(ks[4], (2, 4, 1, 1), 4)
    p["pre_b"] = u(ks[5], (2,), 4)
    p["emb"] = jax.random.normal(ks[6], (3, 2), jnp.float32)   # nn.Embedding ~ N(0,1)
    p["post_w"] = u(ks[7], (4, 2, 1, 1), 2)
    p["post_b"] = u(ks[8], (4,), 2)
    p["dec1_w"] = u(ks[9], (4, 16, 4, 4), 4 * 16)   # ConvTranspose2d: (Cin, Cout, k, k)
    p["dec1_b"] = u(ks[10], (16,), 4 * 16)      # unused: cancelled by training-mode BN
    p["bn3_g"] = jnp.ones((16,), jnp.float32)
    p["bn3_b"] = jnp.zeros((16,), jnp.float32)
    p["dec2_w"] = u(ks[11], (16, 1, 4, 4), 16 * 16)
    p["dec2_b"] = u(ks[12], (1,), 16 * 16)
    return p


if __name__ == "__main__":
    key = jax.random.PRNGKey(0)
    pkey, xkey = jax.random.split(key)
    params = init_params(pkey)
    x = jax.random.normal(xkey, (2, 1, 16, 16), jnp.float32)   # NCHW, 1 input channel
    out, loss = jax.jit(vqvae_forward)(x, params)
    jax.block_until_ready((out, loss))
    assert out.shape == (2, 1, 16, 16) and out.dtype == jnp.float32
    assert loss.shape == () and loss.dtype == jnp.float32
    assert bool(jnp.isfinite(loss)) and bool(jnp.all(jnp.isfinite(out)))
    print("KERNEL_OK")
</pallas_src>

<mosaic_0001>
module attributes {stable_mosaic.version = 11 : i64} {
  func.func @_vqvae_kernel(%arg0: memref<32x16xf32, #tpu.memory_space<vmem>>, %arg1: memref<4x16x32xf32, #tpu.memory_space<vmem>>, %arg2: memref<16x512xf32, #tpu.memory_space<vmem>>, %arg3: memref<128x128xf32, #tpu.memory_space<vmem>>, %arg4: memref<4x8x16xf32, #tpu.memory_space<vmem>>, %arg5: memref<128x64xf32, #tpu.memory_space<vmem>>, %arg6: memref<16x16xf32, #tpu.memory_space<vmem>>, %arg7: memref<16x8xf32, #tpu.memory_space<vmem>>, %arg8: memref<8x16xf32, #tpu.memory_space<vmem>>, %arg9: memref<4x16x8xf32, #tpu.memory_space<vmem>>, %arg10: memref<16x512xf32, #tpu.memory_space<vmem>>, %arg11: memref<128x128xf32, #tpu.memory_space<vmem>>, %arg12: memref<8x2x16xf32, #tpu.memory_space<vmem>>, %arg13: memref<128x2048xf32, #tpu.memory_space<vmem>>, %arg14: memref<8x128xf32, #tpu.memory_space<vmem>>, %arg15: memref<12xf32, #tpu.memory_space<smem>>, %arg16: memref<2x256xf32, #tpu.memory_space<vmem>>, %arg17: memref<1x1xf32, #tpu.memory_space<smem>>) attributes {dimension_semantics = [], scalar_prefetch = 0 : i64, scratch_operands = 0 : i64, tpu.core_type = #tpu.core_type<tc>} {
    %c0 = arith.constant 0 : index
    %c0_0 = arith.constant 0 : index
    %0 = vector.load %arg0[%c0, %c0_0] : memref<32x16xf32, #tpu.memory_space<vmem>>, vector<32x16xf32>
    %c0_1 = arith.constant 0 : index
    %c0_2 = arith.constant 0 : index
    %1 = vector.load %arg2[%c0_1, %c0_2] : memref<16x512xf32, #tpu.memory_space<vmem>>, vector<16x512xf32>
    %cst = arith.constant dense<0.000000e+00> : vector<32x512xf32>
    %2 = tpu.matmul %0, %1, %cst {dimension_numbers = #tpu.dot_dimension_numbers<[1], [0], [0], [1], [0, 0, 1, 1], [], []>} : vector<32x16xf32>, vector<16x512xf32>, vector<32x512xf32> -> vector<32x512xf32>
    %c0_3 = arith.constant 0 : index
    %c0_4 = arith.constant 0 : index
    %c0_5 = arith.constant 0 : index
    %3 = vector.load %arg1[%c0_3, %c0_4, %c0_5] : memref<4x16x32xf32, #tpu.memory_space<vmem>>, vector<1x16x32xf32>
    %4 = vector.shape_cast %3 : vector<1x16x32xf32> to vector<16x32xf32>
    %5 = vector.extract_strided_slice %2 {offsets = [0, 0], sizes = [32, 128], strides = [1, 1]} : vector<32x512xf32> to vector<32x128xf32>
    %cst_6 = arith.constant dense<0.000000e+00> : vector<16x128xf32>
    %6 = tpu.matmul %4, %5, %cst_6 {dimension_numbers = #tpu.dot_dimension_numbers<[1], [0], [0], [1], [0, 0, 1, 1], [], []>} : vector<16x32xf32>, vector<32x128xf32>, vector<16x128xf32> -> vector<16x128xf32>
    %c1 = arith.constant 1 : index
    %c0_7 = arith.constant 0 : index
    %c0_8 = arith.constant 0 : index
    %7 = vector.load %arg1[%c1, %c0_7, %c0_8] : memref<4x16x32xf32, #tpu.memory_space<vmem>>, vector<1x16x32xf32>
    %8 = vector.shape_cast %7 : vector<1x16x32xf32> to vector<16x32xf32>
    %9 = vector.extract_strided_slice %2 {offsets = [0, 128], sizes = [32, 128], strides = [1, 1]} : vector<32x512xf32> to vector<32x128xf32>
    %cst_9 = arith.constant dense<0.000000e+00> : vector<16x128xf32>
    %10 = tpu.matmul %8, %9, %cst_9 {dimension_numbers = #tpu.dot_dimension_numbers<[1], [0], [0], [1], [0, 0, 1, 1], [], []>} : vector<16x32xf32>, vector<32x128xf32>, vector<16x128xf32> -> vector<16x128xf32>
    %11 = arith.addf %6, %10 : vector<16x128xf32>
    %c2 = arith.constant 2 : index
    %c0_10 = arith.constant 0 : index
    %c0_11 = arith.constant 0 : index
    %12 = vector.load %arg1[%c2, %c0_10, %c0_11] : memref<4x16x32xf32, #tpu.memory_space<vmem>>, vector<1x16x32xf32>
    %13 = vector.shape_cast %12 : vector<1x16x32xf32> to vector<16x32xf32>
    %14 = vector.extract_strided_slice %2 {offsets = [0, 256], sizes = [32, 128], strides = [1, 1]} : vector<32x512xf32> to vector<32x128xf32>
    %cst_12 = arith.constant dense<0.000000e+00> : vector<16x128xf32>
    %15 = tpu.matmul %13, %14, %cst_12 {dimension_numbers = #tpu.dot_dimension_numbers<[1], [0], [0], [1], [0, 0, 1, 1], [], []>} : vector<16x32xf32>, vector<32x128xf32>, vector<16x128xf32> -> vector<16x128xf32>
    %16 = arith.addf %11, %15 : vector<16x128xf32>
    %c3 = arith.constant 3 : index
    %c0_13 = arith.constant 0 : index
    %c0_14 = arith.constant 0 : index
    %17 = vector.load %arg1[%c3, %c0_13, %c0_14] : memref<4x16x32xf32, #tpu.memory_space<vmem>>, vector<1x16x32xf32>
    %18 = vector.shape_cast %17 : vector<1x16x32xf32> to vector<16x32xf32>
    %19 = vector.extract_strided_slice %2 {offsets = [0, 384], sizes = [32, 128], strides = [1, 1]} : vector<32x512xf32> to vector<32x128xf32>
    %cst_15 = arith.constant dense<0.000000e+00> : vector<16x128xf32>
    %20 = tpu.matmul %18, %19, %cst_15 {dimension_numbers = #tpu.dot_dimension_numbers<[1], [0], [0], [1], [0, 0, 1, 1], [], []>} : vector<16x32xf32>, vector<32x128xf32>, vector<16x128xf32> -> vector<16x128xf32>
    %21 = arith.addf %16, %20 : vector<16x128xf32>
    %c0_16 = arith.constant 0 : index
    %c0_17 = arith.constant 0 : index
    %22 = vector.load %arg14[%c0_16, %c0_17] : memref<8x128xf32, #tpu.memory_space<vmem>>, vector<1x128xf32>
    %c1_18 = arith.constant 1 : index
    %c0_19 = arith.constant 0 : index
    %23 = vector.load %arg14[%c1_18, %c0_19] : memref<8x128xf32, #tpu.memory_space<vmem>>, vector<1x128xf32>
    %cst_20 = arith.constant dense<0.000000e+00> : vector<128xf32>
    %24 = vector.multi_reduction <add>, %21, %cst_20 [0] : vector<16x128xf32> to vector<128xf32>
    %25 = vector.shape_cast %24 : vector<128xf32> to vector<1x128xf32>
    %26 = arith.mulf %21, %21 : vector<16x128xf32>
    %cst_21 = arith.constant dense<0.000000e+00> : vector<128xf32>
    %27 = vector.multi_reduction <add>, %26, %cst_21 [0] : vector<16x128xf32> to vector<128xf32>
    %28 = vector.shape_cast %27 : vector<128xf32> to vector<1x128xf32>
    %c0_22 = arith.constant 0 : index
    %c0_23 = arith.constant 0 : index
    %29 = vector.load %arg3[%c0_22, %c0_23] : memref<128x128xf32, #tpu.memory_space<vmem>>, vector<128x128xf32>
    %cst_24 = arith.constant dense<0.000000e+00> : vector<1x128xf32>
    %30 = tpu.matmul %25, %29, %cst_24 {dimension_numbers = #tpu.dot_dimension_numbers<[1], [0], [0], [1], [0, 0, 1, 1], [], []>} : vector<1x128xf32>, vector<128x128xf32>, vector<1x128xf32> -> vector<1x128xf32>
    %c0_25 = arith.constant 0 : index
    %c0_26 = arith.constant 0 : index
    %31 = vector.load %arg3[%c0_25, %c0_26] : memref<128x128xf32, #tpu.memory_space<vmem>>, vector<128x128xf32>
    %cst_27 = arith.constant dense<0.000000e+00> : vector<1x128xf32>
    %32 = tpu.matmul %28, %31, %cst_27 {dimension_numbers = #tpu.dot_dimension_numbers<[1], [0], [0], [1], [0, 0, 1, 1], [], []>} : vector<1x128xf32>, vector<128x128xf32>, vector<1x128xf32> -> vector<1x128xf32>
    %33 = arith.mulf %30, %30 : vector<1x128xf32>
    %34 = arith.subf %32, %33 : vector<1x128xf32>
    %cst_28 = arith.constant 9.99999974E-6 : f32
    %35 = vector.broadcast %cst_28 : f32 to vector<1x128xf32>
    %36 = arith.addf %34, %35 : vector<1x128xf32>
    %37 = math.rsqrt %36 : vector<1x128xf32>
    %38 = arith.mulf %22, %37 : vector<1x128xf32>
    %39 = arith.mulf %30, %38 : vector<1x128xf32>
    %40 = arith.subf %23, %39 : vector<1x128xf32>
    %41 = vector.broadcast %38 : vector<1x128xf32> to vector<16x128xf32>
    %42 = arith.mulf %21, %41 : vector<16x128xf32>
    %43 = vector.broadcast %40 : vector<1x128xf32> to vector<16x128xf32>
    %44 = arith.addf %42, %43 : vector<16x128xf32>
    %cst_29 = arith.constant 0.000000e+00 : f32
    %45 = vector.broadcast %cst_29 : f32 to vector<16x128xf32>
    %46 = arith.maximumf %44, %45 : vector<16x128xf32>
    %c0_30 = arith.constant 0 : index
    %c0_31 = arith.constant 0 : index
    %47 = vector.load %arg5[%c0_30, %c0_31] : memref<128x64xf32, #tpu.memory_space<vmem>>, vector<128x64xf32>
    %cst_32 = arith.constant dense<0.000000e+00> : vector<16x64xf32>
    %48 = tpu.matmul %46, %47, %cst_32 {dimension_numbers = #tpu.dot_dimension_numbers<[1], [0], [0], [1], [0, 0, 1, 1], [], []>} : vector<16x128xf32>, vector<128x64xf32>, vector<16x64xf32> -> vector<16x64xf32>
    %c0_33 = arith.constant 0 : index
    %c0_34 = arith.constant 0 : index
    %c0_35 = arith.constant 0 : index
    %49 = vector.load %arg4[%c0_33, %c0_34, %c0_35] : memref<4x8x16xf32, #tpu.memory_space<vmem>>, vector<1x8x16xf32>
    %50 = vector.shape_cast %49 : vector<1x8x16xf32> to vector<8x16xf32>
    %51 = vector.extract_strided_slice %48 {offsets = [0, 0], sizes = [16, 16], strides = [1, 1]} : vector<16x64xf32> to vector<16x16xf32>
    %cst_36 = arith.constant dense<0.000000e+00> : vector<8x16xf32>
    %52 = tpu.matmul %50, %51, %cst_36 {dimension_numbers = #tpu.dot_dimension_numbers<[1], [0], [0], [1], [0, 0, 1, 1], [], []>} : vector<8x16xf32>, vector<16x16xf32>, vector<8x16xf32> -> vector<8x16xf32>
    %c1_37 = arith.constant 1 : index
    %c0_38 = arith.constant 0 : index
    %c0_39 = arith.constant 0 : index
    %53 = vector.load %arg4[%c1_37, %c0_38, %c0_39] : memref<4x8x16xf32, #tpu.memory_space<vmem>>, vector<1x8x16xf32>
    %54 = vector.shape_cast %53 : vector<1x8x16xf32> to vector<8x16xf32>
    %55 = vector.extract_strided_slice %48 {offsets = [0, 16], sizes = [16, 16], strides = [1, 1]} : vector<16x64xf32> to vector<16x16xf32>
    %cst_40 = arith.constant dense<0.000000e+00> : vector<8x16xf32>
    %56 = tpu.matmul %54, %55, %cst_40 {dimension_numbers = #tpu.dot_dimension_numbers<[1], [0], [0], [1], [0, 0, 1, 1], [], []>} : vector<8x16xf32>, vector<16x16xf32>, vector<8x16xf32> -> vector<8x16xf32>
    %57 = arith.addf %52, %56 : vector<8x16xf32>
    %c2_41 = arith.constant 2 : index
    %c0_42 = arith.constant 0 : index
    %c0_43 = arith.constant 0 : index
    %58 = vector.load %arg4[%c2_41, %c0_42, %c0_43] : memref<4x8x16xf32, #tpu.memory_space<vmem>>, vector<1x8x16xf32>
    %59 = vector.shape_cast %58 : vector<1x8x16xf32> to vector<8x16xf32>
    %60 = vector.extract_strided_slice %48 {offsets = [0, 32], sizes = [16, 16], strides = [1, 1]} : vector<16x64xf32> to vector<16x16xf32>
    %cst_44 = arith.constant dense<0.000000e+00> : vector<8x16xf32>
    %61 = tpu.matmul %59, %60, %cst_44 {dimension_numbers = #tpu.dot_dimension_numbers<[1], [0], [0], [1], [0, 0, 1, 1], [], []>} : vector<8x16xf32>, vector<16x16xf32>, vector<8x16xf32> -> vector<8x16xf32>
    %62 = arith.addf %57, %61 : vector<8x16xf32>
    %c3_45 = arith.constant 3 : index
    %c0_46 = arith.constant 0 : index
    %c0_47 = arith.constant 0 : index
    %63 = vector.load %arg4[%c3_45, %c0_46, %c0_47] : memref<4x8x16xf32, #tpu.memory_space<vmem>>, vector<1x8x16xf32>
    %64 = vector.shape_cast %63 : vector<1x8x16xf32> to vector<8x16xf32>
    %65 = vector.extract_strided_slice %48 {offsets = [0, 48], sizes = [16, 16], strides = [1, 1]} : vector<16x64xf32> to vector<16x16xf32>
    %cst_48 = arith.constant dense<0.000000e+00> : vector<8x16xf32>
    %66 = tpu.matmul %64, %65, %cst_48 {dimension_numbers = #tpu.dot_dimension_numbers<[1], [0], [0], [1], [0, 0, 1, 1], [], []>} : vector<8x16xf32>, vector<16x16xf32>, vector<8x16xf32> -> vector<8x16xf32>
    %67 = arith.addf %62, %66 : vector<8x16xf32>
    %c4 = arith.constant 4 : index
    %c0_49 = arith.constant 0 : index
    %68 = vector.load %arg14[%c4, %c0_49] : memref<8x128xf32, #tpu.memory_space<vmem>>, vector<1x16xf32>
    %c5 = arith.constant 5 : index
    %c0_50 = arith.constant 0 : index
    %69 = vector.load %arg14[%c5, %c0_50] : memref<8x128xf32, #tpu.memory_space<vmem>>, vector<1x16xf32>
    %cst_51 = arith.constant dense<0.000000e+00> : vector<16xf32>
    %70 = vector.multi_reduction <add>, %67, %cst_51 [0] : vector<8x16xf32> to vector<16xf32>
    %71 = vector.shape_cast %70 : vector<16xf32> to vector<1x16xf32>
    %72 = arith.mulf %67, %67 : vector<8x16xf32>
    %cst_52 = arith.constant dense<0.000000e+00> : vector<16xf32>
    %73 = vector.multi_reduction <add>, %72, %cst_52 [0] : vector<8x16xf32> to vector<16xf32>
    %74 = vector.shape_cast %73 : vector<16xf32> to vector<1x16xf32>
    %c0_53 = arith.constant 0 : index
    %c0_54 = arith.constant 0 : index
    %75 = vector.load %arg6[%c0_53, %c0_54] : memref<16x16xf32, #tpu.memory_space<vmem>>, vector<16x16xf32>
    %cst_55 = arith.constant dense<0.000000e+00> : vector<1x16xf32>
    %76 = tpu.matmul %71, %75, %cst_55 {dimension_numbers = #tpu.dot_dimension_numbers<[1], [0], [0], [1], [0, 0, 1, 1], [], []>} : vector<1x16xf32>, vector<16x16xf32>, vector<1x16xf32> -> vector<1x16xf32>
    %c0_56 = arith.constant 0 : index
    %c0_57 = arith.constant 0 : index
    %77 = vector.load %arg6[%c0_56, %c0_57] : memref<16x16xf32, #tpu.memory_space<vmem>>, vector<16x16xf32>
    %cst_58 = arith.constant dense<0.000000e+00> : vector<1x16xf32>
    %78 = tpu.matmul %74, %77, %cst_58 {dimension_numbers = #tpu.dot_dimension_numbers<[1], [0], [0], [1], [0, 0, 1, 1], [], []>} : vector<1x16xf32>, vector<16x16xf32>, vector<1x16xf32> -> vector<1x16xf32>
    %79 = arith.mulf %76, %76 : vector<1x16xf32>
    %80 = arith.subf %78, %79 : vector<1x16xf32>
    %cst_59 = arith.constant 9.99999974E-6 : f32
    %81 = vector.broadcast %cst_59 : f32 to vector<1x16xf32>
    %82 = arith.addf %80, %81 : vector<1x16xf32>
    %83 = math.rsqrt %82 : vector<1x16xf32>
    %84 = arith.mulf %68, %83 : vector<1x16xf32>
    %85 = arith.mulf %76, %84 : vector<1x16xf32>
    %86 = arith.subf %69, %85 : vector<1x16xf32>
    %87 = vector.broadcast %84 : vector<1x16xf32> to vector<8x16xf32>
    %88 = arith.mulf %67, %87 : vector<8x16xf32>
    %89 = vector.broadcast %86 : vector<1x16xf32> to vector<8x16xf32>
    %90 = arith.addf %88, %89 : vector<8x16xf32>
    %cst_60 = arith.constant 0.000000e+00 : f32
    %91 = vector.broadcast %cst_60 : f32 to vector<8x16xf32>
    %92 = arith.maximumf %90, %91 : vector<8x16xf32>
    %c0_61 = arith.constant 0 : index
    %c0_62 = arith.constant 0 : index
    %93 = vector.load %arg7[%c0_61, %c0_62] : memref<16x8xf32, #tpu.memory_space<vmem>>, vector<16x8xf32>
    %cst_63 = arith.constant dense<0.000000e+00> : vector<8x8xf32>
    %94 = tpu.matmul %92, %93, %cst_63 {dimension_numbers = #tpu.dot_dimension_numbers<[1], [0], [0], [1], [0, 0, 1, 1], [], []>} : vector<8x16xf32>, vector<16x8xf32>, vector<8x8xf32> -> vector<8x8xf32>
    %c6 = arith.constant 6 : index
    %c0_64 = arith.constant 0 : index
    %95 = vector.load %arg14[%c6, %c0_64] : memref<8x128xf32, #tpu.memory_space<vmem>>, vector<1x8xf32>
    %96 = vector.broadcast %95 : vector<1x8xf32> to vector<8x8xf32>
    %97 = arith.addf %94, %96 : vector<8x8xf32>
    %98 = vector.extract_strided_slice %97 {offsets = [0, 0], sizes = [8, 4], strides = [1, 1]} : vector<8x8xf32> to vector<8x4xf32>
    %99 = vector.extract_strided_slice %97 {offsets = [0, 4], sizes = [8, 4], strides = [1, 1]} : vector<8x8xf32> to vector<8x4xf32>
    %c0_65 = arith.constant 0 : index
    %100 = memref.load %arg15[%c0_65] : memref<12xf32, #tpu.memory_space<smem>>
    %c1_66 = arith.constant 1 : index
    %101 = memref.load %arg15[%c1_66] : memref<12xf32, #tpu.memory_space<smem>>
    %c2_67 = arith.constant 2 : index
    %102 = memref.load %arg15[%c2_67] : memref<12xf32, #tpu.memory_space<smem>>
    %c3_68 = arith.constant 3 : index
    %103 = memref.load %arg15[%c3_68] : memref<12xf32, #tpu.memory_space<smem>>
    %c4_69 = arith.constant 4 : index
    %104 = memref.load %arg15[%c4_69] : memref<12xf32, #tpu.memory_space<smem>>
    %c5_70 = arith.constant 5 : index
    %105 = memref.load %arg15[%c5_70] : memref<12xf32, #tpu.memory_space<smem>>
    %106 = vector.broadcast %100 : f32 to vector<8x4xf32>
    %107 = arith.mulf %98, %106 : vector<8x4xf32>
    %108 = vector.broadcast %101 : f32 to vector<8x4xf32>
    %109 = arith.mulf %99, %108 : vector<8x4xf32>
    %110 = arith.addf %107, %109 : vector<8x4xf32>
    %c6_71 = arith.constant 6 : index
    %111 = memref.load %arg15[%c6_71] : memref<12xf32, #tpu.memory_space<smem>>
    %112 = vector.broadcast %111 : f32 to vector<8x4xf32>
    %113 = arith.subf %110, %112 : vector<8x4xf32>
    %114 = vector.broadcast %102 : f32 to vector<8x4xf32>
    %115 = arith.mulf %98, %114 : vector<8x4xf32>
    %116 = vector.broadcast %103 : f32 to vector<8x4xf32>
    %117 = arith.mulf %99, %116 : vector<8x4xf32>
    %118 = arith.addf %115, %117 : vector<8x4xf32>
    %c7 = arith.constant 7 : index
    %119 = memref.load %arg15[%c7] : memref<12xf32, #tpu.memory_space<smem>>
    %120 = vector.broadcast %119 : f32 to vector<8x4xf32>
    %121 = arith.subf %118, %120 : vector<8x4xf32>
    %122 = vector.broadcast %104 : f32 to vector<8x4xf32>
    %123 = arith.mulf %98, %122 : vector<8x4xf32>
    %124 = vector.broadcast %105 : f32 to vector<8x4xf32>
    %125 = arith.mulf %99, %124 : vector<8x4xf32>
    %126 = arith.addf %123, %125 : vector<8x4xf32>
    %c8 = arith.constant 8 : index
    %127 = memref.load %arg15[%c8] : memref<12xf32, #tpu.memory_space<smem>>
    %128 = vector.broadcast %127 : f32 to vector<8x4xf32>
    %129 = arith.subf %126, %128 : vector<8x4xf32>
    %130 = arith.cmpf oge, %113, %121 : vector<8x4xf32>
    %131 = arith.cmpf oge, %113, %129 : vector<8x4xf32>
    %132 = arith.andi %130, %131 : vector<8x4xi1>
    %cst_72 = arith.constant dense<true> : vector<8x4xi1>
    %133 = arith.xori %132, %cst_72 : vector<8x4xi1>
    %134 = arith.cmpf oge, %121, %129 : vector<8x4xf32>
    %135 = arith.andi %133, %134 : vector<8x4xi1>
    %136 = vector.broadcast %102 : f32 to vector<8x4xf32>
    %137 = vector.broadcast %104 : f32 to vector<8x4xf32>
    %138 = arith.select %135, %136, %137 : vector<8x4xi1>, vector<8x4xf32>
    %139 = vector.broadcast %100 : f32 to vector<8x4xf32>
    %140 = arith.select %132, %139, %138 : vector<8x4xi1>, vector<8x4xf32>
    %141 = vector.broadcast %103 : f32 to vector<8x4xf32>
    %142 = vector.broadcast %105 : f32 to vector<8x4xf32>
    %143 = arith.select %135, %141, %142 : vector<8x4xi1>, vector<8x4xf32>
    %144 = vector.broadcast %101 : f32 to vector<8x4xf32>
    %145 = arith.select %132, %144, %143 : vector<8x4xi1>, vector<8x4xf32>
    %146 = arith.subf %140, %98 : vector<8x4xf32>
    %147 = arith.subf %145, %99 : vector<8x4xf32>
    %148 = arith.mulf %146, %146 : vector<8x4xf32>
    %149 = vector.shape_cast %148 : vector<8x4xf32> to vector<1x8x4xf32>
    %cst_73 = arith.constant dense<0.000000e+00> : vector<1xf32>
    %150 = vector.multi_reduction <add>, %149, %cst_73 [1, 2] : vector<1x8x4xf32> to vector<1xf32>
    %151 = vector.shape_cast %150 : vector<1xf32> to vector<1x1x1xf32>
    %152 = vector.extract %151[0, 0, 0] : f32 from vector<1x1x1xf32>
    %153 = arith.mulf %147, %147 : vector<8x4xf32>
    %154 = vector.shape_cast %153 : vector<8x4xf32> to vector<1x8x4xf32>
    %cst_74 = arith.constant dense<0.000000e+00> : vector<1xf32>
    %155 = vector.multi_reduction <add>, %154, %cst_74 [1, 2] : vector<1x8x4xf32> to vector<1xf32>
    %156 = vector.shape_cast %155 : vector<1xf32> to vector<1x1x1xf32>
    %157 = vector.extract %156[0, 0, 0] : f32 from vector<1x1x1xf32>
    %158 = arith.addf %152, %157 : f32
    %cst_75 = arith.constant 6.400000e+01 : f32
    %159 = arith.divf %158, %cst_75 : f32
    %cst_76 = arith.constant 1.200000e+00 : f32
    %160 = arith.mulf %cst_76, %159 : f32
    %c0_77 = arith.constant 0 : index
    %c0_78 = arith.constant 0 : index
    %161 = memref.load %arg17[%c0_77, %c0_78] : memref<1x1xf32, #tpu.memory_space<smem>>
    memref.store %160, %arg17[%c0_77, %c0_78] : memref<1x1xf32, #tpu.memory_space<smem>>
    %c0_79 = arith.constant 0 : index
    %c0_80 = arith.constant 0 : index
    %162 = vector.load %arg8[%c0_79, %c0_80] : memref<8x16xf32, #tpu.memory_space<vmem>>, vector<4x16xf32>
    %cst_81 = arith.constant dense<0.000000e+00> : vector<8x16xf32>
    %163 = tpu.matmul %140, %162, %cst_81 {dimension_numbers = #tpu.dot_dimension_numbers<[1], [0], [0], [1], [0, 0, 1, 1], [], []>} : vector<8x4xf32>, vector<4x16xf32>, vector<8x16xf32> -> vector<8x16xf32>
    %c4_82 = arith.constant 4 : index
    %c0_83 = arith.constant 0 : index
    %164 = vector.load %arg8[%c4_82, %c0_83] : memref<8x16xf32, #tpu.memory_space<vmem>>, vector<4x16xf32>
    %cst_84 = arith.constant dense<0.000000e+00> : vector<8x16xf32>
    %165 = tpu.matmul %145, %164, %cst_84 {dimension_numbers = #tpu.dot_dimension_numbers<[1], [0], [0], [1], [0, 0, 1, 1], [], []>} : vector<8x4xf32>, vector<4x16xf32>, vector<8x16xf32> -> vector<8x16xf32>
    %166 = arith.addf %163, %165 : vector<8x16xf32>
    %c7_85 = arith.constant 7 : index
    %c0_86 = arith.constant 0 : index
    %167 = vector.load %arg14[%c7_85, %c0_86] : memref<8x128xf32, #tpu.memory_space<vmem>>, vector<1x16xf32>
    %168 = vector.broadcast %167 : vector<1x16xf32> to vector<8x16xf32>
    %169 = arith.addf %166, %168 : vector<8x16xf32>
    %c0_87 = arith.constant 0 : index
    %c0_88 = arith.constant 0 : index
    %170 = vector.load %arg10[%c0_87, %c0_88] : memref<16x512xf32, #tpu.memory_space<vmem>>, vector<16x512xf32>
    %cst_89 = arith.constant dense<0.000000e+00> : vector<8x512xf32>
    %171 = tpu.matmul %169, %170, %cst_89 {dimension_numbers = #tpu.dot_dimension_numbers<[1], [0], [0], [1], [0, 0, 1, 1], [], []>} : vector<8x16xf32>, vector<16x512xf32>, vector<8x512xf32> -> vector<8x512xf32>
    %c0_90 = arith.constant 0 : index
    %c0_91 = arith.constant 0 : index
    %c0_92 = arith.constant 0 : index
    %172 = vector.load %arg9[%c0_90, %c0_91, %c0_92] : memref<4x16x8xf32, #tpu.memory_space<vmem>>, vector<1x16x8xf32>
    %173 = vector.shape_cast %172 : vector<1x16x8xf32> to vector<16x8xf32>
    %174 = vector.extract_strided_slice %171 {offsets = [0, 0], sizes = [8, 128], strides = [1, 1]} : vector<8x512xf32> to vector<8x128xf32>
    %cst_93 = arith.constant dense<0.000000e+00> : vector<16x128xf32>
    %175 = tpu.matmul %173, %174, %cst_93 {dimension_numbers = #tpu.dot_dimension_numbers<[1], [0], [0], [1], [0, 0, 1, 1], [], []>} : vector<16x8xf32>, vector<8x128xf32>, vector<16x128xf32> -> vector<16x128xf32>
    %c1_94 = arith.constant 1 : index
    %c0_95 = arith.constant 0 : index
    %c0_96 = arith.constant 0 : index
    %176 = vector.load %arg9[%c1_94, %c0_95, %c0_96] : memref<4x16x8xf32, #tpu.memory_space<vmem>>, vector<1x16x8xf32>
    %177 = vector.shape_cast %176 : vector<1x16x8xf32> to vector<16x8xf32>
    %178 = vector.extract_strided_slice %171 {offsets = [0, 128], sizes = [8, 128], strides = [1, 1]} : vector<8x512xf32> to vector<8x128xf32>
    %cst_97 = arith.constant dense<0.000000e+00> : vector<16x128xf32>
    %179 = tpu.matmul %177, %178, %cst_97 {dimension_numbers = #tpu.dot_dimension_numbers<[1], [0], [0], [1], [0, 0, 1, 1], [], []>} : vector<16x8xf32>, vector<8x128xf32>, vector<16x128xf32> -> vector<16x128xf32>
    %180 = arith.addf %175, %179 : vector<16x128xf32>
    %c2_98 = arith.constant 2 : index
    %c0_99 = arith.constant 0 : index
    %c0_100 = arith.constant 0 : index
    %181 = vector.load %arg9[%c2_98, %c0_99, %c0_100] : memref<4x16x8xf32, #tpu.memory_space<vmem>>, vector<1x16x8xf32>
    %182 = vector.shape_cast %181 : vector<1x16x8xf32> to vector<16x8xf32>
    %183 = vector.extract_strided_slice %171 {offsets = [0, 256], sizes = [8, 128], strides = [1, 1]} : vector<8x512xf32> to vector<8x128xf32>
    %cst_101 = arith.constant dense<0.000000e+00> : vector<16x128xf32>
    %184 = tpu.matmul %182, %183, %cst_101 {dimension_numbers = #tpu.dot_dimension_numbers<[1], [0], [0], [1], [0, 0, 1, 1], [], []>} : vector<16x8xf32>, vector<8x128xf32>, vector<16x128xf32> -> vector<16x128xf32>
    %185 = arith.addf %180, %184 : vector<16x128xf32>
    %c3_102 = arith.constant 3 : index
    %c0_103 = arith.constant 0 : index
    %c0_104 = arith.constant 0 : index
    %186 = vector.load %arg9[%c3_102, %c0_103, %c0_104] : memref<4x16x8xf32, #tpu.memory_space<vmem>>, vector<1x16x8xf32>
    %187 = vector.shape_cast %186 : vector<1x16x8xf32> to vector<16x8xf32>
    %188 = vector.extract_strided_slice %171 {offsets = [0, 384], sizes = [8, 128], strides = [1, 1]} : vector<8x512xf32> to vector<8x128xf32>
    %cst_105 = arith.constant dense<0.000000e+00> : vector<16x128xf32>
    %189 = tpu.matmul %187, %188, %cst_105 {dimension_numbers = #tpu.dot_dimension_numbers<[1], [0], [0], [1], [0, 0, 1, 1], [], []>} : vector<16x8xf32>, vector<8x128xf32>, vector<16x128xf32> -> vector<16x128xf32>
    %190 = arith.addf %185, %189 : vector<16x128xf32>
    %c2_106 = arith.constant 2 : index
    %c0_107 = arith.constant 0 : index
    %191 = vector.load %arg14[%c2_106, %c0_107] : memref<8x128xf32, #tpu.memory_space<vmem>>, vector<1x128xf32>
    %c3_108 = arith.constant 3 : index
    %c0_109 = arith.constant 0 : index
    %192 = vector.load %arg14[%c3_108, %c0_109] : memref<8x128xf32, #tpu.memory_space<vmem>>, vector<1x128xf32>
    %cst_110 = arith.constant dense<0.000000e+00> : vector<128xf32>
    %193 = vector.multi_reduction <add>, %190, %cst_110 [0] : vector<16x128xf32> to vector<128xf32>
    %194 = vector.shape_cast %193 : vector<128xf32> to vector<1x128xf32>
    %195 = arith.mulf %190, %190 : vector<16x128xf32>
    %cst_111 = arith.constant dense<0.000000e+00> : vector<128xf32>
    %196 = vector.multi_reduction <add>, %195, %cst_111 [0] : vector<16x128xf32> to vector<128xf32>
    %197 = vector.shape_cast %196 : vector<128xf32> to vector<1x128xf32>
    %c0_112 = arith.constant 0 : index
    %c0_113 = arith.constant 0 : index
    %198 = vector.load %arg11[%c0_112, %c0_113] : memref<128x128xf32, #tpu.memory_space<vmem>>, vector<128x128xf32>
    %cst_114 = arith.constant dense<0.000000e+00> : vector<1x128xf32>
    %199 = tpu.matmul %194, %198, %cst_114 {dimension_numbers = #tpu.dot_dimension_numbers<[1], [0], [0], [1], [0, 0, 1, 1], [], []>} : vector<1x128xf32>, vector<128x128xf32>, vector<1x128xf32> -> vector<1x128xf32>
    %c0_115 = arith.constant 0 : index
    %c0_116 = arith.constant 0 : index
    %200 = vector.load %arg11[%c0_115, %c0_116] : memref<128x128xf32, #tpu.memory_space<vmem>>, vector<128x128xf32>
    %cst_117 = arith.constant dense<0.000000e+00> : vector<1x128xf32>
    %201 = tpu.matmul %197, %200, %cst_117 {dimension_numbers = #tpu.dot_dimension_numbers<[1], [0], [0], [1], [0, 0, 1, 1], [], []>} : vector<1x128xf32>, vector<128x128xf32>, vector<1x128xf32> -> vector<1x128xf32>
    %202 = arith.mulf %199, %199 : vector<1x128xf32>
    %203 = arith.subf %201, %202 : vector<1x128xf32>
    %cst_118 = arith.constant 9.99999974E-6 : f32
    %204 = vector.broadcast %cst_118 : f32 to vector<1x128xf32>
    %205 = arith.addf %203, %204 : vector<1x128xf32>
    %206 = math.rsqrt %205 : vector<1x128xf32>
    %207 = arith.mulf %191, %206 : vector<1x128xf32>
    %208 = arith.mulf %199, %207 : vector<1x128xf32>
    %209 = arith.subf %192, %208 : vector<1x128xf32>
    %210 = vector.broadcast %207 : vector<1x128xf32> to vector<16x128xf32>
    %211 = arith.mulf %190, %210 : vector<16x128xf32>
    %212 = vector.broadcast %209 : vector<1x128xf32> to vector<16x128xf32>
    %213 = arith.addf %211, %212 : vector<16x128xf32>
    %cst_119 = arith.constant 0.000000e+00 : f32
    %214 = vector.broadcast %cst_119 : f32 to vector<16x128xf32>
    %215 = arith.maximumf %213, %214 : vector<16x128xf32>
    %c0_120 = arith.constant 0 : index
    %c0_121 = arith.constant 0 : index
    %216 = vector.load %arg13[%c0_120, %c0_121] : memref<128x2048xf32, #tpu.memory_space<vmem>>, vector<128x2048xf32>
    %cst_122 = arith.constant dense<0.000000e+00> : vector<16x2048xf32>
    %217 = tpu.matmul %215, %216, %cst_122 {dimension_numbers = #tpu.dot_dimension_numbers<[1], [0], [0], [1], [0, 0, 1, 1], [], []>} : vector<16x128xf32>, vector<128x2048xf32>, vector<16x2048xf32> -> vector<16x2048xf32>
    %c0_123 = arith.constant 0 : index
    %c0_124 = arith.constant 0 : index
    %c0_125 = arith.constant 0 : index
    %218 = vector.load %arg12[%c0_123, %c0_124, %c0_125] : memref<8x2x16xf32, #tpu.memory_space<vmem>>, vector<1x2x16xf32>
    %219 = vector.shape_cast %218 : vector<1x2x16xf32> to vector<2x16xf32>
    %220 = vector.extract_strided_slice %217 {offsets = [0, 0], sizes = [16, 256], strides = [1, 1]} : vector<16x2048xf32> to vector<16x256xf32>
    %cst_126 = arith.constant dense<0.000000e+00> : vector<2x256xf32>
    %221 = tpu.matmul %219, %220, %cst_126 {dimension_numbers = #tpu.dot_dimension_numbers<[1], [0], [0], [1], [0, 0, 1, 1], [], []>} : vector<2x16xf32>, vector<16x256xf32>, vector<2x256xf32> -> vector<2x256xf32>
    %c1_127 = arith.constant 1 : index
    %c0_128 = arith.constant 0 : index
    %c0_129 = arith.constant 0 : index
    %222 = vector.load %arg12[%c1_127, %c0_128, %c0_129] : memref<8x2x16xf32, #tpu.memory_space<vmem>>, vector<1x2x16xf32>
    %223 = vector.shape_cast %222 : vector<1x2x16xf32> to vector<2x16xf32>
    %224 = vector.extract_strided_slice %217 {offsets = [0, 256], sizes = [16, 256], strides = [1, 1]} : vector<16x2048xf32> to vector<16x256xf32>
    %cst_130 = arith.constant dense<0.000000e+00> : vector<2x256xf32>
    %225 = tpu.matmul %223, %224, %cst_130 {dimension_numbers = #tpu.dot_dimension_numbers<[1], [0], [0], [1], [0, 0, 1, 1], [], []>} : vector<2x16xf32>, vector<16x256xf32>, vector<2x256xf32> -> vector<2x256xf32>
    %226 = arith.addf %221, %225 : vector<2x256xf32>
    %c2_131 = arith.constant 2 : index
    %c0_132 = arith.constant 0 : index
    %c0_133 = arith.constant 0 : index
    %227 = vector.load %arg12[%c2_131, %c0_132, %c0_133] : memref<8x2x16xf32, #tpu.memory_space<vmem>>, vector<1x2x16xf32>
    %228 = vector.shape_cast %227 : vector<1x2x16xf32> to vector<2x16xf32>
    %229 = vector.extract_strided_slice %217 {offsets = [0, 512], sizes = [16, 256], strides = [1, 1]} : vector<16x2048xf32> to vector<16x256xf32>
    %cst_134 = arith.constant dense<0.000000e+00> : vector<2x256xf32>
    %230 = tpu.matmul %228, %229, %cst_134 {dimension_numbers = #tpu.dot_dimension_numbers<[1], [0], [0], [1], [0, 0, 1, 1], [], []>} : vector<2x16xf32>, vector<16x256xf32>, vector<2x256xf32> -> vector<2x256xf32>
    %231 = arith.addf %226, %230 : vector<2x256xf32>
    %c3_135 = arith.constant 3 : index
    %c0_136 = arith.constant 0 : index
    %c0_137 = arith.constant 0 : index
    %232 = vector.load %arg12[%c3_135, %c0_136, %c0_137] : memref<8x2x16xf32, #tpu.memory_space<vmem>>, vector<1x2x16xf32>
    %233 = vector.shape_cast %232 : vector<1x2x16xf32> to vector<2x16xf32>
    %234 = vector.extract_strided_slice %217 {offsets = [0, 768], sizes = [16, 256], strides = [1, 1]} : vector<16x2048xf32> to vector<16x256xf32>
    %cst_138 = arith.constant dense<0.000000e+00> : vector<2x256xf32>
    %235 = tpu.matmul %233, %234, %cst_138 {dimension_numbers = #tpu.dot_dimension_numbers<[1], [0], [0], [1], [0, 0, 1, 1], [], []>} : vector<2x16xf32>, vector<16x256xf32>, vector<2x256xf32> -> vector<2x256xf32>
    %236 = arith.addf %231, %235 : vector<2x256xf32>
    %c4_139 = arith.constant 4 : index
    %c0_140 = arith.constant 0 : index
    %c0_141 = arith.constant 0 : index
    %237 = vector.load %arg12[%c4_139, %c0_140, %c0_141] : memref<8x2x16xf32, #tpu.memory_space<vmem>>, vector<1x2x16xf32>
    %238 = vector.shape_cast %237 : vector<1x2x16xf32> to vector<2x16xf32>
    %239 = vector.extract_strided_slice %217 {offsets = [0, 1024], sizes = [16, 256], strides = [1, 1]} : vector<16x2048xf32> to vector<16x256xf32>
    %cst_142 = arith.constant dense<0.000000e+00> : vector<2x256xf32>
    %240 = tpu.matmul %238, %239, %cst_142 {dimension_numbers = #tpu.dot_dimension_numbers<[1], [0], [0], [1], [0, 0, 1, 1], [], []>} : vector<2x16xf32>, vector<16x256xf32>, vector<2x256xf32> -> vector<2x256xf32>
    %241 = arith.addf %236, %240 : vector<2x256xf32>
    %c5_143 = arith.constant 5 : index
    %c0_144 = arith.constant 0 : index
    %c0_145 = arith.constant 0 : index
    %242 = vector.load %arg12[%c5_143, %c0_144, %c0_145] : memref<8x2x16xf32, #tpu.memory_space<vmem>>, vector<1x2x16xf32>
    %243 = vector.shape_cast %242 : vector<1x2x16xf32> to vector<2x16xf32>
    %244 = vector.extract_strided_slice %217 {offsets = [0, 1280], sizes = [16, 256], strides = [1, 1]} : vector<16x2048xf32> to vector<16x256xf32>
    %cst_146 = arith.constant dense<0.000000e+00> : vector<2x256xf32>
    %245 = tpu.matmul %243, %244, %cst_146 {dimension_numbers = #tpu.dot_dimension_numbers<[1], [0], [0], [1], [0, 0, 1, 1], [], []>} : vector<2x16xf32>, vector<16x256xf32>, vector<2x256xf32> -> vector<2x256xf32>
    %246 = arith.addf %241, %245 : vector<2x256xf32>
    %c6_147 = arith.constant 6 : index
    %c0_148 = arith.constant 0 : index
    %c0_149 = arith.constant 0 : index
    %247 = vector.load %arg12[%c6_147, %c0_148, %c0_149] : memref<8x2x16xf32, #tpu.memory_space<vmem>>, vector<1x2x16xf32>
    %248 = vector.shape_cast %247 : vector<1x2x16xf32> to vector<2x16xf32>
    %249 = vector.extract_strided_slice %217 {offsets = [0, 1536], sizes = [16, 256], strides = [1, 1]} : vector<16x2048xf32> to vector<16x256xf32>
    %cst_150 = arith.constant dense<0.000000e+00> : vector<2x256xf32>
    %250 = tpu.matmul %248, %249, %cst_150 {dimension_numbers = #tpu.dot_dimension_numbers<[1], [0], [0], [1], [0, 0, 1, 1], [], []>} : vector<2x16xf32>, vector<16x256xf32>, vector<2x256xf32> -> vector<2x256xf32>
    %251 = arith.addf %246, %250 : vector<2x256xf32>
    %c7_151 = arith.constant 7 : index
    %c0_152 = arith.constant 0 : index
    %c0_153 = arith.constant 0 : index
    %252 = vector.load %arg12[%c7_151, %c0_152, %c0_153] : memref<8x2x16xf32, #tpu.memory_space<vmem>>, vector<1x2x16xf32>
    %253 = vector.shape_cast %252 : vector<1x2x16xf32> to vector<2x16xf32>
    %254 = vector.extract_strided_slice %217 {offsets = [0, 1792], sizes = [16, 256], strides = [1, 1]} : vector<16x2048xf32> to vector<16x256xf32>
    %cst_154 = arith.constant dense<0.000000e+00> : vector<2x256xf32>
    %255 = tpu.matmul %253, %254, %cst_154 {dimension_numbers = #tpu.dot_dimension_numbers<[1], [0], [0], [1], [0, 0, 1, 1], [], []>} : vector<2x16xf32>, vector<16x256xf32>, vector<2x256xf32> -> vector<2x256xf32>
    %256 = arith.addf %251, %255 : vector<2x256xf32>
    %c9 = arith.constant 9 : index
    %257 = memref.load %arg15[%c9] : memref<12xf32, #tpu.memory_space<smem>>
    %258 = vector.broadcast %257 : f32 to vector<2x256xf32>
    %259 = arith.addf %256, %258 : vector<2x256xf32>
    %260 = math.tanh %259 : vector<2x256xf32>
    %c0_155 = arith.constant 0 : index
    %c0_156 = arith.constant 0 : index
    %261 = vector.load %arg16[%c0_155, %c0_156] : memref<2x256xf32, #tpu.memory_space<vmem>>, vector<2x256xf32>
    tpu.vector_store %arg16[%c0_155, %c0_156], %260 {strides = array<i32>} : memref<2x256xf32, #tpu.memory_space<vmem>>, vector<2x256xf32>,
    return
  }
}

</mosaic_0001>

<llo_original>
// kernel: vqvae_forward.1
$region0: #{vqvae_forward.1}
  #allocation0 [shape = 'u32[]', space=smem, size = 0x4, offset = 0x4, fixed_abs, tag = 'smem constant byte address 0x4 - core index']
  #allocation1 [shape = 'u32[144,128]{1,0:T(1,128)}', space=vmem, size = 0x12000, scoped, tag = 'internal scratch']
  %s0 = inlined_call_operand.vmem [shape: f32[32,16], index: 0, kind: input, shape index: {}]
  %s1 = inlined_call_operand.vmem [shape: f32[4,16,32], index: 1, kind: input, shape index: {}]
  %s2 = inlined_call_operand.vmem [shape: f32[16,512], index: 2, kind: input, shape index: {}]
  %s3 = inlined_call_operand.vmem [shape: f32[128,128], index: 3, kind: input, shape index: {}, may-alias: {3,11}]
  %s4 = inlined_call_operand.vmem [shape: f32[4,8,16], index: 4, kind: input, shape index: {}]
  %s5 = inlined_call_operand.vmem [shape: f32[128,64], index: 5, kind: input, shape index: {}]
  %s6 = inlined_call_operand.vmem [shape: f32[16,16], index: 6, kind: input, shape index: {}]
  %s7 = inlined_call_operand.vmem [shape: f32[16,8], index: 7, kind: input, shape index: {}]
  %s8 = inlined_call_operand.vmem [shape: f32[8,16], index: 8, kind: input, shape index: {}]
  %s9 = inlined_call_operand.vmem [shape: f32[4,16,8], index: 9, kind: input, shape index: {}]
  %s10 = inlined_call_operand.vmem [shape: f32[16,512], index: 10, kind: input, shape index: {}]
  %s11 = inlined_call_operand.vmem [shape: f32[128,128], index: 11, kind: input, shape index: {}, may-alias: {3,11}]
  %s12 = inlined_call_operand.vmem [shape: f32[8,2,16], index: 12, kind: input, shape index: {}]
  %s13 = inlined_call_operand.vmem [shape: f32[128,2048], index: 13, kind: input, shape index: {}]
  %s14 = inlined_call_operand.vmem [shape: f32[8,128], index: 14, kind: input, shape index: {}]
  %s15 = inlined_call_operand.vmem [shape: f32[12], index: 15, kind: input, shape index: {}]
  %s16 = inlined_call_operand.vmem [shape: f32[2,256], index: 16, kind: output, shape index: {0}]
  %s17 = inlined_call_operand.hbm [shape: f32[1,1], index: 17, kind: output, shape index: {1}]
  %18 = xla_tuple %s16, %s17
  %s19 = sld [smem:[#allocation0]]
  $region86: #{vqvae_forward.1} parent=0
    _
  %s21 = ssub.s32 1, %s19
  %s22 = scalar_select 0, %s21, %s19
  $region1: #{vqvae_forward.1} parent=0
    #allocation2 [shape = 'u8[512]{0}', space=smem, size = 0x200, scoped, tag = 'input window, operand 15, single buffered']
    #allocation3 [shape = 's32[1]{0}', space=sflag, size = 0x4, scoped, tag = 'scoped memory for vqvae_forward.1']
    #allocation4 [shape = 's32[1]{0}', space=sflag, size = 0x4, scoped, tag = 'scoped memory for vqvae_forward.1']
    #allocation5 [shape = 'u8[512]{0}', space=smem, size = 0x200, scoped, tag = 'output window, operand 1, single buffered']
    %23 = vsyncpa [#allocation4], 0
    %24 = vsyncpa [#allocation3], 0
    // Predicated region
    $region2: #{vqvae_forward.1} parent=1 // pred_check
      _
    $region3: #{vqvae_forward.1} parent=1 // pred_check_branch
      %26 = sbr.rel (0) target = $region5
    $region4: #{vqvae_forward.1} parent=1 // pred_region
      _
    $region5: #{vqvae_forward.1} parent=1 // pred_fallthru
      _
    // Predicated region
    $region6: #{vqvae_forward.1} parent=1 // pred_check
      _
    $region7: #{vqvae_forward.1} parent=1 // pred_check_branch
      %28 = sbr.rel (0) target = $region9
    $region8: #{vqvae_forward.1} parent=1 // pred_region
      _
    $region9: #{vqvae_forward.1} parent=1 // pred_fallthru
      _
    // Predicated region
    $region10: #{vqvae_forward.1} parent=1 // pred_check
      _
    $region11: #{vqvae_forward.1} parent=1 // pred_check_branch
      %30 = sbr.rel (0) target = $region13
    $region12: #{vqvae_forward.1} parent=1 // pred_region
      _
    $region13: #{vqvae_forward.1} parent=1 // pred_fallthru
      _
    // Predicated region
    $region14: #{vqvae_forward.1} parent=1 // pred_check
      _
    $region15: #{vqvae_forward.1} parent=1 // pred_check_branch
      %32 = sbr.rel (0) target = $region17
    $region16: #{vqvae_forward.1} parent=1 // pred_region
      _
    $region17: #{vqvae_forward.1} parent=1 // pred_fallthru
      _
    // Predicated region
    $region18: #{vqvae_forward.1} parent=1 // pred_check
      _
    $region19: #{vqvae_forward.1} parent=1 // pred_check_branch
      %34 = sbr.rel (0) target = $region21
    $region20: #{vqvae_forward.1} parent=1 // pred_region
      _
    $region21: #{vqvae_forward.1} parent=1 // pred_fallthru
      _
    // Predicated region
    $region22: #{vqvae_forward.1} parent=1 // pred_check
      _
    $region23: #{vqvae_forward.1} parent=1 // pred_check_branch
      %36 = sbr.rel (0) target = $region25
    $region24: #{vqvae_forward.1} parent=1 // pred_region
      _
    $region25: #{vqvae_forward.1} parent=1 // pred_fallthru
      _
    // Predicated region
    $region26: #{vqvae_forward.1} parent=1 // pred_check
      _
    $region27: #{vqvae_forward.1} parent=1 // pred_check_branch
      %38 = sbr.rel (0) target = $region29
    $region28: #{vqvae_forward.1} parent=1 // pred_region
      _
    $region29: #{vqvae_forward.1} parent=1 // pred_fallthru
      _
    // Predicated region
    $region30: #{vqvae_forward.1} parent=1 // pred_check
      _
    $region31: #{vqvae_forward.1} parent=1 // pred_check_branch
      %40 = sbr.rel (0) target = $region33
    $region32: #{vqvae_forward.1} parent=1 // pred_region
      _
    $region33: #{vqvae_forward.1} parent=1 // pred_fallthru
      _
    // Predicated region
    $region34: #{vqvae_forward.1} parent=1 // pred_check
      _
    $region35: #{vqvae_forward.1} parent=1 // pred_check_branch
      %42 = sbr.rel (0) target = $region37
    $region36: #{vqvae_forward.1} parent=1 // pred_region
      _
    $region37: #{vqvae_forward.1} parent=1 // pred_fallthru
      _
    // Predicated region
    $region38: #{vqvae_forward.1} parent=1 // pred_check
      _
    $region39: #{vqvae_forward.1} parent=1 // pred_check_branch
      %44 = sbr.rel (0) target = $region41
    $region40: #{vqvae_forward.1} parent=1 // pred_region
      _
    $region41: #{vqvae_forward.1} parent=1 // pred_fallthru
      _
    // Predicated region
    $region42: #{vqvae_forward.1} parent=1 // pred_check
      _
    $region43: #{vqvae_forward.1} parent=1 // pred_check_branch
      %46 = sbr.rel (0) target = $region45
    $region44: #{vqvae_forward.1} parent=1 // pred_region
      _
    $region45: #{vqvae_forward.1} parent=1 // pred_fallthru
      _
    // Predicated region
    $region46: #{vqvae_forward.1} parent=1 // pred_check
      _
    $region47: #{vqvae_forward.1} parent=1 // pred_check_branch
      %48 = sbr.rel (0) target = $region49
    $region48: #{vqvae_forward.1} parent=1 // pred_region
      _
    $region49: #{vqvae_forward.1} parent=1 // pred_fallthru
      _
    // Predicated region
    $region50: #{vqvae_forward.1} parent=1 // pred_check
      _
    $region51: #{vqvae_forward.1} parent=1 // pred_check_branch
      %50 = sbr.rel (0) target = $region53
    $region52: #{vqvae_forward.1} parent=1 // pred_region
      _
    $region53: #{vqvae_forward.1} parent=1 // pred_fallthru
      _
    // Predicated region
    $region54: #{vqvae_forward.1} parent=1 // pred_check
      _
    $region55: #{vqvae_forward.1} parent=1 // pred_check_branch
      %52 = sbr.rel (0) target = $region57
    $region56: #{vqvae_forward.1} parent=1 // pred_region
      _
    $region57: #{vqvae_forward.1} parent=1 // pred_fallthru
      _
    // Predicated region
    $region58: #{vqvae_forward.1} parent=1 // pred_check
      _
    $region59: #{vqvae_forward.1} parent=1 // pred_check_branch
      %54 = sbr.rel (0) target = $region61
    $region60: #{vqvae_forward.1} parent=1 // pred_region
      _
    $region61: #{vqvae_forward.1} parent=1 // pred_fallthru
      _
    // Predicated region
    $region62: #{vqvae_forward.1} parent=1 // pred_check
      _
    $region63: #{vqvae_forward.1} parent=1 // pred_check_branch
      %56 = sbr.rel (0) target = $region65
    $region64: #{vqvae_forward.1} parent=1 // pred_region
      %s58 = ssub.s32 16, 16
      %59 = vsyncadd [#allocation4], %s58
      %s61 = sshll.u32 %s15, 4
      %s62 = int_to_ptr.vmem [resolvable:$true] %s61
      %64 = dma.vmem_to_smem %s62, 16, [#allocation2], [#allocation4]
    $region65: #{vqvae_forward.1} parent=1 // pred_fallthru
      _
    // Predicated region
    $region66: #{vqvae_forward.1} parent=1 // pred_check
      _
    $region67: #{vqvae_forward.1} parent=1 // pred_check_branch
      %66 = sbr.rel (0) target = $region69
    $region68: #{vqvae_forward.1} parent=1 // pred_region
      %67 = dma.done [#allocation4], 16
    $region69: #{vqvae_forward.1} parent=1 // pred_fallthru
      _
    %68 = sfence
    %v69 = vld [vmem:[%s0] sm:$0xff]
    %v70 = vld [vmem:[%s0 + $0x8] sm:$0xff]
    %v71 = vld [vmem:[%s0 + $0x10] sm:$0xff]
    %v72 = vld [vmem:[%s0 + $0x18] sm:$0xff]
    %v73 = vld [vmem:[%s2] sm:$0xff]
    %v74 = vld [vmem:[%s2 + $0x8] sm:$0xff]
    %v75 = vld [vmem:[%s2 + $0x10] sm:$0xff]
    %v76 = vld [vmem:[%s2 + $0x18] sm:$0xff]
    %v77 = vld [vmem:[%s2 + $0x20] sm:$0xff]
    %v78 = vld [vmem:[%s2 + $0x28] sm:$0xff]
    %v79 = vld [vmem:[%s2 + $0x30] sm:$0xff]
    %v80 = vld [vmem:[%s2 + $0x38] sm:$0xff]
    %vm81 = vcmask 130048
    %v83 = vsel %vm81, %v69, 0
    %v86 = vsel %vm81, %v70, 0
    %v89 = vsel %vm81, %v71, 0
    %v92 = vsel %vm81, %v72, 0
    %94 = vmatprep.subr.mxu0 %v74
    %95 = vmatpush1.msra.mxu0 %v73
    %96 = vmatprep.subr.mxu0 %v78
    %97 = vmatpush1.msra.mxu0 %v77
    %98 = vmatprep.subr.mxu0 0.0
    %99 = vmatpush1.msra.mxu0 0.0
    %100 = vmatprep.subr.mxu0 0.0
    %101 = vmatpush1.msra.mxu0 0.0
    %102 = vmatprep.subr.mxu0 0.0
    %103 = vmatpush1.msra.mxu0 0.0
    %104 = vmatprep.subr.mxu0 0.0
    %105 = vmatpush1.msra.mxu0 0.0
    %106 = vmatprep.subr.mxu0 0.0
    %107 = vmatpush1.msra.mxu0 0.0
    %108 = vmatprep.subr.mxu0 0.0
    %109 = vmatpush1.msra.mxu0 0.0
    %110 = vmatprep.subr.mxu0 0.0
    %111 = vmatpush1.msra.mxu0 0.0
    %112 = vmatprep.subr.mxu0 0.0
    %113 = vmatpush1.msra.mxu0 0.0
    %114 = vmatprep.subr.mxu0 0.0
    %115 = vmatpush1.msra.mxu0 0.0
    %116 = vmatprep.subr.mxu0 0.0
    %117 = vmatpush1.msra.mxu0 0.0
    %118 = vmatprep.subr.mxu0 0.0
    %119 = vmatpush1.msra.mxu0 0.0
    %120 = vmatprep.subr.mxu0 0.0
    %121 = vmatpush1.msra.mxu0 0.0
    %122 = vmatprep.subr.mxu0 0.0
    %123 = vmatpush1.msra.mxu0 0.0
    %124 = vmatprep.subr.mxu0 0.0
    %125 = vmatpush1.msra.mxu0 0.0
    %126 = vmatprep.subr.mxu0 0.0
    %127 = vmatpush1.msra.mxu0 0.0
    %128 = vmatprep.subr.mxu0 0.0
    %129 = vmatpush1.msra.mxu0 0.0
    %130 = vmatprep.subr.mxu0 0.0
    %131 = vmatpush1.msra.mxu0 0.0
    %132 = vmatprep.subr.mxu0 0.0
    %133 = vmatpush1.msra.mxu0 0.0
    %134 = vmatprep.subr.mxu0 0.0
    %135 = vmatpush1.msra.mxu0 0.0
    %136 = vmatprep.subr.mxu0 0.0
    %137 = vmatpush1.msra.mxu0 0.0
    %138 = vmatprep.subr.mxu0 0.0
    %139 = vmatpush1.msra.mxu0 0.0
    %140 = vmatprep.subr.mxu0 0.0
    %141 = vmatpush1.msra.mxu0 0.0
    %142 = vmatprep.subr.mxu0 0.0
    %143 = vmatpush1.msra.mxu0 0.0
    %144 = vmatprep.subr.mxu0 0.0
    %145 = vmatpush1.msra.mxu0 0.0
    %146 = vmatprep.subr.mxu0 0.0
    %147 = vmatpush1.msra.mxu0 0.0
    %148 = vmatprep.subr.mxu0 0.0
    %149 = vmatpush1.msra.mxu0 0.0
    %150 = vmatprep.subr.mxu0 0.0
    %151 = vmatpush1.msra.mxu0 0.0
    %152 = vmatprep.subr.mxu0 0.0
    %153 = vmatpush1.msra.mxu0 0.0
    %154 = vmatprep.subr.mxu0 0.0
    %155 = vmatpush1.msra.mxu0 0.0
    %156 = vmatprep.subr.mxu0 0.0
    %157 = vmatpush1.msra.mxu0 0.0
    %158 = vmatprep.mubr.f32.mxu0 0.0
    %159 = vmatmul.mubr.f32.gmra.mrb[0].mxu0 %v83
    %v160 = vpop.f32.mrb[0].mxu0
    %v161 = vadd.f32 0.0, %v160
    %v162 = vpop.f32.mrb[0].mxu0
    %v163 = vadd.f32 0.0, %v162
    %164 = vmatprep.mubr.f32.mxu0 0.0
    %165 = vmatmul.mubr.f32.gmra.mrb[0].mxu0 %v86
    %v166 = vpop.f32.mrb[0].mxu0
    %v167 = vadd.f32 0.0, %v166
    %v168 = vpop.f32.mrb[0].mxu0
    %v169 = vadd.f32 0.0, %v168
    %170 = vmatprep.mubr.f32.mxu0 0.0
    %171 = vmatmul.mubr.f32.gmra.mrb[0].mxu0 %v89
    %v172 = vpop.f32.mrb[0].mxu0
    %v173 = vadd.f32 0.0, %v172
    %v174 = vpop.f32.mrb[0].mxu0
    %v175 = vadd.f32 0.0, %v174
    %176 = vmatprep.mubr.f32.mxu0 0.0
    %177 = vmatmul.mubr.f32.gmra.mrb[0].mxu0 %v92
    %v178 = vpop.f32.mrb[0].mxu0
    %v179 = vadd.f32 0.0, %v178
    %v180 = vpop.f32.mrb[0].mxu0
    %v181 = vadd.f32 0.0, %v180
    %182 = vdwg.mxu0
    %183 = vmatprep.subr.mxu0 %v76
    %184 = vmatpush1.msra.mxu0 %v75
    %185 = vmatprep.subr.mxu0 %v80
    %186 = vmatpush1.msra.mxu0 %v79
    %187 = vmatprep.subr.mxu0 0.0
    %188 = vmatpush1.msra.mxu0 0.0
    %189 = vmatprep.subr.mxu0 0.0
    %190 = vmatpush1.msra.mxu0 0.0
    %191 = vmatprep.subr.mxu0 0.0
    %192 = vmatpush1.msra.mxu0 0.0
    %193 = vmatprep.subr.mxu0 0.0
    %194 = vmatpush1.msra.mxu0 0.0
    %195 = vmatprep.subr.mxu0 0.0
    %196 = vmatpush1.msra.mxu0 0.0
    %197 = vmatprep.subr.mxu0 0.0
    %198 = vmatpush1.msra.mxu0 0.0
    %199 = vmatprep.subr.mxu0 0.0
    %200 = vmatpush1.msra.mxu0 0.0
    %201 = vmatprep.subr.mxu0 0.0
    %202 = vmatpush1.msra.mxu0 0.0
    %203 = vmatprep.subr.mxu0 0.0
    %204 = vmatpush1.msra.mxu0 0.0
    %205 = vmatprep.subr.mxu0 0.0
    %206 = vmatpush1.msra.mxu0 0.0
    %207 = vmatprep.subr.mxu0 0.0
    %208 = vmatpush1.msra.mxu0 0.0
    %209 = vmatprep.subr.mxu0 0.0
    %210 = vmatpush1.msra.mxu0 0.0
    %211 = vmatprep.subr.mxu0 0.0
    %212 = vmatpush1.msra.mxu0 0.0
    %213 = vmatprep.subr.mxu0 0.0
    %214 = vmatpush1.msra.mxu0 0.0
    %215 = vmatprep.subr.mxu0 0.0
    %216 = vmatpush1.msra.mxu0 0.0
    %217 = vmatprep.subr.mxu0 0.0
    %218 = vmatpush1.msra.mxu0 0.0
    %219 = vmatprep.subr.mxu0 0.0
    %220 = vmatpush1.msra.mxu0 0.0
    %221 = vmatprep.subr.mxu0 0.0
    %222 = vmatpush1.msra.mxu0 0.0
    %223 = vmatprep.subr.mxu0 0.0
    %224 = vmatpush1.msra.mxu0 0.0
    %225 = vmatprep.subr.mxu0 0.0
    %226 = vmatpush1.msra.mxu0 0.0
    %227 = vmatprep.subr.mxu0 0.0
    %228 = vmatpush1.msra.mxu0 0.0
    %229 = vmatprep.subr.mxu0 0.0
    %230 = vmatpush1.msra.mxu0 0.0
    %231 = vmatprep.subr.mxu0 0.0
    %232 = vmatpush1.msra.mxu0 0.0
    %233 = vmatprep.subr.mxu0 0.0
    %234 = vmatpush1.msra.mxu0 0.0
    %235 = vmatprep.subr.mxu0 0.0
    %236 = vmatpush1.msra.mxu0 0.0
    %237 = vmatprep.subr.mxu0 0.0
    %238 = vmatpush1.msra.mxu0 0.0
    %239 = vmatprep.subr.mxu0 0.0
    %240 = vmatpush1.msra.mxu0 0.0
    %241 = vmatprep.subr.mxu0 0.0
    %242 = vmatpush1.msra.mxu0 0.0
    %243 = vmatprep.subr.mxu0 0.0
    %244 = vmatpush1.msra.mxu0 0.0
    %245 = vmatprep.subr.mxu0 0.0
    %246 = vmatpush1.msra.mxu0 0.0
    %247 = vmatprep.mubr.f32.mxu0 0.0
    %248 = vmatmul.mubr.f32.gmra.mrb[0].mxu0 %v83
    %v249 = vpop.f32.mrb[0].mxu0
    %v250 = vadd.f32 0.0, %v249
    %v251 = vpop.f32.mrb[0].mxu0
    %v252 = vadd.f32 0.0, %v251
    %253 = vmatprep.mubr.f32.mxu0 0.0
    %254 = vmatmul.mubr.f32.gmra.mrb[0].mxu0 %v86
    %v255 = vpop.f32.mrb[0].mxu0
    %v256 = vadd.f32 0.0, %v255
    %v257 = vpop.f32.mrb[0].mxu0
    %v258 = vadd.f32 0.0, %v257
    %259 = vmatprep.mubr.f32.mxu0 0.0
    %260 = vmatmul.mubr.f32.gmra.mrb[0].mxu0 %v89
    %v261 = vpop.f32.mrb[0].mxu0
    %v262 = vadd.f32 0.0, %v261
    %v263 = vpop.f32.mrb[0].mxu0
    %v264 = vadd.f32 0.0, %v263
    %265 = vmatprep.mubr.f32.mxu0 0.0
    %266 = vmatmul.mubr.f32.gmra.mrb[0].mxu0 %v92
    %v267 = vpop.f32.mrb[0].mxu0
    %v268 = vadd.f32 0.0, %v267
    %v269 = vpop.f32.mrb[0].mxu0
    %v270 = vadd.f32 0.0, %v269
    %271 = vdwg.mxu0
    %v272 = vld [vmem:[%s1] sm:$0xff]
    %v273 = vld [vmem:[%s1 + $0x8] sm:$0xff]
    %s274 = scalar_lea.vmem %s1, 16
    %v275 = vld [vmem:[%s274] sm:$0xff]
    %v276 = vld [vmem:[%s274 + $0x8] sm:$0xff]
    %vm277 = vcmask 261120
    %v279 = vsel %vm277, %v275, 0
    %v282 = vsel %vm277, %v276, 0
    %284 = vmatprep.subr.mxu0 0.0
    %285 = vmatpush1.msra.mxu0 %v163
    %286 = vmatprep.subr.mxu0 0.0
    %287 = vmatpush1.msra.mxu0 %v169
    %288 = vmatprep.subr.mxu0 0.0
    %289 = vmatpush1.msra.mxu0 %v175
    %290 = vmatprep.subr.mxu0 0.0
    %291 = vmatpush1.msra.mxu0 %v181
    %292 = vmatprep.subr.mxu0 0.0
    %293 = vmatpush1.msra.mxu0 0.0
    %294 = vmatprep.subr.mxu0 0.0
    %295 = vmatpush1.msra.mxu0 0.0
    %296 = vmatprep.subr.mxu0 0.0
    %297 = vmatpush1.msra.mxu0 0.0
    %298 = vmatprep.subr.mxu0 0.0
    %299 = vmatpush1.msra.mxu0 0.0
    %300 = vmatprep.subr.mxu0 0.0
    %301 = vmatpush1.msra.mxu0 0.0
    %302 = vmatprep.subr.mxu0 0.0
    %303 = vmatpush1.msra.mxu0 0.0
    %304 = vmatprep.subr.mxu0 0.0
    %305 = vmatpush1.msra.mxu0 0.0
    %306 = vmatprep.subr.mxu0 0.0
    %307 = vmatpush1.msra.mxu0 0.0
    %308 = vmatprep.subr.mxu0 0.0
    %309 = vmatpush1.msra.mxu0 0.0
    %310 = vmatprep.subr.mxu0 0.0
    %311 = vmatpush1.msra.mxu0 0.0
    %312 = vmatprep.subr.mxu0 0.0
    %313 = vmatpush1.msra.mxu0 0.0
    %314 = vmatprep.subr.mxu0 0.0
    %315 = vmatpush1.msra.mxu0 0.0
    %316 = vmatprep.subr.mxu0 0.0
    %317 = vmatpush1.msra.mxu0 0.0
    %318 = vmatprep.subr.mxu0 0.0
    %319 = vmatpush1.msra.mxu0 0.0
    %320 = vmatprep.subr.mxu0 0.0
    %321 = vmatpush1.msra.mxu0 0.0
    %322 = vmatprep.subr.mxu0 0.0
    %323 = vmatpush1.msra.mxu0 0.0
    %324 = vmatprep.subr.mxu0 0.0
    %325 = vmatpush1.msra.mxu0 0.0
    %326 = vmatprep.subr.mxu0 0.0
    %327 = vmatpush1.msra.mxu0 0.0
    %328 = vmatprep.subr.mxu0 0.0
    %329 = vmatpush1.msra.mxu0 0.0
    %330 = vmatprep.subr.mxu0 0.0
    %331 = vmatpush1.msra.mxu0 0.0
    %332 = vmatprep.subr.mxu0 0.0
    %333 = vmatpush1.msra.mxu0 0.0
    %334 = vmatprep.subr.mxu0 0.0
    %335 = vmatpush1.msra.mxu0 0.0
    %336 = vmatprep.subr.mxu0 0.0
    %337 = vmatpush1.msra.mxu0 0.0
    %338 = vmatprep.subr.mxu0 0.0
    %339 = vmatpush1.msra.mxu0 0.0
    %340 = vmatprep.subr.mxu0 0.0
    %341 = vmatpush1.msra.mxu0 0.0
    %342 = vmatprep.subr.mxu0 0.0
    %343 = vmatpush1.msra.mxu0 0.0
    %344 = vmatprep.subr.mxu0 0.0
    %345 = vmatpush1.msra.mxu0 0.0
    %346 = vmatprep.subr.mxu0 0.0
    %347 = vmatpush1.msra.mxu0 0.0
    %348 = vmatprep.mubr.f32.mxu0 0.0
    %349 = vmatmul.mubr.f32.gmra.mrb[0].mxu0 %v279
    %v350 = vpop.f32.mrb[0].mxu0
    %v351 = vadd.f32 0.0, %v350
    %v352 = vpop.f32.mrb[0].mxu0
    %353 = vmatprep.mubr.f32.mxu0 0.0
    %354 = vmatmul.mubr.f32.gmra.mrb[0].mxu0 %v282
    %v355 = vpop.f32.mrb[0].mxu0
    %v356 = vadd.f32 0.0, %v355
    %v357 = vpop.f32.mrb[0].mxu0
    %358 = vdwg.mxu0
    %v360 = vsel %vm277, %v272, 0
    %v363 = vsel %vm277, %v273, 0
    %365 = vmatprep.subr.mxu0 0.0
    %366 = vmatpush1.msra.mxu0 %v161
    %367 = vmatprep.subr.mxu0 0.0
    %368 = vmatpush1.msra.mxu0 %v167
    %369 = vmatprep.subr.mxu0 0.0
    %370 = vmatpush1.msra.mxu0 %v173
    %371 = vmatprep.subr.mxu0 0.0
    %372 = vmatpush1.msra.mxu0 %v179
    %373 = vmatprep.subr.mxu0 0.0
    %374 = vmatpush1.msra.mxu0 0.0
    %375 = vmatprep.subr.mxu0 0.0
    %376 = vmatpush1.msra.mxu0 0.0
    %377 = vmatprep.subr.mxu0 0.0
    %378 = vmatpush1.msra.mxu0 0.0
    %379 = vmatprep.subr.mxu0 0.0
    %380 = vmatpush1.msra.mxu0 0.0
    %381 = vmatprep.subr.mxu0 0.0
    %382 = vmatpush1.msra.mxu0 0.0
    %383 = vmatprep.subr.mxu0 0.0
    %384 = vmatpush1.msra.mxu0 0.0
    %385 = vmatprep.subr.mxu0 0.0
    %386 = vmatpush1.msra.mxu0 0.0
    %387 = vmatprep.subr.mxu0 0.0
    %388 = vmatpush1.msra.mxu0 0.0
    %389 = vmatprep.subr.mxu0 0.0
    %390 = vmatpush1.msra.mxu0 0.0
    %391 = vmatprep.subr.mxu0 0.0
    %392 = vmatpush1.msra.mxu0 0.0
    %393 = vmatprep.subr.mxu0 0.0
    %394 = vmatpush1.msra.mxu0 0.0
    %395 = vmatprep.subr.mxu0 0.0
    %396 = vmatpush1.msra.mxu0 0.0
    %397 = vmatprep.subr.mxu0 0.0
    %398 = vmatpush1.msra.mxu0 0.0
    %399 = vmatprep.subr.mxu0 0.0
    %400 = vmatpush1.msra.mxu0 0.0
    %401 = vmatprep.subr.mxu0 0.0
    %402 = vmatpush1.msra.mxu0 0.0
    %403 = vmatprep.subr.mxu0 0.0
    %404 = vmatpush1.msra.mxu0 0.0
    %405 = vmatprep.subr.mxu0 0.0
    %406 = vmatpush1.msra.mxu0 0.0
    %407 = vmatprep.subr.mxu0 0.0
    %408 = vmatpush1.msra.mxu0 0.0
    %409 = vmatprep.subr.mxu0 0.0
    %410 = vmatpush1.msra.mxu0 0.0
    %411 = vmatprep.subr.mxu0 0.0
    %412 = vmatpush1.msra.mxu0 0.0
    %413 = vmatprep.subr.mxu0 0.0
    %414 = vmatpush1.msra.mxu0 0.0
    %415 = vmatprep.subr.mxu0 0.0
    %416 = vmatpush1.msra.mxu0 0.0
    %417 = vmatprep.subr.mxu0 0.0
    %418 = vmatpush1.msra.mxu0 0.0
    %419 = vmatprep.subr.mxu0 0.0
    %420 = vmatpush1.msra.mxu0 0.0
    %421 = vmatprep.subr.mxu0 0.0
    %422 = vmatpush1.msra.mxu0 0.0
    %423 = vmatprep.subr.mxu0 0.0
    %424 = vmatpush1.msra.mxu0 0.0
    %425 = vmatprep.subr.mxu0 0.0
    %426 = vmatpush1.msra.mxu0 0.0
    %427 = vmatprep.subr.mxu0 0.0
    %428 = vmatpush1.msra.mxu0 0.0
    %429 = vmatprep.mubr.f32.mxu0 0.0
    %430 = vmatmul.mubr.f32.gmra.mrb[0].mxu0 %v360
    %v431 = vpop.f32.mrb[0].mxu0
    %v432 = vadd.f32 %v351, %v431
    %v433 = vpop.f32.mrb[0].mxu0
    %434 = vmatprep.mubr.f32.mxu0 0.0
    %435 = vmatmul.mubr.f32.gmra.mrb[0].mxu0 %v363
    %v436 = vpop.f32.mrb[0].mxu0
    %v437 = vadd.f32 %v356, %v436
    %v438 = vpop.f32.mrb[0].mxu0
    %439 = vdwg.mxu0
    %s440 = scalar_lea.vmem %s1, 32
    %v441 = vld [vmem:[%s440] sm:$0xff]
    %v442 = vld [vmem:[%s440 + $0x8] sm:$0xff]
    %v444 = vsel %vm277, %v441, 0
    %v447 = vsel %vm277, %v442, 0
    %449 = vmatprep.subr.mxu0 0.0
    %450 = vmatpush1.msra.mxu0 %v250
    %451 = vmatprep.subr.mxu0 0.0
    %452 = vmatpush1.msra.mxu0 %v256
    %453 = vmatprep.subr.mxu0 0.0
    %454 = vmatpush1.msra.mxu0 %v262
    %455 = vmatprep.subr.mxu0 0.0
    %456 = vmatpush1.msra.mxu0 %v268
    %457 = vmatprep.subr.mxu0 0.0
    %458 = vmatpush1.msra.mxu0 0.0
    %459 = vmatprep.subr.mxu0 0.0
    %460 = vmatpush1.msra.mxu0 0.0
    %461 = vmatprep.subr.mxu0 0.0
    %462 = vmatpush1.msra.mxu0 0.0
    %463 = vmatprep.subr.mxu0 0.0
    %464 = vmatpush1.msra.mxu0 0.0
    %465 = vmatprep.subr.mxu0 0.0
    %466 = vmatpush1.msra.mxu0 0.0
    %467 = vmatprep.subr.mxu0 0.0
    %468 = vmatpush1.msra.mxu0 0.0
    %469 = vmatprep.subr.mxu0 0.0
    %470 = vmatpush1.msra.mxu0 0.0
    %471 = vmatprep.subr.mxu0 0.0
    %472 = vmatpush1.msra.mxu0 0.0
    %473 = vmatprep.subr.mxu0 0.0
    %474 = vmatpush1.msra.mxu0 0.0
    %475 = vmatprep.subr.mxu0 0.0
    %476 = vmatpush1.msra.mxu0 0.0
    %477 = vmatprep.subr.mxu0 0.0
    %478 = vmatpush1.msra.mxu0 0.0
    %479 = vmatprep.subr.mxu0 0.0
    %480 = vmatpush1.msra.mxu0 0.0
    %481 = vmatprep.subr.mxu0 0.0
    %482 = vmatpush1.msra.mxu0 0.0
    %483 = vmatprep.subr.mxu0 0.0
    %484 = vmatpush1.msra.mxu0 0.0
    %485 = vmatprep.subr.mxu0 0.0
    %486 = vmatpush1.msra.mxu0 0.0
    %487 = vmatprep.subr.mxu0 0.0
    %488 = vmatpush1.msra.mxu0 0.0
    %489 = vmatprep.subr.mxu0 0.0
    %490 = vmatpush1.msra.mxu0 0.0
    %491 = vmatprep.subr.mxu0 0.0
    %492 = vmatpush1.msra.mxu0 0.0
    %493 = vmatprep.subr.mxu0 0.0
    %494 = vmatpush1.msra.mxu0 0.0
    %495 = vmatprep.subr.mxu0 0.0
    %496 = vmatpush1.msra.mxu0 0.0
    %497 = vmatprep.subr.mxu0 0.0
    %498 = vmatpush1.msra.mxu0 0.0
    %499 = vmatprep.subr.mxu0 0.0
    %500 = vmatpush1.msra.mxu0 0.0
    %501 = vmatprep.subr.mxu0 0.0
    %502 = vmatpush1.msra.mxu0 0.0
    %503 = vmatprep.subr.mxu0 0.0
    %504 = vmatpush1.msra.mxu0 0.0
    %505 = vmatprep.subr.mxu0 0.0
    %506 = vmatpush1.msra.mxu0 0.0
    %507 = vmatprep.subr.mxu0 0.0
    %508 = vmatpush1.msra.mxu0 0.0
    %509 = vmatprep.subr.mxu0 0.0
    %510 = vmatpush1.msra.mxu0 0.0
    %511 = vmatprep.subr.mxu0 0.0
    %512 = vmatpush1.msra.mxu0 0.0
    %513 = vmatprep.mubr.f32.mxu0 0.0
    %514 = vmatmul.mubr.f32.gmra.mrb[0].mxu0 %v444
    %v515 = vpop.f32.mrb[0].mxu0
    %v516 = vadd.f32 0.0, %v515
    %v517 = vpop.f32.mrb[0].mxu0
    %518 = vmatprep.mubr.f32.mxu0 0.0
    %519 = vmatmul.mubr.f32.gmra.mrb[0].mxu0 %v447
    %v520 = vpop.f32.mrb[0].mxu0
    %v521 = vadd.f32 0.0, %v520
    %v522 = vpop.f32.mrb[0].mxu0
    %523 = vdwg.mxu0
    %v524 = vadd.f32 %v432, %v516
    %v525 = vadd.f32 %v437, %v521
    %s526 = scalar_lea.vmem %s1, 48
    %v527 = vld [vmem:[%s526] sm:$0xff]
    %v528 = vld [vmem:[%s526 + $0x8] sm:$0xff]
    %v530 = vsel %vm277, %v527, 0
    %v533 = vsel %vm277, %v528, 0
    %535 = vmatprep.subr.mxu0 0.0
    %536 = vmatpush1.msra.mxu0 %v252
    %537 = vmatprep.subr.mxu0 0.0
    %538 = vmatpush1.msra.mxu0 %v258
    %539 = vmatprep.subr.mxu0 0.0
    %540 = vmatpush1.msra.mxu0 %v264
    %541 = vmatprep.subr.mxu0 0.0
    %542 = vmatpush1.msra.mxu0 %v270
    %543 = vmatprep.subr.mxu0 0.0
    %544 = vmatpush1.msra.mxu0 0.0
    %545 = vmatprep.subr.mxu0 0.0
    %546 = vmatpush1.msra.mxu0 0.0
    %547 = vmatprep.subr.mxu0 0.0
    %548 = vmatpush1.msra.mxu0 0.0
    %549 = vmatprep.subr.mxu0 0.0
    %550 = vmatpush1.msra.mxu0 0.0
    %551 = vmatprep.subr.mxu0 0.0
    %552 = vmatpush1.msra.mxu0 0.0
    %553 = vmatprep.subr.mxu0 0.0
    %554 = vmatpush1.msra.mxu0 0.0
    %555 = vmatprep.subr.mxu0 0.0
    %556 = vmatpush1.msra.mxu0 0.0
    %557 = vmatprep.subr.mxu0 0.0
    %558 = vmatpush1.msra.mxu0 0.0
    %559 = vmatprep.subr.mxu0 0.0
    %560 = vmatpush1.msra.mxu0 0.0
    %561 = vmatprep.subr.mxu0 0.0
    %562 = vmatpush1.msra.mxu0 0.0
    %563 = vmatprep.subr.mxu0 0.0
    %564 = vmatpush1.msra.mxu0 0.0
    %565 = vmatprep.subr.mxu0 0.0
    %566 = vmatpush1.msra.mxu0 0.0
    %567 = vmatprep.subr.mxu0 0.0
    %568 = vmatpush1.msra.mxu0 0.0
    %569 = vmatprep.subr.mxu0 0.0
    %570 = vmatpush1.msra.mxu0 0.0
    %571 = vmatprep.subr.mxu0 0.0
    %572 = vmatpush1.msra.mxu0 0.0
    %573 = vmatprep.subr.mxu0 0.0
    %574 = vmatpush1.msra.mxu0 0.0
    %575 = vmatprep.subr.mxu0 0.0
    %576 = vmatpush1.msra.mxu0 0.0
    %577 = vmatprep.subr.mxu0 0.0
    %578 = vmatpush1.msra.mxu0 0.0
    %579 = vmatprep.subr.mxu0 0.0
    %580 = vmatpush1.msra.mxu0 0.0
    %581 = vmatprep.subr.mxu0 0.0
    %582 = vmatpush1.msra.mxu0 0.0
    %583 = vmatprep.subr.mxu0 0.0
    %584 = vmatpush1.msra.mxu0 0.0
    %585 = vmatprep.subr.mxu0 0.0
    %586 = vmatpush1.msra.mxu0 0.0
    %587 = vmatprep.subr.mxu0 0.0
    %588 = vmatpush1.msra.mxu0 0.0
    %589 = vmatprep.subr.mxu0 0.0
    %590 = vmatpush1.msra.mxu0 0.0
    %591 = vmatprep.subr.mxu0 0.0
    %592 = vmatpush1.msra.mxu0 0.0
    %593 = vmatprep.subr.mxu0 0.0
    %594 = vmatpush1.msra.mxu0 0.0
    %595 = vmatprep.subr.mxu0 0.0
    %596 = vmatpush1.msra.mxu0 0.0
    %597 = vmatprep.subr.mxu0 0.0
    %598 = vmatpush1.msra.mxu0 0.0
    %599 = vmatprep.mubr.f32.mxu0 0.0
    %600 = vmatmul.mubr.f32.gmra.mrb[0].mxu0 %v530
    %v601 = vpop.f32.mrb[0].mxu0
    %v602 = vadd.f32 0.0, %v601
    %v603 = vpop.f32.mrb[0].mxu0
    %604 = vmatprep.mubr.f32.mxu0 0.0
    %605 = vmatmul.mubr.f32.gmra.mrb[0].mxu0 %v533
    %v606 = vpop.f32.mrb[0].mxu0
    %v607 = vadd.f32 0.0, %v606
    %v608 = vpop.f32.mrb[0].mxu0
    %609 = vdwg.mxu0
    %v610 = vadd.f32 %v524, %v602
    %v611 = vadd.f32 %v525, %v607
    %v612 = vld [vmem:[%s14] sm:$0x1]
    %v613 = vld [vmem:[%s14 + $0x1] sm:$0x1]
    %v614 = vadd.f32 %v610, %v611
    %v615 = vrot.slane %v614, 4
    %v616 = vadd.f32 %v614, %v615
    %v617 = vrot.slane %v616, 2
    %v618 = vadd.f32 %v616, %v617
    %v619 = vrot.slane %v618, 1
    %v620 = vadd.f32 %v618, %v619
    %v621 = vmul.f32 %v610, %v610
    %v622 = vmul.f32 %v611, %v611
    %v623 = vadd.f32 %v621, %v622
    %v624 = vrot.slane %v623, 4
    %v625 = vadd.f32 %v623, %v624
    %v626 = vrot.slane %v625, 2
    %v627 = vadd.f32 %v625, %v626
    %v628 = vrot.slane %v627, 1
    %v629 = vadd.f32 %v627, %v628
    %v630 = vld [vmem:[%s3] sm:$0xff]
    %v631 = vld [vmem:[%s3 + $0x8] sm:$0xff]
    %v632 = vld [vmem:[%s3 + $0x10] sm:$0xff]
    %v633 = vld [vmem:[%s3 + $0x18] sm:$0xff]
    %v634 = vld [vmem:[%s3 + $0x20] sm:$0xff]
    %v635 = vld [vmem:[%s3 + $0x28] sm:$0xff]
    %v636 = vld [vmem:[%s3 + $0x30] sm:$0xff]
    %v637 = vld [vmem:[%s3 + $0x38] sm:$0xff]
    %v638 = vld [vmem:[%s3 + $0x40] sm:$0xff]
    %v639 = vld [vmem:[%s3 + $0x48] sm:$0xff]
    %v640 = vld [vmem:[%s3 + $0x50] sm:$0xff]
    %v641 = vld [vmem:[%s3 + $0x58] sm:$0xff]
    %v642 = vld [vmem:[%s3 + $0x60] sm:$0xff]
    %v643 = vld [vmem:[%s3 + $0x68] sm:$0xff]
    %v644 = vld [vmem:[%s3 + $0x70] sm:$0xff]
    %v645 = vld [vmem:[%s3 + $0x78] sm:$0xff]
    %646 = vmatprep.subr.mxu0 0.0
    %647 = vmatpush1.msra.mxu0 %v630
    %648 = vmatprep.subr.mxu0 0.0
    %649 = vmatpush1.msra.mxu0 %v631
    %650 = vmatprep.subr.mxu0 0.0
    %651 = vmatpush1.msra.mxu0 %v632
    %652 = vmatprep.subr.mxu0 0.0
    %653 = vmatpush1.msra.mxu0 %v633
    %654 = vmatprep.subr.mxu0 0.0
    %655 = vmatpush1.msra.mxu0 %v634
    %656 = vmatprep.subr.mxu0 0.0
    %657 = vmatpush1.msra.mxu0 %v635
    %658 = vmatprep.subr.mxu0 0.0
    %659 = vmatpush1.msra.mxu0 %v636
    %660 = vmatprep.subr.mxu0 0.0
    %661 = vmatpush1.msra.mxu0 %v637
    %662 = vmatprep.subr.mxu0 0.0
    %663 = vmatpush1.msra.mxu0 %v638
    %664 = vmatprep.subr.mxu0 0.0
    %665 = vmatpush1.msra.mxu0 %v639
    %666 = vmatprep.subr.mxu0 0.0
    %667 = vmatpush1.msra.mxu0 %v640
    %668 = vmatprep.subr.mxu0 0.0
    %669 = vmatpush1.msra.mxu0 %v641
    %670 = vmatprep.subr.mxu0 0.0
    %671 = vmatpush1.msra.mxu0 %v642
    %672 = vmatprep.subr.mxu0 0.0
    %673 = vmatpush1.msra.mxu0 %v643
    %674 = vmatprep.subr.mxu0 0.0
    %675 = vmatpush1.msra.mxu0 %v644
    %676 = vmatprep.subr.mxu0 0.0
    %677 = vmatpush1.msra.mxu0 %v645
    %678 = vmatprep.subr.mxu0 0.0
    %679 = vmatpush1.msra.mxu0 0.0
    %680 = vmatprep.subr.mxu0 0.0
    %681 = vmatpush1.msra.mxu0 0.0
    %682 = vmatprep.subr.mxu0 0.0
    %683 = vmatpush1.msra.mxu0 0.0
    %684 = vmatprep.subr.mxu0 0.0
    %685 = vmatpush1.msra.mxu0 0.0
    %686 = vmatprep.subr.mxu0 0.0
    %687 = vmatpush1.msra.mxu0 0.0
    %688 = vmatprep.subr.mxu0 0.0
    %689 = vmatpush1.msra.mxu0 0.0
    %690 = vmatprep.subr.mxu0 0.0
    %691 = vmatpush1.msra.mxu0 0.0
    %692 = vmatprep.subr.mxu0 0.0
    %693 = vmatpush1.msra.mxu0 0.0
    %694 = vmatprep.subr.mxu0 0.0
    %695 = vmatpush1.msra.mxu0 0.0
    %696 = vmatprep.subr.mxu0 0.0
    %697 = vmatpush1.msra.mxu0 0.0
    %698 = vmatprep.subr.mxu0 0.0
    %699 = vmatpush1.msra.mxu0 0.0
    %700 = vmatprep.subr.mxu0 0.0
    %701 = vmatpush1.msra.mxu0 0.0
    %702 = vmatprep.subr.mxu0 0.0
    %703 = vmatpush1.msra.mxu0 0.0
    %704 = vmatprep.subr.mxu0 0.0
    %705 = vmatpush1.msra.mxu0 0.0
    %706 = vmatprep.subr.mxu0 0.0
    %707 = vmatpush1.msra.mxu0 0.0
    %708 = vmatprep.subr.mxu0 0.0
    %709 = vmatpush1.msra.mxu0 0.0
    %710 = vmatprep.mubr.f32.mxu0 0.0
    %711 = vmatmul.mubr.f32.gmra.mrb[0].mxu0 %v620
    %v712 = vpop.f32.mrb[0].mxu0
    %v713 = vadd.f32 0.0, %v712
    %v714 = vpop.f32.mrb[0].mxu0
    %715 = vdwg.mxu0
    %716 = vmatprep.subr.mxu0 0.0
    %717 = vmatpush1.msra.mxu0 %v630
    %718 = vmatprep.subr.mxu0 0.0
    %719 = vmatpush1.msra.mxu0 %v631
    %720 = vmatprep.subr.mxu0 0.0
    %721 = vmatpush1.msra.mxu0 %v632
    %722 = vmatprep.subr.mxu0 0.0
    %723 = vmatpush1.msra.mxu0 %v633
    %724 = vmatprep.subr.mxu0 0.0
    %725 = vmatpush1.msra.mxu0 %v634
    %726 = vmatprep.subr.mxu0 0.0
    %727 = vmatpush1.msra.mxu0 %v635
    %728 = vmatprep.subr.mxu0 0.0
    %729 = vmatpush1.msra.mxu0 %v636
    %730 = vmatprep.subr.mxu0 0.0
    %731 = vmatpush1.msra.mxu0 %v637
    %732 = vmatprep.subr.mxu0 0.0
    %733 = vmatpush1.msra.mxu0 %v638
    %734 = vmatprep.subr.mxu0 0.0
    %735 = vmatpush1.msra.mxu0 %v639
    %736 = vmatprep.subr.mxu0 0.0
    %737 = vmatpush1.msra.mxu0 %v640
    %738 = vmatprep.subr.mxu0 0.0
    %739 = vmatpush1.msra.mxu0 %v641
    %740 = vmatprep.subr.mxu0 0.0
    %741 = vmatpush1.msra.mxu0 %v642
    %742 = vmatprep.subr.mxu0 0.0
    %743 = vmatpush1.msra.mxu0 %v643
    %744 = vmatprep.subr.mxu0 0.0
    %745 = vmatpush1.msra.mxu0 %v644
    %746 = vmatprep.subr.mxu0 0.0
    %747 = vmatpush1.msra.mxu0 %v645
    %748 = vmatprep.subr.mxu0 0.0
    %749 = vmatpush1.msra.mxu0 0.0
    %750 = vmatprep.subr.mxu0 0.0
    %751 = vmatpush1.msra.mxu0 0.0
    %752 = vmatprep.subr.mxu0 0.0
    %753 = vmatpush1.msra.mxu0 0.0
    %754 = vmatprep.subr.mxu0 0.0
    %755 = vmatpush1.msra.mxu0 0.0
    %756 = vmatprep.subr.mxu0 0.0
    %757 = vmatpush1.msra.mxu0 0.0
    %758 = vmatprep.subr.mxu0 0.0
    %759 = vmatpush1.msra.mxu0 0.0
    %760 = vmatprep.subr.mxu0 0.0
    %761 = vmatpush1.msra.mxu0 0.0
    %762 = vmatprep.subr.mxu0 0.0
    %763 = vmatpush1.msra.mxu0 0.0
    %764 = vmatprep.subr.mxu0 0.0
    %765 = vmatpush1.msra.mxu0 0.0
    %766 = vmatprep.subr.mxu0 0.0
    %767 = vmatpush1.msra.mxu0 0.0
    %768 = vmatprep.subr.mxu0 0.0
    %769 = vmatpush1.msra.mxu0 0.0
    %770 = vmatprep.subr.mxu0 0.0
    %771 = vmatpush1.msra.mxu0 0.0
    %772 = vmatprep.subr.mxu0 0.0
    %773 = vmatpush1.msra.mxu0 0.0
    %774 = vmatprep.subr.mxu0 0.0
    %775 = vmatpush1.msra.mxu0 0.0
    %776 = vmatprep.subr.mxu0 0.0
    %777 = vmatpush1.msra.mxu0 0.0
    %778 = vmatprep.subr.mxu0 0.0
    %779 = vmatpush1.msra.mxu0 0.0
    %780 = vmatprep.mubr.f32.mxu0 0.0
    %781 = vmatmul.mubr.f32.gmra.mrb[0].mxu0 %v629
    %v782 = vpop.f32.mrb[0].mxu0
    %v783 = vadd.f32 0.0, %v782
    %v784 = vpop.f32.mrb[0].mxu0
    %785 = vdwg.mxu0
    %v786 = vmul.f32 %v713, %v713
    %v787 = vsub.f32 %v783, %v786
    %v788 = vadd.f32 %v787, 1e-05
    %v789 = vrsqrt.pop %v788
    %v790 = vmul.f32 %v612, %v789
    %v791 = vmul.f32 %v713, %v790
    %v792 = vsub.f32 %v613, %v791
    %v793 = vlaneseq
    %v794 = vshrl.u32 %v793, 7
    %v795 = vsub.s32 0, %v794
    %v796 = vrot.slane %v790, %v795
    %v797 = vmul.f32 %v610, %v796
    %v798 = vmul.f32 %v611, %v796
    %v799 = vlaneseq
    %v800 = vshrl.u32 %v799, 7
    %v801 = vsub.s32 0, %v800
    %v802 = vrot.slane %v792, %v801
    %v803 = vadd.f32 %v797, %v802
    %v804 = vadd.f32 %v798, %v802
    %v805 = vmax.f32 %v803, 0.0
    %v806 = vmax.f32 %v804, 0.0
    %v807 = vld [vmem:[%s5] sm:$0xff]
    %v808 = vld [vmem:[%s5 + $0x8] sm:$0xff]
    %v809 = vld [vmem:[%s5 + $0x10] sm:$0xff]
    %v810 = vld [vmem:[%s5 + $0x18] sm:$0xff]
    %v811 = vld [vmem:[%s5 + $0x20] sm:$0xff]
    %v812 = vld [vmem:[%s5 + $0x28] sm:$0xff]
    %v813 = vld [vmem:[%s5 + $0x30] sm:$0xff]
    %v814 = vld [vmem:[%s5 + $0x38] sm:$0xff]
    %v815 = vld [vmem:[%s5 + $0x40] sm:$0xff]
    %v816 = vld [vmem:[%s5 + $0x48] sm:$0xff]
    %v817 = vld [vmem:[%s5 + $0x50] sm:$0xff]
    %v818 = vld [vmem:[%s5 + $0x58] sm:$0xff]
    %v819 = vld [vmem:[%s5 + $0x60] sm:$0xff]
    %v820 = vld [vmem:[%s5 + $0x68] sm:$0xff]
    %v821 = vld [vmem:[%s5 + $0x70] sm:$0xff]
    %v822 = vld [vmem:[%s5 + $0x78] sm:$0xff]
    %823 = vmatprep.subr.mxu0 0.0
    %824 = vmatpush1.msra.mxu0 %v807
    %825 = vmatprep.subr.mxu0 0.0
    %826 = vmatpush1.msra.mxu0 %v808
    %827 = vmatprep.subr.mxu0 0.0
    %828 = vmatpush1.msra.mxu0 %v809
    %829 = vmatprep.subr.mxu0 0.0
    %830 = vmatpush1.msra.mxu0 %v810
    %831 = vmatprep.subr.mxu0 0.0
    %832 = vmatpush1.msra.mxu0 %v811
    %833 = vmatprep.subr.mxu0 0.0
    %834 = vmatpush1.msra.mxu0 %v812
    %835 = vmatprep.subr.mxu0 0.0
    %836 = vmatpush1.msra.mxu0 %v813
    %837 = vmatprep.subr.mxu0 0.0
    %838 = vmatpush1.msra.mxu0 %v814
    %839 = vmatprep.subr.mxu0 0.0
    %840 = vmatpush1.msra.mxu0 %v815
    %841 = vmatprep.subr.mxu0 0.0
    %842 = vmatpush1.msra.mxu0 %v816
    %843 = vmatprep.subr.mxu0 0.0
    %844 = vmatpush1.msra.mxu0 %v817
    %845 = vmatprep.subr.mxu0 0.0
    %846 = vmatpush1.msra.mxu0 %v818
    %847 = vmatprep.subr.mxu0 0.0
    %848 = vmatpush1.msra.mxu0 %v819
    %849 = vmatprep.subr.mxu0 0.0
    %850 = vmatpush1.msra.mxu0 %v820
    %851 = vmatprep.subr.mxu0 0.0
    %852 = vmatpush1.msra.mxu0 %v821
    %853 = vmatprep.subr.mxu0 0.0
    %854 = vmatpush1.msra.mxu0 %v822
    %855 = vmatprep.subr.mxu0 0.0
    %856 = vmatpush1.msra.mxu0 0.0
    %857 = vmatprep.subr.mxu0 0.0
    %858 = vmatpush1.msra.mxu0 0.0
    %859 = vmatprep.subr.mxu0 0.0
    %860 = vmatpush1.msra.mxu0 0.0
    %861 = vmatprep.subr.mxu0 0.0
    %862 = vmatpush1.msra.mxu0 0.0
    %863 = vmatprep.subr.mxu0 0.0
    %864 = vmatpush1.msra.mxu0 0.0
    %865 = vmatprep.subr.mxu0 0.0
    %866 = vmatpush1.msra.mxu0 0.0
    %867 = vmatprep.subr.mxu0 0.0
    %868 = vmatpush1.msra.mxu0 0.0
    %869 = vmatprep.subr.mxu0 0.0
    %870 = vmatpush1.msra.mxu0 0.0
    %871 = vmatprep.subr.mxu0 0.0
    %872 = vmatpush1.msra.mxu0 0.0
    %873 = vmatprep.subr.mxu0 0.0
    %874 = vmatpush1.msra.mxu0 0.0
    %875 = vmatprep.subr.mxu0 0.0
    %876 = vmatpush1.msra.mxu0 0.0
    %877 = vmatprep.subr.mxu0 0.0
    %878 = vmatpush1.msra.mxu0 0.0
    %879 = vmatprep.subr.mxu0 0.0
    %880 = vmatpush1.msra.mxu0 0.0
    %881 = vmatprep.subr.mxu0 0.0
    %882 = vmatpush1.msra.mxu0 0.0
    %883 = vmatprep.subr.mxu0 0.0
    %884 = vmatpush1.msra.mxu0 0.0
    %885 = vmatprep.subr.mxu0 0.0
    %886 = vmatpush1.msra.mxu0 0.0
    %887 = vmatprep.mubr.f32.mxu0 0.0
    %888 = vmatmul.mubr.f32.gmra.mrb[0].mxu0 %v805
    %v889 = vpop.f32.mrb[0].mxu0
    %v890 = vadd.f32 0.0, %v889
    %v891 = vpop.f32.mrb[0].mxu0
    %892 = vmatprep.mubr.f32.mxu0 0.0
    %893 = vmatmul.mubr.f32.gmra.mrb[0].mxu0 %v806
    %v894 = vpop.f32.mrb[0].mxu0
    %v895 = vadd.f32 0.0, %v894
    %v896 = vpop.f32.mrb[0].mxu0
    %897 = vdwg.mxu0
    %v898 = vld [vmem:[%s4] sm:$0xff]
    %s899 = scalar_lea.vmem %s4, 8
    %v900 = vld [vmem:[%s899] sm:$0xff]
    %903 = vrot.lane.b32.xlu0 %v890, 112
    %v904 = vpop.permute.xlu0 %903
    %905 = vrot.lane.b32.xlu0 %v895, 112
    %v906 = vpop.permute.xlu0 %905
    %v910 = vsel %vm81, %v900, 0
    %912 = vmatprep.subr.mxu0 0.0
    %913 = vmatpush1.msra.mxu0 %v904
    %914 = vmatprep.subr.mxu0 0.0
    %915 = vmatpush1.msra.mxu0 %v906
    %916 = vmatprep.subr.mxu0 0.0
    %917 = vmatpush1.msra.mxu0 0.0
    %918 = vmatprep.subr.mxu0 0.0
    %919 = vmatpush1.msra.mxu0 0.0
    %920 = vmatprep.subr.mxu0 0.0
    %921 = vmatpush1.msra.mxu0 0.0
    %922 = vmatprep.subr.mxu0 0.0
    %923 = vmatpush1.msra.mxu0 0.0
    %924 = vmatprep.subr.mxu0 0.0
    %925 = vmatpush1.msra.mxu0 0.0
    %926 = vmatprep.subr.mxu0 0.0
    %927 = vmatpush1.msra.mxu0 0.0
    %928 = vmatprep.subr.mxu0 0.0
    %929 = vmatpush1.msra.mxu0 0.0
    %930 = vmatprep.subr.mxu0 0.0
    %931 = vmatpush1.msra.mxu0 0.0
    %932 = vmatprep.subr.mxu0 0.0
    %933 = vmatpush1.msra.mxu0 0.0
    %934 = vmatprep.subr.mxu0 0.0
    %935 = vmatpush1.msra.mxu0 0.0
    %936 = vmatprep.subr.mxu0 0.0
    %937 = vmatpush1.msra.mxu0 0.0
    %938 = vmatprep.subr.mxu0 0.0
    %939 = vmatpush1.msra.mxu0 0.0
    %940 = vmatprep.subr.mxu0 0.0
    %941 = vmatpush1.msra.mxu0 0.0
    %942 = vmatprep.subr.mxu0 0.0
    %943 = vmatpush1.msra.mxu0 0.0
    %944 = vmatprep.subr.mxu0 0.0
    %945 = vmatpush1.msra.mxu0 0.0
    %946 = vmatprep.subr.mxu0 0.0
    %947 = vmatpush1.msra.mxu0 0.0
    %948 = vmatprep.subr.mxu0 0.0
    %949 = vmatpush1.msra.mxu0 0.0
    %950 = vmatprep.subr.mxu0 0.0
    %951 = vmatpush1.msra.mxu0 0.0
    %952 = vmatprep.subr.mxu0 0.0
    %953 = vmatpush1.msra.mxu0 0.0
    %954 = vmatprep.subr.mxu0 0.0
    %955 = vmatpush1.msra.mxu0 0.0
    %956 = vmatprep.subr.mxu0 0.0
    %957 = vmatpush1.msra.mxu0 0.0
    %958 = vmatprep.subr.mxu0 0.0
    %959 = vmatpush1.msra.mxu0 0.0
    %960 = vmatprep.subr.mxu0 0.0
    %961 = vmatpush1.msra.mxu0 0.0
    %962 = vmatprep.subr.mxu0 0.0
    %963 = vmatpush1.msra.mxu0 0.0
    %964 = vmatprep.subr.mxu0 0.0
    %965 = vmatpush1.msra.mxu0 0.0
    %966 = vmatprep.subr.mxu0 0.0
    %967 = vmatpush1.msra.mxu0 0.0
    %968 = vmatprep.subr.mxu0 0.0
    %969 = vmatpush1.msra.mxu0 0.0
    %970 = vmatprep.subr.mxu0 0.0
    %971 = vmatpush1.msra.mxu0 0.0
    %972 = vmatprep.subr.mxu0 0.0
    %973 = vmatpush1.msra.mxu0 0.0
    %974 = vmatprep.subr.mxu0 0.0
    %975 = vmatpush1.msra.mxu0 0.0
    %976 = vmatprep.mubr.f32.mxu0 0.0
    %977 = vmatmul.mubr.f32.gmra.mrb[0].mxu0 %v910
    %v978 = vpop.f32.mrb[0].mxu0
    %v979 = vadd.f32 0.0, %v978
    %v980 = vpop.f32.mrb[0].mxu0
    %981 = vdwg.mxu0
    %v983 = vsel %vm81, %v898, 0
    %985 = vmatprep.subr.mxu0 0.0
    %986 = vmatpush1.msra.mxu0 %v890
    %987 = vmatprep.subr.mxu0 0.0
    %988 = vmatpush1.msra.mxu0 %v895
    %989 = vmatprep.subr.mxu0 0.0
    %990 = vmatpush1.msra.mxu0 0.0
    %991 = vmatprep.subr.mxu0 0.0
    %992 = vmatpush1.msra.mxu0 0.0
    %993 = vmatprep.subr.mxu0 0.0
    %994 = vmatpush1.msra.mxu0 0.0
    %995 = vmatprep.subr.mxu0 0.0
    %996 = vmatpush1.msra.mxu0 0.0
    %997 = vmatprep.subr.mxu0 0.0
    %998 = vmatpush1.msra.mxu0 0.0
    %999 = vmatprep.subr.mxu0 0.0
    %1000 = vmatpush1.msra.mxu0 0.0
    %1001 = vmatprep.subr.mxu0 0.0
    %1002 = vmatpush1.msra.mxu0 0.0
    %1003 = vmatprep.subr.mxu0 0.0
    %1004 = vmatpush1.msra.mxu0 0.0
    %1005 = vmatprep.subr.mxu0 0.0
    %1006 = vmatpush1.msra.mxu0 0.0
    %1007 = vmatprep.subr.mxu0 0.0
    %1008 = vmatpush1.msra.mxu0 0.0
    %1009 = vmatprep.subr.mxu0 0.0
    %1010 = vmatpush1.msra.mxu0 0.0
    %1011 = vmatprep.subr.mxu0 0.0
    %1012 = vmatpush1.msra.mxu0 0.0
    %1013 = vmatprep.subr.mxu0 0.0
    %1014 = vmatpush1.msra.mxu0 0.0
    %1015 = vmatprep.subr.mxu0 0.0
    %1016 = vmatpush1.msra.mxu0 0.0
    %1017 = vmatprep.subr.mxu0 0.0
    %1018 = vmatpush1.msra.mxu0 0.0
    %1019 = vmatprep.subr.mxu0 0.0
    %1020 = vmatpush1.msra.mxu0 0.0
    %1021 = vmatprep.subr.mxu0 0.0
    %1022 = vmatpush1.msra.mxu0 0.0
    %1023 = vmatprep.subr.mxu0 0.0
    %1024 = vmatpush1.msra.mxu0 0.0
    %1025 = vmatprep.subr.mxu0 0.0
    %1026 = vmatpush1.msra.mxu0 0.0
    %1027 = vmatprep.subr.mxu0 0.0
    %1028 = vmatpush1.msra.mxu0 0.0
    %1029 = vmatprep.subr.mxu0 0.0
    %1030 = vmatpush1.msra.mxu0 0.0
    %1031 = vmatprep.subr.mxu0 0.0
    %1032 = vmatpush1.msra.mxu0 0.0
    %1033 = vmatprep.subr.mxu0 0.0
    %1034 = vmatpush1.msra.mxu0 0.0
    %1035 = vmatprep.subr.mxu0 0.0
    %1036 = vmatpush1.msra.mxu0 0.0
    %1037 = vmatprep.subr.mxu0 0.0
    %1038 = vmatpush1.msra.mxu0 0.0
    %1039 = vmatprep.subr.mxu0 0.0
    %1040 = vmatpush1.msra.mxu0 0.0
    %1041 = vmatprep.subr.mxu0 0.0
    %1042 = vmatpush1.msra.mxu0 0.0
    %1043 = vmatprep.subr.mxu0 0.0
    %1044 = vmatpush1.msra.mxu0 0.0
    %1045 = vmatprep.subr.mxu0 0.0
    %1046 = vmatpush1.msra.mxu0 0.0
    %1047 = vmatprep.subr.mxu0 0.0
    %1048 = vmatpush1.msra.mxu0 0.0
    %1049 = vmatprep.mubr.f32.mxu0 0.0
    %1050 = vmatmul.mubr.f32.gmra.mrb[0].mxu0 %v983
    %v1051 = vpop.f32.mrb[0].mxu0
    %v1052 = vadd.f32 %v979, %v1051
    %v1053 = vpop.f32.mrb[0].mxu0
    %1054 = vdwg.mxu0
    %s1055 = scalar_lea.vmem %s4, 16
    %v1056 = vld [vmem:[%s1055] sm:$0xff]
    %1057 = vrot.lane.b32.xlu0 %v890, 96
    %v1058 = vpop.permute.xlu0 %1057
    %1059 = vrot.lane.b32.xlu0 %v895, 96
    %v1060 = vpop.permute.xlu0 %1059
    %v1064 = vsel %vm81, %v1056, 0
    %1066 = vmatprep.subr.mxu0 0.0
    %1067 = vmatpush1.msra.mxu0 %v1058
    %1068 = vmatprep.subr.mxu0 0.0
    %1069 = vmatpush1.msra.mxu0 %v1060
    %1070 = vmatprep.subr.mxu0 0.0
    %1071 = vmatpush1.msra.mxu0 0.0
    %1072 = vmatprep.subr.mxu0 0.0
    %1073 = vmatpush1.msra.mxu0 0.0
    %1074 = vmatprep.subr.mxu0 0.0
    %1075 = vmatpush1.msra.mxu0 0.0
    %1076 = vmatprep.subr.mxu0 0.0
    %1077 = vmatpush1.msra.mxu0 0.0
    %1078 = vmatprep.subr.mxu0 0.0
    %1079 = vmatpush1.msra.mxu0 0.0
    %1080 = vmatprep.subr.mxu0 0.0
    %1081 = vmatpush1.msra.mxu0 0.0
    %1082 = vmatprep.subr.mxu0 0.0
    %1083 = vmatpush1.msra.mxu0 0.0
    %1084 = vmatprep.subr.mxu0 0.0
    %1085 = vmatpush1.msra.mxu0 0.0
    %1086 = vmatprep.subr.mxu0 0.0
    %1087 = vmatpush1.msra.mxu0 0.0
    %1088 = vmatprep.subr.mxu0 0.0
    %1089 = vmatpush1.msra.mxu0 0.0
    %1090 = vmatprep.subr.mxu0 0.0
    %1091 = vmatpush1.msra.mxu0 0.0
    %1092 = vmatprep.subr.mxu0 0.0
    %1093 = vmatpush1.msra.mxu0 0.0
    %1094 = vmatprep.subr.mxu0 0.0
    %1095 = vmatpush1.msra.mxu0 0.0
    %1096 = vmatprep.subr.mxu0 0.0
    %1097 = vmatpush1.msra.mxu0 0.0
    %1098 = vmatprep.subr.mxu0 0.0
    %1099 = vmatpush1.msra.mxu0 0.0
    %1100 = vmatprep.subr.mxu0 0.0
    %1101 = vmatpush1.msra.mxu0 0.0
    %1102 = vmatprep.subr.mxu0 0.0
    %1103 = vmatpush1.msra.mxu0 0.0
    %1104 = vmatprep.subr.mxu0 0.0
    %1105 = vmatpush1.msra.mxu0 0.0
    %1106 = vmatprep.subr.mxu0 0.0
    %1107 = vmatpush1.msra.mxu0 0.0
    %1108 = vmatprep.subr.mxu0 0.0
    %1109 = vmatpush1.msra.mxu0 0.0
    %1110 = vmatprep.subr.mxu0 0.0
    %1111 = vmatpush1.msra.mxu0 0.0
    %1112 = vmatprep.subr.mxu0 0.0
    %1113 = vmatpush1.msra.mxu0 0.0
    %1114 = vmatprep.subr.mxu0 0.0
    %1115 = vmatpush1.msra.mxu0 0.0
    %1116 = vmatprep.subr.mxu0 0.0
    %1117 = vmatpush1.msra.mxu0 0.0
    %1118 = vmatprep.subr.mxu0 0.0
    %1119 = vmatpush1.msra.mxu0 0.0
    %1120 = vmatprep.subr.mxu0 0.0
    %1121 = vmatpush1.msra.mxu0 0.0
    %1122 = vmatprep.subr.mxu0 0.0
    %1123 = vmatpush1.msra.mxu0 0.0
    %1124 = vmatprep.subr.mxu0 0.0
    %1125 = vmatpush1.msra.mxu0 0.0
    %1126 = vmatprep.subr.mxu0 0.0
    %1127 = vmatpush1.msra.mxu0 0.0
    %1128 = vmatprep.subr.mxu0 0.0
    %1129 = vmatpush1.msra.mxu0 0.0
    %1130 = vmatprep.mubr.f32.mxu0 0.0
    %1131 = vmatmul.mubr.f32.gmra.mrb[0].mxu0 %v1064
    %v1132 = vpop.f32.mrb[0].mxu0
    %v1133 = vadd.f32 0.0, %v1132
    %v1134 = vpop.f32.mrb[0].mxu0
    %1135 = vdwg.mxu0
    %v1136 = vadd.f32 %v1052, %v1133
    %s1137 = scalar_lea.vmem %s4, 24
    %v1138 = vld [vmem:[%s1137] sm:$0xff]
    %1139 = vrot.lane.b32.xlu0 %v890, 80
    %v1140 = vpop.permute.xlu0 %1139
    %1141 = vrot.lane.b32.xlu0 %v895, 80
    %v1142 = vpop.permute.xlu0 %1141
    %v1146 = vsel %vm81, %v1138, 0
    %1148 = vmatprep.subr.mxu0 0.0
    %1149 = vmatpush1.msra.mxu0 %v1140
    %1150 = vmatprep.subr.mxu0 0.0
    %1151 = vmatpush1.msra.mxu0 %v1142
    %1152 = vmatprep.subr.mxu0 0.0
    %1153 = vmatpush1.msra.mxu0 0.0
    %1154 = vmatprep.subr.mxu0 0.0
    %1155 = vmatpush1.msra.mxu0 0.0
    %1156 = vmatprep.subr.mxu0 0.0
    %1157 = vmatpush1.msra.mxu0 0.0
    %1158 = vmatprep.subr.mxu0 0.0
    %1159 = vmatpush1.msra.mxu0 0.0
    %1160 = vmatprep.subr.mxu0 0.0
    %1161 = vmatpush1.msra.mxu0 0.0
    %1162 = vmatprep.subr.mxu0 0.0
    %1163 = vmatpush1.msra.mxu0 0.0
    %1164 = vmatprep.subr.mxu0 0.0
    %1165 = vmatpush1.msra.mxu0 0.0
    %1166 = vmatprep.subr.mxu0 0.0
    %1167 = vmatpush1.msra.mxu0 0.0
    %1168 = vmatprep.subr.mxu0 0.0
    %1169 = vmatpush1.msra.mxu0 0.0
    %1170 = vmatprep.subr.mxu0 0.0
    %1171 = vmatpush1.msra.mxu0 0.0
    %1172 = vmatprep.subr.mxu0 0.0
    %1173 = vmatpush1.msra.mxu0 0.0
    %1174 = vmatprep.subr.mxu0 0.0
    %1175 = vmatpush1.msra.mxu0 0.0
    %1176 = vmatprep.subr.mxu0 0.0
    %1177 = vmatpush1.msra.mxu0 0.0
    %1178 = vmatprep.subr.mxu0 0.0
    %1179 = vmatpush1.msra.mxu0 0.0
    %1180 = vmatprep.subr.mxu0 0.0
    %1181 = vmatpush1.msra.mxu0 0.0
    %1182 = vmatprep.subr.mxu0 0.0
    %1183 = vmatpush1.msra.mxu0 0.0
    %1184 = vmatprep.subr.mxu0 0.0
    %1185 = vmatpush1.msra.mxu0 0.0
    %1186 = vmatprep.subr.mxu0 0.0
    %1187 = vmatpush1.msra.mxu0 0.0
    %1188 = vmatprep.subr.mxu0 0.0
    %1189 = vmatpush1.msra.mxu0 0.0
    %1190 = vmatprep.subr.mxu0 0.0
    %1191 = vmatpush1.msra.mxu0 0.0
    %1192 = vmatprep.subr.mxu0 0.0
    %1193 = vmatpush1.msra.mxu0 0.0
    %1194 = vmatprep.subr.mxu0 0.0
    %1195 = vmatpush1.msra.mxu0 0.0
    %1196 = vmatprep.subr.mxu0 0.0
    %1197 = vmatpush1.msra.mxu0 0.0
    %1198 = vmatprep.subr.mxu0 0.0
    %1199 = vmatpush1.msra.mxu0 0.0
    %1200 = vmatprep.subr.mxu0 0.0
    %1201 = vmatpush1.msra.mxu0 0.0
    %1202 = vmatprep.subr.mxu0 0.0
    %1203 = vmatpush1.msra.mxu0 0.0
    %1204 = vmatprep.subr.mxu0 0.0
    %1205 = vmatpush1.msra.mxu0 0.0
    %1206 = vmatprep.subr.mxu0 0.0
    %1207 = vmatpush1.msra.mxu0 0.0
    %1208 = vmatprep.subr.mxu0 0.0
    %1209 = vmatpush1.msra.mxu0 0.0
    %1210 = vmatprep.subr.mxu0 0.0
    %1211 = vmatpush1.msra.mxu0 0.0
    %1212 = vmatprep.mubr.f32.mxu0 0.0
    %1213 = vmatmul.mubr.f32.gmra.mrb[0].mxu0 %v1146
    %v1214 = vpop.f32.mrb[0].mxu0
    %v1215 = vadd.f32 0.0, %v1214
    %v1216 = vpop.f32.mrb[0].mxu0
    %1217 = vdwg.mxu0
    %v1218 = vadd.f32 %v1136, %v1215
    %v1219 = vld [vmem:[%s14 + $0x4] sm:$0x1]
    %v1220 = vld [vmem:[%s14 + $0x5] sm:$0x1]
    %v1221 = vsel %vm81, %v1218, 0.0
    %v1222 = vrot.slane %v1221, 4
    %v1223 = vadd.f32 %v1221, %v1222
    %v1224 = vrot.slane %v1223, 2
    %v1225 = vadd.f32 %v1223, %v1224
    %v1226 = vrot.slane %v1225, 1
    %v1227 = vadd.f32 %v1225, %v1226
    %v1228 = vmul.f32 %v1218, %v1218
    %v1229 = vsel %vm81, %v1228, 0.0
    %v1230 = vrot.slane %v1229, 4
    %v1231 = vadd.f32 %v1229, %v1230
    %v1232 = vrot.slane %v1231, 2
    %v1233 = vadd.f32 %v1231, %v1232
    %v1234 = vrot.slane %v1233, 1
    %v1235 = vadd.f32 %v1233, %v1234
    %v1236 = vld [vmem:[%s6] sm:$0xff]
    %v1237 = vld [vmem:[%s6 + $0x8] sm:$0xff]
    %v1239 = vsel %vm81, %v1227, 0
    %1241 = vmatprep.subr.mxu0 0.0
    %1242 = vmatpush1.msra.mxu0 %v1236
    %1243 = vmatprep.subr.mxu0 0.0
    %1244 = vmatpush1.msra.mxu0 %v1237
    %1245 = vmatprep.subr.mxu0 0.0
    %1246 = vmatpush1.msra.mxu0 0.0
    %1247 = vmatprep.subr.mxu0 0.0
    %1248 = vmatpush1.msra.mxu0 0.0
    %1249 = vmatprep.subr.mxu0 0.0
    %1250 = vmatpush1.msra.mxu0 0.0
    %1251 = vmatprep.subr.mxu0 0.0
    %1252 = vmatpush1.msra.mxu0 0.0
    %1253 = vmatprep.subr.mxu0 0.0
    %1254 = vmatpush1.msra.mxu0 0.0
    %1255 = vmatprep.subr.mxu0 0.0
    %1256 = vmatpush1.msra.mxu0 0.0
    %1257 = vmatprep.subr.mxu0 0.0
    %1258 = vmatpush1.msra.mxu0 0.0
    %1259 = vmatprep.subr.mxu0 0.0
    %1260 = vmatpush1.msra.mxu0 0.0
    %1261 = vmatprep.subr.mxu0 0.0
    %1262 = vmatpush1.msra.mxu0 0.0
    %1263 = vmatprep.subr.mxu0 0.0
    %1264 = vmatpush1.msra.mxu0 0.0
    %1265 = vmatprep.subr.mxu0 0.0
    %1266 = vmatpush1.msra.mxu0 0.0
    %1267 = vmatprep.subr.mxu0 0.0
    %1268 = vmatpush1.msra.mxu0 0.0
    %1269 = vmatprep.subr.mxu0 0.0
    %1270 = vmatpush1.msra.mxu0 0.0
    %1271 = vmatprep.subr.mxu0 0.0
    %1272 = vmatpush1.msra.mxu0 0.0
    %1273 = vmatprep.subr.mxu0 0.0
    %1274 = vmatpush1.msra.mxu0 0.0
    %1275 = vmatprep.subr.mxu0 0.0
    %1276 = vmatpush1.msra.mxu0 0.0
    %1277 = vmatprep.subr.mxu0 0.0
    %1278 = vmatpush1.msra.mxu0 0.0
    %1279 = vmatprep.subr.mxu0 0.0
    %1280 = vmatpush1.msra.mxu0 0.0
    %1281 = vmatprep.subr.mxu0 0.0
    %1282 = vmatpush1.msra.mxu0 0.0
    %1283 = vmatprep.subr.mxu0 0.0
    %1284 = vmatpush1.msra.mxu0 0.0
    %1285 = vmatprep.subr.mxu0 0.0
    %1286 = vmatpush1.msra.mxu0 0.0
    %1287 = vmatprep.subr.mxu0 0.0
    %1288 = vmatpush1.msra.mxu0 0.0
    %1289 = vmatprep.subr.mxu0 0.0
    %1290 = vmatpush1.msra.mxu0 0.0
    %1291 = vmatprep.subr.mxu0 0.0
    %1292 = vmatpush1.msra.mxu0 0.0
    %1293 = vmatprep.subr.mxu0 0.0
    %1294 = vmatpush1.msra.mxu0 0.0
    %1295 = vmatprep.subr.mxu0 0.0
    %1296 = vmatpush1.msra.mxu0 0.0
    %1297 = vmatprep.subr.mxu0 0.0
    %1298 = vmatpush1.msra.mxu0 0.0
    %1299 = vmatprep.subr.mxu0 0.0
    %1300 = vmatpush1.msra.mxu0 0.0
    %1301 = vmatprep.subr.mxu0 0.0
    %1302 = vmatpush1.msra.mxu0 0.0
    %1303 = vmatprep.subr.mxu0 0.0
    %1304 = vmatpush1.msra.mxu0 0.0
    %1305 = vmatprep.mubr.f32.mxu0 0.0
    %1306 = vmatmul.mubr.f32.gmra.mrb[0].mxu0 %v1239
    %v1307 = vpop.f32.mrb[0].mxu0
    %v1308 = vadd.f32 0.0, %v1307
    %v1309 = vpop.f32.mrb[0].mxu0
    %1310 = vdwg.mxu0
    %v1312 = vsel %vm81, %v1235, 0
    %1314 = vmatprep.subr.mxu0 0.0
    %1315 = vmatpush1.msra.mxu0 %v1236
    %1316 = vmatprep.subr.mxu0 0.0
    %1317 = vmatpush1.msra.mxu0 %v1237
    %1318 = vmatprep.subr.mxu0 0.0
    %1319 = vmatpush1.msra.mxu0 0.0
    %1320 = vmatprep.subr.mxu0 0.0
    %1321 = vmatpush1.msra.mxu0 0.0
    %1322 = vmatprep.subr.mxu0 0.0
    %1323 = vmatpush1.msra.mxu0 0.0
    %1324 = vmatprep.subr.mxu0 0.0
    %1325 = vmatpush1.msra.mxu0 0.0
    %1326 = vmatprep.subr.mxu0 0.0
    %1327 = vmatpush1.msra.mxu0 0.0
    %1328 = vmatprep.subr.mxu0 0.0
    %1329 = vmatpush1.msra.mxu0 0.0
    %1330 = vmatprep.subr.mxu0 0.0
    %1331 = vmatpush1.msra.mxu0 0.0
    %1332 = vmatprep.subr.mxu0 0.0
    %1333 = vmatpush1.msra.mxu0 0.0
    %1334 = vmatprep.subr.mxu0 0.0
    %1335 = vmatpush1.msra.mxu0 0.0
    %1336 = vmatprep.subr.mxu0 0.0
    %1337 = vmatpush1.msra.mxu0 0.0
    %1338 = vmatprep.subr.mxu0 0.0
    %1339 = vmatpush1.msra.mxu0 0.0
    %1340 = vmatprep.subr.mxu0 0.0
    %1341 = vmatpush1.msra.mxu0 0.0
    %1342 = vmatprep.subr.mxu0 0.0
    %1343 = vmatpush1.msra.mxu0 0.0
    %1344 = vmatprep.subr.mxu0 0.0
    %1345 = vmatpush1.msra.mxu0 0.0
    %1346 = vmatprep.subr.mxu0 0.0
    %1347 = vmatpush1.msra.mxu0 0.0
    %1348 = vmatprep.subr.mxu0 0.0
    %1349 = vmatpush1.msra.mxu0 0.0
    %1350 = vmatprep.subr.mxu0 0.0
    %1351 = vmatpush1.msra.mxu0 0.0
    %1352 = vmatprep.subr.mxu0 0.0
    %1353 = vmatpush1.msra.mxu0 0.0
    %1354 = vmatprep.subr.mxu0 0.0
    %1355 = vmatpush1.msra.mxu0 0.0
    %1356 = vmatprep.subr.mxu0 0.0
    %1357 = vmatpush1.msra.mxu0 0.0
    %1358 = vmatprep.subr.mxu0 0.0
    %1359 = vmatpush1.msra.mxu0 0.0
    %1360 = vmatprep.subr.mxu0 0.0
    %1361 = vmatpush1.msra.mxu0 0.0
    %1362 = vmatprep.subr.mxu0 0.0
    %1363 = vmatpush1.msra.mxu0 0.0
    %1364 = vmatprep.subr.mxu0 0.0
    %1365 = vmatpush1.msra.mxu0 0.0
    %1366 = vmatprep.subr.mxu0 0.0
    %1367 = vmatpush1.msra.mxu0 0.0
    %1368 = vmatprep.subr.mxu0 0.0
    %1369 = vmatpush1.msra.mxu0 0.0
    %1370 = vmatprep.subr.mxu0 0.0
    %1371 = vmatpush1.msra.mxu0 0.0
    %1372 = vmatprep.subr.mxu0 0.0
    %1373 = vmatpush1.msra.mxu0 0.0
    %1374 = vmatprep.subr.mxu0 0.0
    %1375 = vmatpush1.msra.mxu0 0.0
    %1376 = vmatprep.subr.mxu0 0.0
    %1377 = vmatpush1.msra.mxu0 0.0
    %1378 = vmatprep.mubr.f32.mxu0 0.0
    %1379 = vmatmul.mubr.f32.gmra.mrb[0].mxu0 %v1312
    %v1380 = vpop.f32.mrb[0].mxu0
    %v1381 = vadd.f32 0.0, %v1380
    %v1382 = vpop.f32.mrb[0].mxu0
    %1383 = vdwg.mxu0
    %v1384 = vmul.f32 %v1308, %v1308
    %v1385 = vsub.f32 %v1381, %v1384
    %v1386 = vadd.f32 %v1385, 1e-05
    %v1387 = vrsqrt.pop %v1386
    %v1388 = vmul.f32 %v1219, %v1387
    %v1389 = vmul.f32 %v1308, %v1388
    %v1390 = vsub.f32 %v1220, %v1389
    %v1391 = vlaneseq
    %v1392 = vshrl.u32 %v1391, 7
    %v1393 = vsub.s32 0, %v1392
    %v1394 = vrot.slane %v1388, %v1393
    %v1395 = vmul.f32 %v1218, %v1394
    %v1396 = vlaneseq
    %v1397 = vshrl.u32 %v1396, 7
    %v1398 = vsub.s32 0, %v1397
    %v1399 = vrot.slane %v1390, %v1398
    %v1400 = vadd.f32 %v1395, %v1399
    %v1401 = vmax.f32 %v1400, 0.0
    %v1402 = vld [vmem:[%s7] sm:$0xff]
    %v1403 = vld [vmem:[%s7 + $0x8] sm:$0xff]
    %v1404 = vld [vmem:[%s14 + $0x6] sm:$0x1]
    %v1405 = vlaneseq
    %v1406 = vshrl.u32 %v1405, 7
    %v1407 = vsub.s32 0, %v1406
    %v1408 = vrot.slane %v1404, %v1407
    %v1410 = vsel %vm81, %v1401, 0
    %1412 = vmatprep.subr.mxu0 0.0
    %1413 = vmatpush1.msra.mxu0 %v1402
    %1414 = vmatprep.subr.mxu0 0.0
    %1415 = vmatpush1.msra.mxu0 %v1403
    %1416 = vmatprep.subr.mxu0 0.0
    %1417 = vmatpush1.msra.mxu0 0.0
    %1418 = vmatprep.subr.mxu0 0.0
    %1419 = vmatpush1.msra.mxu0 0.0
    %1420 = vmatprep.subr.mxu0 0.0
    %1421 = vmatpush1.msra.mxu0 0.0
    %1422 = vmatprep.subr.mxu0 0.0
    %1423 = vmatpush1.msra.mxu0 0.0
    %1424 = vmatprep.subr.mxu0 0.0
    %1425 = vmatpush1.msra.mxu0 0.0
    %1426 = vmatprep.subr.mxu0 0.0
    %1427 = vmatpush1.msra.mxu0 0.0
    %1428 = vmatprep.subr.mxu0 0.0
    %1429 = vmatpush1.msra.mxu0 0.0
    %1430 = vmatprep.subr.mxu0 0.0
    %1431 = vmatpush1.msra.mxu0 0.0
    %1432 = vmatprep.subr.mxu0 0.0
    %1433 = vmatpush1.msra.mxu0 0.0
    %1434 = vmatprep.subr.mxu0 0.0
    %1435 = vmatpush1.msra.mxu0 0.0
    %1436 = vmatprep.subr.mxu0 0.0
    %1437 = vmatpush1.msra.mxu0 0.0
    %1438 = vmatprep.subr.mxu0 0.0
    %1439 = vmatpush1.msra.mxu0 0.0
    %1440 = vmatprep.subr.mxu0 0.0
    %1441 = vmatpush1.msra.mxu0 0.0
    %1442 = vmatprep.subr.mxu0 0.0
    %1443 = vmatpush1.msra.mxu0 0.0
    %1444 = vmatprep.subr.mxu0 0.0
    %1445 = vmatpush1.msra.mxu0 0.0
    %1446 = vmatprep.subr.mxu0 0.0
    %1447 = vmatpush1.msra.mxu0 0.0
    %1448 = vmatprep.subr.mxu0 0.0
    %1449 = vmatpush1.msra.mxu0 0.0
    %1450 = vmatprep.subr.mxu0 0.0
    %1451 = vmatpush1.msra.mxu0 0.0
    %1452 = vmatprep.subr.mxu0 0.0
    %1453 = vmatpush1.msra.mxu0 0.0
    %1454 = vmatprep.subr.mxu0 0.0
    %1455 = vmatpush1.msra.mxu0 0.0
    %1456 = vmatprep.subr.mxu0 0.0
    %1457 = vmatpush1.msra.mxu0 0.0
    %1458 = vmatprep.subr.mxu0 0.0
    %1459 = vmatpush1.msra.mxu0 0.0
    %1460 = vmatprep.subr.mxu0 0.0
    %1461 = vmatpush1.msra.mxu0 0.0
    %1462 = vmatprep.subr.mxu0 0.0
    %1463 = vmatpush1.msra.mxu0 0.0
    %1464 = vmatprep.subr.mxu0 0.0
    %1465 = vmatpush1.msra.mxu0 0.0
    %1466 = vmatprep.subr.mxu0 0.0
    %1467 = vmatpush1.msra.mxu0 0.0
    %1468 = vmatprep.subr.mxu0 0.0
    %1469 = vmatpush1.msra.mxu0 0.0
    %1470 = vmatprep.subr.mxu0 0.0
    %1471 = vmatpush1.msra.mxu0 0.0
    %1472 = vmatprep.subr.mxu0 0.0
    %1473 = vmatpush1.msra.mxu0 0.0
    %1474 = vmatprep.subr.mxu0 0.0
    %1475 = vmatpush1.msra.mxu0 0.0
    %1476 = vmatprep.mubr.f32.mxu0 0.0
    %1477 = vmatmul.mubr.f32.gmra.mrb[0].mxu0 %v1410
    %v1478 = vpop.f32.mrb[0].mxu0
    %v1479 = vadd.f32 %v1408, %v1478
    %v1480 = vpop.f32.mrb[0].mxu0
    %1481 = vdwg.mxu0
    %s1482 = sld [smem:[#allocation2]]
    %s1483 = sld [smem:[#allocation2 + $0x1]]
    %s1484 = sld [smem:[#allocation2 + $0x2]]
    %s1485 = sld [smem:[#allocation2 + $0x3]]
    %s1486 = sld [smem:[#allocation2 + $0x4]]
    %s1487 = sld [smem:[#allocation2 + $0x5]]
    %v1488 = vstv %s1482
    %v1489 = vmul.f32 %v1479, %v1488
    %v1490 = vstv %s1483
    %v1491 = vmul.f32 %v1479, %v1490
    %1493 = vrot.lane.b32.xlu0 %v1491, 124
    %v1494 = vpop.permute.xlu0 %1493
    %v1496 = vadd.f32 %v1489, %v1494
    %s1497 = sld [smem:[#allocation2 + $0x6]]
    %v1498 = vstv %s1497
    %v1499 = vsub.f32 %v1496, %v1498
    %v1500 = vstv %s1484
    %v1501 = vmul.f32 %v1479, %v1500
    %v1502 = vstv %s1485
    %v1503 = vmul.f32 %v1479, %v1502
    %1505 = vrot.lane.b32.xlu0 %v1503, 124
    %v1506 = vpop.permute.xlu0 %1505
    %v1508 = vadd.f32 %v1501, %v1506
    %s1509 = sld [smem:[#allocation2 + $0x7]]
    %v1510 = vstv %s1509
    %v1511 = vsub.f32 %v1508, %v1510
    %v1512 = vstv %s1486
    %v1513 = vmul.f32 %v1479, %v1512
    %v1514 = vstv %s1487
    %v1515 = vmul.f32 %v1479, %v1514
    %1517 = vrot.lane.b32.xlu0 %v1515, 124
    %v1518 = vpop.permute.xlu0 %1517
    %v1520 = vadd.f32 %v1513, %v1518
    %s1521 = sld [smem:[#allocation2 + $0x8]]
    %v1522 = vstv %s1521
    %v1523 = vsub.f32 %v1520, %v1522
    %vm1524 = vcmp.ge.f32.partialorder %v1499, %v1511
    %vm1525 = vcmp.ge.f32.partialorder %v1499, %v1523
    %vm1526 = vmand %vm1524, %vm1525
    %vm1527 = vmxor %vm1526, 1
    %vm1528 = vcmp.ge.f32.partialorder %v1511, %v1523
    %vm1529 = vmand %vm1527, %vm1528
    %v1530 = vsel %vm1529, %v1500, %v1512
    %v1531 = vsel %vm1526, %v1488, %v1530
    %v1532 = vsel %vm1529, %v1502, %v1514
    %v1533 = vsel %vm1526, %v1490, %v1532
    %v1534 = vsub.f32 %v1531, %v1479
    %1536 = vrot.lane.b32.xlu0 %v1479, 124
    %v1537 = vpop.permute.xlu0 %1536
    %v1539 = vsub.f32 %v1533, %v1537
    %v1540 = vmul.f32 %v1534, %v1534
    %vm1541 = vcmask 31744
    %v1542 = vsel %vm1541, %v1540, 0.0
    %1543 = vadd.xlane.f32.xlu0 %v1542
    %v1544 = vpop.xlane.xlu0 %1543
    %v1545 = vrot.slane %v1544, 4
    %v1546 = vadd.f32 %v1544, %v1545
    %v1547 = vrot.slane %v1546, 2
    %v1548 = vadd.f32 %v1546, %v1547
    %v1549 = vrot.slane %v1548, 1
    %v1550 = vadd.f32 %v1548, %v1549
    %s1551 = vtos %v1550
    %v1552 = vmul.f32 %v1539, %v1539
    %v1553 = vsel %vm1541, %v1552, 0.0
    %1554 = vadd.xlane.f32.xlu0 %v1553
    %v1555 = vpop.xlane.xlu0 %1554
    %v1556 = vrot.slane %v1555, 4
    %v1557 = vadd.f32 %v1555, %v1556
    %v1558 = vrot.slane %v1557, 2
    %v1559 = vadd.f32 %v1557, %v1558
    %v1560 = vrot.slane %v1559, 1
    %v1561 = vadd.f32 %v1559, %v1560
    %s1562 = vtos %v1561
    %s1563 = sadd.f32 %s1551, %s1562
    %v1564 = vrcp.pop 64.0
    %s1565 = vtos %v1564
    %s1566 = smul.f32 %s1563, %s1565
    %s1567 = smul.f32 %s1566, 1.2
    %s1568 = scalar_lea.smem [#allocation5], 0
    %1569 = sst [smem:[%s1568]] %s1567
    %v1570 = vld [vmem:[%s8] sm:$0xf]
    %v1571 = vld [vmem:[%s8 + $0x4] sm:$0xf]
    %v1573 = vsel %vm1541, %v1533, 0
    %vm1575 = vcmask 1043456
    %v1577 = vsel %vm1575, %v1571, 0
    %1579 = vmatprep.subr.mxu0 0.0
    %1580 = vmatpush1.msra.mxu0 %v1577
    %1581 = vmatprep.subr.mxu0 0.0
    %1582 = vmatpush1.msra.mxu0 0.0
    %1583 = vmatprep.subr.mxu0 0.0
    %1584 = vmatpush1.msra.mxu0 0.0
    %1585 = vmatprep.subr.mxu0 0.0
    %1586 = vmatpush1.msra.mxu0 0.0
    %1587 = vmatprep.subr.mxu0 0.0
    %1588 = vmatpush1.msra.mxu0 0.0
    %1589 = vmatprep.subr.mxu0 0.0
    %1590 = vmatpush1.msra.mxu0 0.0
    %1591 = vmatprep.subr.mxu0 0.0
    %1592 = vmatpush1.msra.mxu0 0.0
    %1593 = vmatprep.subr.mxu0 0.0
    %1594 = vmatpush1.msra.mxu0 0.0
    %1595 = vmatprep.subr.mxu0 0.0
    %1596 = vmatpush1.msra.mxu0 0.0
    %1597 = vmatprep.subr.mxu0 0.0
    %1598 = vmatpush1.msra.mxu0 0.0
    %1599 = vmatprep.subr.mxu0 0.0
    %1600 = vmatpush1.msra.mxu0 0.0
    %1601 = vmatprep.subr.mxu0 0.0
    %1602 = vmatpush1.msra.mxu0 0.0
    %1603 = vmatprep.subr.mxu0 0.0
    %1604 = vmatpush1.msra.mxu0 0.0
    %1605 = vmatprep.subr.mxu0 0.0
    %1606 = vmatpush1.msra.mxu0 0.0
    %1607 = vmatprep.subr.mxu0 0.0
    %1608 = vmatpush1.msra.mxu0 0.0
    %1609 = vmatprep.subr.mxu0 0.0
    %1610 = vmatpush1.msra.mxu0 0.0
    %1611 = vmatprep.subr.mxu0 0.0
    %1612 = vmatpush1.msra.mxu0 0.0
    %1613 = vmatprep.subr.mxu0 0.0
    %1614 = vmatpush1.msra.mxu0 0.0
    %1615 = vmatprep.subr.mxu0 0.0
    %1616 = vmatpush1.msra.mxu0 0.0
    %1617 = vmatprep.subr.mxu0 0.0
    %1618 = vmatpush1.msra.mxu0 0.0
    %1619 = vmatprep.subr.mxu0 0.0
    %1620 = vmatpush1.msra.mxu0 0.0
    %1621 = vmatprep.subr.mxu0 0.0
    %1622 = vmatpush1.msra.mxu0 0.0
    %1623 = vmatprep.subr.mxu0 0.0
    %1624 = vmatpush1.msra.mxu0 0.0
    %1625 = vmatprep.subr.mxu0 0.0
    %1626 = vmatpush1.msra.mxu0 0.0
    %1627 = vmatprep.subr.mxu0 0.0
    %1628 = vmatpush1.msra.mxu0 0.0
    %1629 = vmatprep.subr.mxu0 0.0
    %1630 = vmatpush1.msra.mxu0 0.0
    %1631 = vmatprep.subr.mxu0 0.0
    %1632 = vmatpush1.msra.mxu0 0.0
    %1633 = vmatprep.subr.mxu0 0.0
    %1634 = vmatpush1.msra.mxu0 0.0
    %1635 = vmatprep.subr.mxu0 0.0
    %1636 = vmatpush1.msra.mxu0 0.0
    %1637 = vmatprep.subr.mxu0 0.0
    %1638 = vmatpush1.msra.mxu0 0.0
    %1639 = vmatprep.subr.mxu0 0.0
    %1640 = vmatpush1.msra.mxu0 0.0
    %1641 = vmatprep.subr.mxu0 0.0
    %1642 = vmatpush1.msra.mxu0 0.0
    %1643 = vmatprep.mubr.f32.mxu0 0.0
    %1644 = vmatmul.mubr.f32.gmra.mrb[0].mxu0 %v1573
    %v1645 = vpop.f32.mrb[0].mxu0
    %v1646 = vadd.f32 0.0, %v1645
    %v1647 = vpop.f32.mrb[0].mxu0
    %1648 = vdwg.mxu0
    %v1650 = vsel %vm1541, %v1531, 0
    %v1653 = vsel %vm1575, %v1570, 0
    %1655 = vmatprep.subr.mxu0 0.0
    %1656 = vmatpush1.msra.mxu0 %v1653
    %1657 = vmatprep.subr.mxu0 0.0
    %1658 = vmatpush1.msra.mxu0 0.0
    %1659 = vmatprep.subr.mxu0 0.0
    %1660 = vmatpush1.msra.mxu0 0.0
    %1661 = vmatprep.subr.mxu0 0.0
    %1662 = vmatpush1.msra.mxu0 0.0
    %1663 = vmatprep.subr.mxu0 0.0
    %1664 = vmatpush1.msra.mxu0 0.0
    %1665 = vmatprep.subr.mxu0 0.0
    %1666 = vmatpush1.msra.mxu0 0.0
    %1667 = vmatprep.subr.mxu0 0.0
    %1668 = vmatpush1.msra.mxu0 0.0
    %1669 = vmatprep.subr.mxu0 0.0
    %1670 = vmatpush1.msra.mxu0 0.0
    %1671 = vmatprep.subr.mxu0 0.0
    %1672 = vmatpush1.msra.mxu0 0.0
    %1673 = vmatprep.subr.mxu0 0.0
    %1674 = vmatpush1.msra.mxu0 0.0
    %1675 = vmatprep.subr.mxu0 0.0
    %1676 = vmatpush1.msra.mxu0 0.0
    %1677 = vmatprep.subr.mxu0 0.0
    %1678 = vmatpush1.msra.mxu0 0.0
    %1679 = vmatprep.subr.mxu0 0.0
    %1680 = vmatpush1.msra.mxu0 0.0
    %1681 = vmatprep.subr.mxu0 0.0
    %1682 = vmatpush1.msra.mxu0 0.0
    %1683 = vmatprep.subr.mxu0 0.0
    %1684 = vmatpush1.msra.mxu0 0.0
    %1685 = vmatprep.subr.mxu0 0.0
    %1686 = vmatpush1.msra.mxu0 0.0
    %1687 = vmatprep.subr.mxu0 0.0
    %1688 = vmatpush1.msra.mxu0 0.0
    %1689 = vmatprep.subr.mxu0 0.0
    %1690 = vmatpush1.msra.mxu0 0.0
    %1691 = vmatprep.subr.mxu0 0.0
    %1692 = vmatpush1.msra.mxu0 0.0
    %1693 = vmatprep.subr.mxu0 0.0
    %1694 = vmatpush1.msra.mxu0 0.0
    %1695 = vmatprep.subr.mxu0 0.0
    %1696 = vmatpush1.msra.mxu0 0.0
    %1697 = vmatprep.subr.mxu0 0.0
    %1698 = vmatpush1.msra.mxu0 0.0
    %1699 = vmatprep.subr.mxu0 0.0
    %1700 = vmatpush1.msra.mxu0 0.0
    %1701 = vmatprep.subr.mxu0 0.0
    %1702 = vmatpush1.msra.mxu0 0.0
    %1703 = vmatprep.subr.mxu0 0.0
    %1704 = vmatpush1.msra.mxu0 0.0
    %1705 = vmatprep.subr.mxu0 0.0
    %1706 = vmatpush1.msra.mxu0 0.0
    %1707 = vmatprep.subr.mxu0 0.0
    %1708 = vmatpush1.msra.mxu0 0.0
    %1709 = vmatprep.subr.mxu0 0.0
    %1710 = vmatpush1.msra.mxu0 0.0
    %1711 = vmatprep.subr.mxu0 0.0
    %1712 = vmatpush1.msra.mxu0 0.0
    %1713 = vmatprep.subr.mxu0 0.0
    %1714 = vmatpush1.msra.mxu0 0.0
    %1715 = vmatprep.subr.mxu0 0.0
    %1716 = vmatpush1.msra.mxu0 0.0
    %1717 = vmatprep.subr.mxu0 0.0
    %1718 = vmatpush1.msra.mxu0 0.0
    %1719 = vmatprep.mubr.f32.mxu0 0.0
    %1720 = vmatmul.mubr.f32.gmra.mrb[0].mxu0 %v1650
    %v1721 = vpop.f32.mrb[0].mxu0
    %v1722 = vadd.f32 %v1646, %v1721
    %v1723 = vpop.f32.mrb[0].mxu0
    %1724 = vdwg.mxu0
    %v1725 = vld [vmem:[%s14 + $0x7] sm:$0x1]
    %v1726 = vlaneseq
    %v1727 = vshrl.u32 %v1726, 7
    %v1728 = vsub.s32 0, %v1727
    %v1729 = vrot.slane %v1725, %v1728
    %v1730 = vadd.f32 %v1722, %v1729
    %v1731 = vld [vmem:[%s10] sm:$0xff]
    %v1732 = vld [vmem:[%s10 + $0x8] sm:$0xff]
    %v1733 = vld [vmem:[%s10 + $0x10] sm:$0xff]
    %v1734 = vld [vmem:[%s10 + $0x18] sm:$0xff]
    %v1735 = vld [vmem:[%s10 + $0x20] sm:$0xff]
    %v1736 = vld [vmem:[%s10 + $0x28] sm:$0xff]
    %v1737 = vld [vmem:[%s10 + $0x30] sm:$0xff]
    %v1738 = vld [vmem:[%s10 + $0x38] sm:$0xff]
    %v1740 = vsel %vm81, %v1730, 0
    %1742 = vmatprep.subr.mxu0 %v1732
    %1743 = vmatpush1.msra.mxu0 %v1731
    %1744 = vmatprep.subr.mxu0 %v1736
    %1745 = vmatpush1.msra.mxu0 %v1735
    %1746 = vmatprep.subr.mxu0 0.0
    %1747 = vmatpush1.msra.mxu0 0.0
    %1748 = vmatprep.subr.mxu0 0.0
    %1749 = vmatpush1.msra.mxu0 0.0
    %1750 = vmatprep.subr.mxu0 0.0
    %1751 = vmatpush1.msra.mxu0 0.0
    %1752 = vmatprep.subr.mxu0 0.0
    %1753 = vmatpush1.msra.mxu0 0.0
    %1754 = vmatprep.subr.mxu0 0.0
    %1755 = vmatpush1.msra.mxu0 0.0
    %1756 = vmatprep.subr.mxu0 0.0
    %1757 = vmatpush1.msra.mxu0 0.0
    %1758 = vmatprep.subr.mxu0 0.0
    %1759 = vmatpush1.msra.mxu0 0.0
    %1760 = vmatprep.subr.mxu0 0.0
    %1761 = vmatpush1.msra.mxu0 0.0
    %1762 = vmatprep.subr.mxu0 0.0
    %1763 = vmatpush1.msra.mxu0 0.0
    %1764 = vmatprep.subr.mxu0 0.0
    %1765 = vmatpush1.msra.mxu0 0.0
    %1766 = vmatprep.subr.mxu0 0.0
    %1767 = vmatpush1.msra.mxu0 0.0
    %1768 = vmatprep.subr.mxu0 0.0
    %1769 = vmatpush1.msra.mxu0 0.0
    %1770 = vmatprep.subr.mxu0 0.0
    %1771 = vmatpush1.msra.mxu0 0.0
    %1772 = vmatprep.subr.mxu0 0.0
    %1773 = vmatpush1.msra.mxu0 0.0
    %1774 = vmatprep.subr.mxu0 0.0
    %1775 = vmatpush1.msra.mxu0 0.0
    %1776 = vmatprep.subr.mxu0 0.0
    %1777 = vmatpush1.msra.mxu0 0.0
    %1778 = vmatprep.subr.mxu0 0.0
    %1779 = vmatpush1.msra.mxu0 0.0
    %1780 = vmatprep.subr.mxu0 0.0
    %1781 = vmatpush1.msra.mxu0 0.0
    %1782 = vmatprep.subr.mxu0 0.0
    %1783 = vmatpush1.msra.mxu0 0.0
    %1784 = vmatprep.subr.mxu0 0.0
    %1785 = vmatpush1.msra.mxu0 0.0
    %1786 = vmatprep.subr.mxu0 0.0
    %1787 = vmatpush1.msra.mxu0 0.0
    %1788 = vmatprep.subr.mxu0 0.0
    %1789 = vmatpush1.msra.mxu0 0.0
    %1790 = vmatprep.subr.mxu0 0.0
    %1791 = vmatpush1.msra.mxu0 0.0
    %1792 = vmatprep.subr.mxu0 0.0
    %1793 = vmatpush1.msra.mxu0 0.0
    %1794 = vmatprep.subr.mxu0 0.0
    %1795 = vmatpush1.msra.mxu0 0.0
    %1796 = vmatprep.subr.mxu0 0.0
    %1797 = vmatpush1.msra.mxu0 0.0
    %1798 = vmatprep.subr.mxu0 0.0
    %1799 = vmatpush1.msra.mxu0 0.0
    %1800 = vmatprep.subr.mxu0 0.0
    %1801 = vmatpush1.msra.mxu0 0.0
    %1802 = vmatprep.subr.mxu0 0.0
    %1803 = vmatpush1.msra.mxu0 0.0
    %1804 = vmatprep.subr.mxu0 0.0
    %1805 = vmatpush1.msra.mxu0 0.0
    %1806 = vmatprep.mubr.f32.mxu0 0.0
    %1807 = vmatmul.mubr.f32.gmra.mrb[0].mxu0 %v1740
    %v1808 = vpop.f32.mrb[0].mxu0
    %v1809 = vadd.f32 0.0, %v1808
    %v1810 = vpop.f32.mrb[0].mxu0
    %v1811 = vadd.f32 0.0, %v1810
    %1812 = vdwg.mxu0
    %1813 = vmatprep.subr.mxu0 %v1734
    %1814 = vmatpush1.msra.mxu0 %v1733
    %1815 = vmatprep.subr.mxu0 %v1738
    %1816 = vmatpush1.msra.mxu0 %v1737
    %1817 = vmatprep.subr.mxu0 0.0
    %1818 = vmatpush1.msra.mxu0 0.0
    %1819 = vmatprep.subr.mxu0 0.0
    %1820 = vmatpush1.msra.mxu0 0.0
    %1821 = vmatprep.subr.mxu0 0.0
    %1822 = vmatpush1.msra.mxu0 0.0
    %1823 = vmatprep.subr.mxu0 0.0
    %1824 = vmatpush1.msra.mxu0 0.0
    %1825 = vmatprep.subr.mxu0 0.0
    %1826 = vmatpush1.msra.mxu0 0.0
    %1827 = vmatprep.subr.mxu0 0.0
    %1828 = vmatpush1.msra.mxu0 0.0
    %1829 = vmatprep.subr.mxu0 0.0
    %1830 = vmatpush1.msra.mxu0 0.0
    %1831 = vmatprep.subr.mxu0 0.0
    %1832 = vmatpush1.msra.mxu0 0.0
    %1833 = vmatprep.subr.mxu0 0.0
    %1834 = vmatpush1.msra.mxu0 0.0
    %1835 = vmatprep.subr.mxu0 0.0
    %1836 = vmatpush1.msra.mxu0 0.0
    %1837 = vmatprep.subr.mxu0 0.0
    %1838 = vmatpush1.msra.mxu0 0.0
    %1839 = vmatprep.subr.mxu0 0.0
    %1840 = vmatpush1.msra.mxu0 0.0
    %1841 = vmatprep.subr.mxu0 0.0
    %1842 = vmatpush1.msra.mxu0 0.0
    %1843 = vmatprep.subr.mxu0 0.0
    %1844 = vmatpush1.msra.mxu0 0.0
    %1845 = vmatprep.subr.mxu0 0.0
    %1846 = vmatpush1.msra.mxu0 0.0
    %1847 = vmatprep.subr.mxu0 0.0
    %1848 = vmatpush1.msra.mxu0 0.0
    %1849 = vmatprep.subr.mxu0 0.0
    %1850 = vmatpush1.msra.mxu0 0.0
    %1851 = vmatprep.subr.mxu0 0.0
    %1852 = vmatpush1.msra.mxu0 0.0
    %1853 = vmatprep.subr.mxu0 0.0
    %1854 = vmatpush1.msra.mxu0 0.0
    %1855 = vmatprep.subr.mxu0 0.0
    %1856 = vmatpush1.msra.mxu0 0.0
    %1857 = vmatprep.subr.mxu0 0.0
    %1858 = vmatpush1.msra.mxu0 0.0
    %1859 = vmatprep.subr.mxu0 0.0
    %1860 = vmatpush1.msra.mxu0 0.0
    %1861 = vmatprep.subr.mxu0 0.0
    %1862 = vmatpush1.msra.mxu0 0.0
    %1863 = vmatprep.subr.mxu0 0.0
    %1864 = vmatpush1.msra.mxu0 0.0
    %1865 = vmatprep.subr.mxu0 0.0
    %1866 = vmatpush1.msra.mxu0 0.0
    %1867 = vmatprep.subr.mxu0 0.0
    %1868 = vmatpush1.msra.mxu0 0.0
    %1869 = vmatprep.subr.mxu0 0.0
    %1870 = vmatpush1.msra.mxu0 0.0
    %1871 = vmatprep.subr.mxu0 0.0
    %1872 = vmatpush1.msra.mxu0 0.0
    %1873 = vmatprep.subr.mxu0 0.0
    %1874 = vmatpush1.msra.mxu0 0.0
    %1875 = vmatprep.subr.mxu0 0.0
    %1876 = vmatpush1.msra.mxu0 0.0
    %1877 = vmatprep.mubr.f32.mxu0 0.0
    %1878 = vmatmul.mubr.f32.gmra.mrb[0].mxu0 %v1740
    %v1879 = vpop.f32.mrb[0].mxu0
    %v1880 = vadd.f32 0.0, %v1879
    %v1881 = vpop.f32.mrb[0].mxu0
    %v1882 = vadd.f32 0.0, %v1881
    %1883 = vdwg.mxu0
    %v1884 = vld [vmem:[%s9] sm:$0xff]
    %v1885 = vld [vmem:[%s9 + $0x8] sm:$0xff]
    %s1886 = scalar_lea.vmem %s9, 16
    %v1887 = vld [vmem:[%s1886] sm:$0xff]
    %v1888 = vld [vmem:[%s1886 + $0x8] sm:$0xff]
    %vm1889 = vcmask 64512
    %v1891 = vsel %vm1889, %v1887, 0
    %v1894 = vsel %vm1889, %v1888, 0
    %1896 = vmatprep.subr.mxu0 0.0
    %1897 = vmatpush1.msra.mxu0 %v1811
    %1898 = vmatprep.subr.mxu0 0.0
    %1899 = vmatpush1.msra.mxu0 0.0
    %1900 = vmatprep.subr.mxu0 0.0
    %1901 = vmatpush1.msra.mxu0 0.0
    %1902 = vmatprep.subr.mxu0 0.0
    %1903 = vmatpush1.msra.mxu0 0.0
    %1904 = vmatprep.subr.mxu0 0.0
    %1905 = vmatpush1.msra.mxu0 0.0
    %1906 = vmatprep.subr.mxu0 0.0
    %1907 = vmatpush1.msra.mxu0 0.0
    %1908 = vmatprep.subr.mxu0 0.0
    %1909 = vmatpush1.msra.mxu0 0.0
    %1910 = vmatprep.subr.mxu0 0.0
    %1911 = vmatpush1.msra.mxu0 0.0
    %1912 = vmatprep.subr.mxu0 0.0
    %1913 = vmatpush1.msra.mxu0 0.0
    %1914 = vmatprep.subr.mxu0 0.0
    %1915 = vmatpush1.msra.mxu0 0.0
    %1916 = vmatprep.subr.mxu0 0.0
    %1917 = vmatpush1.msra.mxu0 0.0
    %1918 = vmatprep.subr.mxu0 0.0
    %1919 = vmatpush1.msra.mxu0 0.0
    %1920 = vmatprep.subr.mxu0 0.0
    %1921 = vmatpush1.msra.mxu0 0.0
    %1922 = vmatprep.subr.mxu0 0.0
    %1923 = vmatpush1.msra.mxu0 0.0
    %1924 = vmatprep.subr.mxu0 0.0
    %1925 = vmatpush1.msra.mxu0 0.0
    %1926 = vmatprep.subr.mxu0 0.0
    %1927 = vmatpush1.msra.mxu0 0.0
    %1928 = vmatprep.subr.mxu0 0.0
    %1929 = vmatpush1.msra.mxu0 0.0
    %1930 = vmatprep.subr.mxu0 0.0
    %1931 = vmatpush1.msra.mxu0 0.0
    %1932 = vmatprep.subr.mxu0 0.0
    %1933 = vmatpush1.msra.mxu0 0.0
    %1934 = vmatprep.subr.mxu0 0.0
    %1935 = vmatpush1.msra.mxu0 0.0
    %1936 = vmatprep.subr.mxu0 0.0
    %1937 = vmatpush1.msra.mxu0 0.0
    %1938 = vmatprep.subr.mxu0 0.0
    %1939 = vmatpush1.msra.mxu0 0.0
    %1940 = vmatprep.subr.mxu0 0.0
    %1941 = vmatpush1.msra.mxu0 0.0
    %1942 = vmatprep.subr.mxu0 0.0
    %1943 = vmatpush1.msra.mxu0 0.0
    %1944 = vmatprep.subr.mxu0 0.0
    %1945 = vmatpush1.msra.mxu0 0.0
    %1946 = vmatprep.subr.mxu0 0.0
    %1947 = vmatpush1.msra.mxu0 0.0
    %1948 = vmatprep.subr.mxu0 0.0
    %1949 = vmatpush1.msra.mxu0 0.0
    %1950 = vmatprep.subr.mxu0 0.0
    %1951 = vmatpush1.msra.mxu0 0.0
    %1952 = vmatprep.subr.mxu0 0.0
    %1953 = vmatpush1.msra.mxu0 0.0
    %1954 = vmatprep.subr.mxu0 0.0
    %1955 = vmatpush1.msra.mxu0 0.0
    %1956 = vmatprep.subr.mxu0 0.0
    %1957 = vmatpush1.msra.mxu0 0.0
    %1958 = vmatprep.subr.mxu0 0.0
    %1959 = vmatpush1.msra.mxu0 0.0
    %1960 = vmatprep.mubr.f32.mxu0 0.0
    %1961 = vmatmul.mubr.f32.gmra.mrb[0].mxu0 %v1891
    %v1962 = vpop.f32.mrb[0].mxu0
    %v1963 = vadd.f32 0.0, %v1962
    %v1964 = vpop.f32.mrb[0].mxu0
    %1965 = vmatprep.mubr.f32.mxu0 0.0
    %1966 = vmatmul.mubr.f32.gmra.mrb[0].mxu0 %v1894
    %v1967 = vpop.f32.mrb[0].mxu0
    %v1968 = vadd.f32 0.0, %v1967
    %v1969 = vpop.f32.mrb[0].mxu0
    %1970 = vdwg.mxu0
    %v1972 = vsel %vm1889, %v1884, 0
    %v1975 = vsel %vm1889, %v1885, 0
    %1977 = vmatprep.subr.mxu0 0.0
    %1978 = vmatpush1.msra.mxu0 %v1809
    %1979 = vmatprep.subr.mxu0 0.0
    %1980 = vmatpush1.msra.mxu0 0.0
    %1981 = vmatprep.subr.mxu0 0.0
    %1982 = vmatpush1.msra.mxu0 0.0
    %1983 = vmatprep.subr.mxu0 0.0
    %1984 = vmatpush1.msra.mxu0 0.0
    %1985 = vmatprep.subr.mxu0 0.0
    %1986 = vmatpush1.msra.mxu0 0.0
    %1987 = vmatprep.subr.mxu0 0.0
    %1988 = vmatpush1.msra.mxu0 0.0
    %1989 = vmatprep.subr.mxu0 0.0
    %1990 = vmatpush1.msra.mxu0 0.0
    %1991 = vmatprep.subr.mxu0 0.0
    %1992 = vmatpush1.msra.mxu0 0.0
    %1993 = vmatprep.subr.mxu0 0.0
    %1994 = vmatpush1.msra.mxu0 0.0
    %1995 = vmatprep.subr.mxu0 0.0
    %1996 = vmatpush1.msra.mxu0 0.0
    %1997 = vmatprep.subr.mxu0 0.0
    %1998 = vmatpush1.msra.mxu0 0.0
    %1999 = vmatprep.subr.mxu0 0.0
    %2000 = vmatpush1.msra.mxu0 0.0
    %2001 = vmatprep.subr.mxu0 0.0
    %2002 = vmatpush1.msra.mxu0 0.0
    %2003 = vmatprep.subr.mxu0 0.0
    %2004 = vmatpush1.msra.mxu0 0.0
    %2005 = vmatprep.subr.mxu0 0.0
    %2006 = vmatpush1.msra.mxu0 0.0
    %2007 = vmatprep.subr.mxu0 0.0
    %2008 = vmatpush1.msra.mxu0 0.0
    %2009 = vmatprep.subr.mxu0 0.0
    %2010 = vmatpush1.msra.mxu0 0.0
    %2011 = vmatprep.subr.mxu0 0.0
    %2012 = vmatpush1.msra.mxu0 0.0
    %2013 = vmatprep.subr.mxu0 0.0
    %2014 = vmatpush1.msra.mxu0 0.0
    %2015 = vmatprep.subr.mxu0 0.0
    %2016 = vmatpush1.msra.mxu0 0.0
    %2017 = vmatprep.subr.mxu0 0.0
    %2018 = vmatpush1.msra.mxu0 0.0
    %2019 = vmatprep.subr.mxu0 0.0
    %2020 = vmatpush1.msra.mxu0 0.0
    %2021 = vmatprep.subr.mxu0 0.0
    %2022 = vmatpush1.msra.mxu0 0.0
    %2023 = vmatprep.subr.mxu0 0.0
    %2024 = vmatpush1.msra.mxu0 0.0
    %2025 = vmatprep.subr.mxu0 0.0
    %2026 = vmatpush1.msra.mxu0 0.0
    %2027 = vmatprep.subr.mxu0 0.0
    %2028 = vmatpush1.msra.mxu0 0.0
    %2029 = vmatprep.subr.mxu0 0.0
    %2030 = vmatpush1.msra.mxu0 0.0
    %2031 = vmatprep.subr.mxu0 0.0
    %2032 = vmatpush1.msra.mxu0 0.0
    %2033 = vmatprep.subr.mxu0 0.0
    %2034 = vmatpush1.msra.mxu0 0.0
    %2035 = vmatprep.subr.mxu0 0.0
    %2036 = vmatpush1.msra.mxu0 0.0
    %2037 = vmatprep.subr.mxu0 0.0
    %2038 = vmatpush1.msra.mxu0 0.0
    %2039 = vmatprep.subr.mxu0 0.0
    %2040 = vmatpush1.msra.mxu0 0.0
    %2041 = vmatprep.mubr.f32.mxu0 0.0
    %2042 = vmatmul.mubr.f32.gmra.mrb[0].mxu0 %v1972
    %v2043 = vpop.f32.mrb[0].mxu0
    %v2044 = vadd.f32 %v1963, %v2043
    %v2045 = vpop.f32.mrb[0].mxu0
    %2046 = vmatprep.mubr.f32.mxu0 0.0
    %2047 = vmatmul.mubr.f32.gmra.mrb[0].mxu0 %v1975
    %v2048 = vpop.f32.mrb[0].mxu0
    %v2049 = vadd.f32 %v1968, %v2048
    %v2050 = vpop.f32.mrb[0].mxu0
    %2051 = vdwg.mxu0
    %s2052 = scalar_lea.vmem %s9, 32
    %v2053 = vld [vmem:[%s2052] sm:$0xff]
    %v2054 = vld [vmem:[%s2052 + $0x8] sm:$0xff]
    %v2056 = vsel %vm1889, %v2053, 0
    %v2059 = vsel %vm1889, %v2054, 0
    %2061 = vmatprep.subr.mxu0 0.0
    %2062 = vmatpush1.msra.mxu0 %v1880
    %2063 = vmatprep.subr.mxu0 0.0
    %2064 = vmatpush1.msra.mxu0 0.0
    %2065 = vmatprep.subr.mxu0 0.0
    %2066 = vmatpush1.msra.mxu0 0.0
    %2067 = vmatprep.subr.mxu0 0.0
    %2068 = vmatpush1.msra.mxu0 0.0
    %2069 = vmatprep.subr.mxu0 0.0
    %2070 = vmatpush1.msra.mxu0 0.0
    %2071 = vmatprep.subr.mxu0 0.0
    %2072 = vmatpush1.msra.mxu0 0.0
    %2073 = vmatprep.subr.mxu0 0.0
    %2074 = vmatpush1.msra.mxu0 0.0
    %2075 = vmatprep.subr.mxu0 0.0
    %2076 = vmatpush1.msra.mxu0 0.0
    %2077 = vmatprep.subr.mxu0 0.0
    %2078 = vmatpush1.msra.mxu0 0.0
    %2079 = vmatprep.subr.mxu0 0.0
    %2080 = vmatpush1.msra.mxu0 0.0
    %2081 = vmatprep.subr.mxu0 0.0
    %2082 = vmatpush1.msra.mxu0 0.0
    %2083 = vmatprep.subr.mxu0 0.0
    %2084 = vmatpush1.msra.mxu0 0.0
    %2085 = vmatprep.subr.mxu0 0.0
    %2086 = vmatpush1.msra.mxu0 0.0
    %2087 = vmatprep.subr.mxu0 0.0
    %2088 = vmatpush1.msra.mxu0 0.0
    %2089 = vmatprep.subr.mxu0 0.0
    %2090 = vmatpush1.msra.mxu0 0.0
    %2091 = vmatprep.subr.mxu0 0.0
    %2092 = vmatpush1.msra.mxu0 0.0
    %2093 = vmatprep.subr.mxu0 0.0
    %2094 = vmatpush1.msra.mxu0 0.0
    %2095 = vmatprep.subr.mxu0 0.0
    %2096 = vmatpush1.msra.mxu0 0.0
    %2097 = vmatprep.subr.mxu0 0.0
    %2098 = vmatpush1.msra.mxu0 0.0
    %2099 = vmatprep.subr.mxu0 0.0
    %2100 = vmatpush1.msra.mxu0 0.0
    %2101 = vmatprep.subr.mxu0 0.0
    %2102 = vmatpush1.msra.mxu0 0.0
    %2103 = vmatprep.subr.mxu0 0.0
    %2104 = vmatpush1.msra.mxu0 0.0
    %2105 = vmatprep.subr.mxu0 0.0
    %2106 = vmatpush1.msra.mxu0 0.0
    %2107 = vmatprep.subr.mxu0 0.0
    %2108 = vmatpush1.msra.mxu0 0.0
    %2109 = vmatprep.subr.mxu0 0.0
    %2110 = vmatpush1.msra.mxu0 0.0
    %2111 = vmatprep.subr.mxu0 0.0
    %2112 = vmatpush1.msra.mxu0 0.0
    %2113 = vmatprep.subr.mxu0 0.0
    %2114 = vmatpush1.msra.mxu0 0.0
    %2115 = vmatprep.subr.mxu0 0.0
    %2116 = vmatpush1.msra.mxu0 0.0
    %2117 = vmatprep.subr.mxu0 0.0
    %2118 = vmatpush1.msra.mxu0 0.0
    %2119 = vmatprep.subr.mxu0 0.0
    %2120 = vmatpush1.msra.mxu0 0.0
    %2121 = vmatprep.subr.mxu0 0.0
    %2122 = vmatpush1.msra.mxu0 0.0
    %2123 = vmatprep.subr.mxu0 0.0
    %2124 = vmatpush1.msra.mxu0 0.0
    %2125 = vmatprep.mubr.f32.mxu0 0.0
    %2126 = vmatmul.mubr.f32.gmra.mrb[0].mxu0 %v2056
    %v2127 = vpop.f32.mrb[0].mxu0
    %v2128 = vadd.f32 0.0, %v2127
    %v2129 = vpop.f32.mrb[0].mxu0
    %2130 = vmatprep.mubr.f32.mxu0 0.0
    %2131 = vmatmul.mubr.f32.gmra.mrb[0].mxu0 %v2059
    %v2132 = vpop.f32.mrb[0].mxu0
    %v2133 = vadd.f32 0.0, %v2132
    %v2134 = vpop.f32.mrb[0].mxu0
    %2135 = vdwg.mxu0
    %v2136 = vadd.f32 %v2044, %v2128
    %v2137 = vadd.f32 %v2049, %v2133
    %s2138 = scalar_lea.vmem %s9, 48
    %v2139 = vld [vmem:[%s2138] sm:$0xff]
    %v2140 = vld [vmem:[%s2138 + $0x8] sm:$0xff]
    %v2142 = vsel %vm1889, %v2139, 0
    %v2145 = vsel %vm1889, %v2140, 0
    %2147 = vmatprep.subr.mxu0 0.0
    %2148 = vmatpush1.msra.mxu0 %v1882
    %2149 = vmatprep.subr.mxu0 0.0
    %2150 = vmatpush1.msra.mxu0 0.0
    %2151 = vmatprep.subr.mxu0 0.0
    %2152 = vmatpush1.msra.mxu0 0.0
    %2153 = vmatprep.subr.mxu0 0.0
    %2154 = vmatpush1.msra.mxu0 0.0
    %2155 = vmatprep.subr.mxu0 0.0
    %2156 = vmatpush1.msra.mxu0 0.0
    %2157 = vmatprep.subr.mxu0 0.0
    %2158 = vmatpush1.msra.mxu0 0.0
    %2159 = vmatprep.subr.mxu0 0.0
    %2160 = vmatpush1.msra.mxu0 0.0
    %2161 = vmatprep.subr.mxu0 0.0
    %2162 = vmatpush1.msra.mxu0 0.0
    %2163 = vmatprep.subr.mxu0 0.0
    %2164 = vmatpush1.msra.mxu0 0.0
    %2165 = vmatprep.subr.mxu0 0.0
    %2166 = vmatpush1.msra.mxu0 0.0
    %2167 = vmatprep.subr.mxu0 0.0
    %2168 = vmatpush1.msra.mxu0 0.0
    %2169 = vmatprep.subr.mxu0 0.0
    %2170 = vmatpush1.msra.mxu0 0.0
    %2171 = vmatprep.subr.mxu0 0.0
    %2172 = vmatpush1.msra.mxu0 0.0
    %2173 = vmatprep.subr.mxu0 0.0
    %2174 = vmatpush1.msra.mxu0 0.0
    %2175 = vmatprep.subr.mxu0 0.0
    %2176 = vmatpush1.msra.mxu0 0.0
    %2177 = vmatprep.subr.mxu0 0.0
    %2178 = vmatpush1.msra.mxu0 0.0
    %2179 = vmatprep.subr.mxu0 0.0
    %2180 = vmatpush1.msra.mxu0 0.0
    %2181 = vmatprep.subr.mxu0 0.0
    %2182 = vmatpush1.msra.mxu0 0.0
    %2183 = vmatprep.subr.mxu0 0.0
    %2184 = vmatpush1.msra.mxu0 0.0
    %2185 = vmatprep.subr.mxu0 0.0
    %2186 = vmatpush1.msra.mxu0 0.0
    %2187 = vmatprep.subr.mxu0 0.0
    %2188 = vmatpush1.msra.mxu0 0.0
    %2189 = vmatprep.subr.mxu0 0.0
    %2190 = vmatpush1.msra.mxu0 0.0
    %2191 = vmatprep.subr.mxu0 0.0
    %2192 = vmatpush1.msra.mxu0 0.0
    %2193 = vmatprep.subr.mxu0 0.0
    %2194 = vmatpush1.msra.mxu0 0.0
    %2195 = vmatprep.subr.mxu0 0.0
    %2196 = vmatpush1.msra.mxu0 0.0
    %2197 = vmatprep.subr.mxu0 0.0
    %2198 = vmatpush1.msra.mxu0 0.0
    %2199 = vmatprep.subr.mxu0 0.0
    %2200 = vmatpush1.msra.mxu0 0.0
    %2201 = vmatprep.subr.mxu0 0.0
    %2202 = vmatpush1.msra.mxu0 0.0
    %2203 = vmatprep.subr.mxu0 0.0
    %2204 = vmatpush1.msra.mxu0 0.0
    %2205 = vmatprep.subr.mxu0 0.0
    %2206 = vmatpush1.msra.mxu0 0.0
    %2207 = vmatprep.subr.mxu0 0.0
    %2208 = vmatpush1.msra.mxu0 0.0
    %2209 = vmatprep.subr.mxu0 0.0
    %2210 = vmatpush1.msra.mxu0 0.0
    %2211 = vmatprep.mubr.f32.mxu0 0.0
    %2212 = vmatmul.mubr.f32.gmra.mrb[0].mxu0 %v2142
    %v2213 = vpop.f32.mrb[0].mxu0
    %v2214 = vadd.f32 0.0, %v2213
    %v2215 = vpop.f32.mrb[0].mxu0
    %2216 = vmatprep.mubr.f32.mxu0 0.0
    %2217 = vmatmul.mubr.f32.gmra.mrb[0].mxu0 %v2145
    %v2218 = vpop.f32.mrb[0].mxu0
    %v2219 = vadd.f32 0.0, %v2218
    %v2220 = vpop.f32.mrb[0].mxu0
    %2221 = vdwg.mxu0
    %v2222 = vadd.f32 %v2136, %v2214
    %v2223 = vadd.f32 %v2137, %v2219
    %v2224 = vld [vmem:[%s14 + $0x2] sm:$0x1]
    %v2225 = vld [vmem:[%s14 + $0x3] sm:$0x1]
    %v2226 = vadd.f32 %v2222, %v2223
    %v2227 = vrot.slane %v2226, 4
    %v2228 = vadd.f32 %v2226, %v2227
    %v2229 = vrot.slane %v2228, 2
    %v2230 = vadd.f32 %v2228, %v2229
    %v2231 = vrot.slane %v2230, 1
    %v2232 = vadd.f32 %v2230, %v2231
    %v2233 = vmul.f32 %v2222, %v2222
    %v2234 = vmul.f32 %v2223, %v2223
    %v2235 = vadd.f32 %v2233, %v2234
    %v2236 = vrot.slane %v2235, 4
    %v2237 = vadd.f32 %v2235, %v2236
    %v2238 = vrot.slane %v2237, 2
    %v2239 = vadd.f32 %v2237, %v2238
    %v2240 = vrot.slane %v2239, 1
    %v2241 = vadd.f32 %v2239, %v2240
    %v2242 = vld [vmem:[%s11] sm:$0xff]
    %v2243 = vld [vmem:[%s11 + $0x8] sm:$0xff]
    %v2244 = vld [vmem:[%s11 + $0x10] sm:$0xff]
    %v2245 = vld [vmem:[%s11 + $0x18] sm:$0xff]
    %v2246 = vld [vmem:[%s11 + $0x20] sm:$0xff]
    %v2247 = vld [vmem:[%s11 + $0x28] sm:$0xff]
    %v2248 = vld [vmem:[%s11 + $0x30] sm:$0xff]
    %v2249 = vld [vmem:[%s11 + $0x38] sm:$0xff]
    %v2250 = vld [vmem:[%s11 + $0x40] sm:$0xff]
    %v2251 = vld [vmem:[%s11 + $0x48] sm:$0xff]
    %v2252 = vld [vmem:[%s11 + $0x50] sm:$0xff]
    %v2253 = vld [vmem:[%s11 + $0x58] sm:$0xff]
    %v2254 = vld [vmem:[%s11 + $0x60] sm:$0xff]
    %v2255 = vld [vmem:[%s11 + $0x68] sm:$0xff]
    %v2256 = vld [vmem:[%s11 + $0x70] sm:$0xff]
    %v2257 = vld [vmem:[%s11 + $0x78] sm:$0xff]
    %2258 = vmatprep.subr.mxu0 0.0
    %2259 = vmatpush1.msra.mxu0 %v2242
    %2260 = vmatprep.subr.mxu0 0.0
    %2261 = vmatpush1.msra.mxu0 %v2243
    %2262 = vmatprep.subr.mxu0 0.0
    %2263 = vmatpush1.msra.mxu0 %v2244
    %2264 = vmatprep.subr.mxu0 0.0
    %2265 = vmatpush1.msra.mxu0 %v2245
    %2266 = vmatprep.subr.mxu0 0.0
    %2267 = vmatpush1.msra.mxu0 %v2246
    %2268 = vmatprep.subr.mxu0 0.0
    %2269 = vmatpush1.msra.mxu0 %v2247
    %2270 = vmatprep.subr.mxu0 0.0
    %2271 = vmatpush1.msra.mxu0 %v2248
    %2272 = vmatprep.subr.mxu0 0.0
    %2273 = vmatpush1.msra.mxu0 %v2249
    %2274 = vmatprep.subr.mxu0 0.0
    %2275 = vmatpush1.msra.mxu0 %v2250
    %2276 = vmatprep.subr.mxu0 0.0
    %2277 = vmatpush1.msra.mxu0 %v2251
    %2278 = vmatprep.subr.mxu0 0.0
    %2279 = vmatpush1.msra.mxu0 %v2252
    %2280 = vmatprep.subr.mxu0 0.0
    %2281 = vmatpush1.msra.mxu0 %v2253
    %2282 = vmatprep.subr.mxu0 0.0
    %2283 = vmatpush1.msra.mxu0 %v2254
    %2284 = vmatprep.subr.mxu0 0.0
    %2285 = vmatpush1.msra.mxu0 %v2255
    %2286 = vmatprep.subr.mxu0 0.0
    %2287 = vmatpush1.msra.mxu0 %v2256
    %2288 = vmatprep.subr.mxu0 0.0
    %2289 = vmatpush1.msra.mxu0 %v2257
    %2290 = vmatprep.subr.mxu0 0.0
    %2291 = vmatpush1.msra.mxu0 0.0
    %2292 = vmatprep.subr.mxu0 0.0
    %2293 = vmatpush1.msra.mxu0 0.0
    %2294 = vmatprep.subr.mxu0 0.0
    %2295 = vmatpush1.msra.mxu0 0.0
    %2296 = vmatprep.subr.mxu0 0.0
    %2297 = vmatpush1.msra.mxu0 0.0
    %2298 = vmatprep.subr.mxu0 0.0
    %2299 = vmatpush1.msra.mxu0 0.0
    %2300 = vmatprep.subr.mxu0 0.0
    %2301 = vmatpush1.msra.mxu0 0.0
    %2302 = vmatprep.subr.mxu0 0.0
    %2303 = vmatpush1.msra.mxu0 0.0
    %2304 = vmatprep.subr.mxu0 0.0
    %2305 = vmatpush1.msra.mxu0 0.0
    %2306 = vmatprep.subr.mxu0 0.0
    %2307 = vmatpush1.msra.mxu0 0.0
    %2308 = vmatprep.subr.mxu0 0.0
    %2309 = vmatpush1.msra.mxu0 0.0
    %2310 = vmatprep.subr.mxu0 0.0
    %2311 = vmatpush1.msra.mxu0 0.0
    %2312 = vmatprep.subr.mxu0 0.0
    %2313 = vmatpush1.msra.mxu0 0.0
    %2314 = vmatprep.subr.mxu0 0.0
    %2315 = vmatpush1.msra.mxu0 0.0
    %2316 = vmatprep.subr.mxu0 0.0
    %2317 = vmatpush1.msra.mxu0 0.0
    %2318 = vmatprep.subr.mxu0 0.0
    %2319 = vmatpush1.msra.mxu0 0.0
    %2320 = vmatprep.subr.mxu0 0.0
    %2321 = vmatpush1.msra.mxu0 0.0
    %2322 = vmatprep.mubr.f32.mxu0 0.0
    %2323 = vmatmul.mubr.f32.gmra.mrb[0].mxu0 %v2232
    %v2324 = vpop.f32.mrb[0].mxu0
    %v2325 = vadd.f32 0.0, %v2324
    %v2326 = vpop.f32.mrb[0].mxu0
    %2327 = vdwg.mxu0
    %2328 = vmatprep.subr.mxu0 0.0
    %2329 = vmatpush1.msra.mxu0 %v2242
    %2330 = vmatprep.subr.mxu0 0.0
    %2331 = vmatpush1.msra.mxu0 %v2243
    %2332 = vmatprep.subr.mxu0 0.0
    %2333 = vmatpush1.msra.mxu0 %v2244
    %2334 = vmatprep.subr.mxu0 0.0
    %2335 = vmatpush1.msra.mxu0 %v2245
    %2336 = vmatprep.subr.mxu0 0.0
    %2337 = vmatpush1.msra.mxu0 %v2246
    %2338 = vmatprep.subr.mxu0 0.0
    %2339 = vmatpush1.msra.mxu0 %v2247
    %2340 = vmatprep.subr.mxu0 0.0
    %2341 = vmatpush1.msra.mxu0 %v2248
    %2342 = vmatprep.subr.mxu0 0.0
    %2343 = vmatpush1.msra.mxu0 %v2249
    %2344 = vmatprep.subr.mxu0 0.0
    %2345 = vmatpush1.msra.mxu0 %v2250
    %2346 = vmatprep.subr.mxu0 0.0
    %2347 = vmatpush1.msra.mxu0 %v2251
    %2348 = vmatprep.subr.mxu0 0.0
    %2349 = vmatpush1.msra.mxu0 %v2252
    %2350 = vmatprep.subr.mxu0 0.0
    %2351 = vmatpush1.msra.mxu0 %v2253
    %2352 = vmatprep.subr.mxu0 0.0
    %2353 = vmatpush1.msra.mxu0 %v2254
    %2354 = vmatprep.subr.mxu0 0.0
    %2355 = vmatpush1.msra.mxu0 %v2255
    %2356 = vmatprep.subr.mxu0 0.0
    %2357 = vmatpush1.msra.mxu0 %v2256
    %2358 = vmatprep.subr.mxu0 0.0
    %2359 = vmatpush1.msra.mxu0 %v2257
    %2360 = vmatprep.subr.mxu0 0.0
    %2361 = vmatpush1.msra.mxu0 0.0
    %2362 = vmatprep.subr.mxu0 0.0
    %2363 = vmatpush1.msra.mxu0 0.0
    %2364 = vmatprep.subr.mxu0 0.0
    %2365 = vmatpush1.msra.mxu0 0.0
    %2366 = vmatprep.subr.mxu0 0.0
    %2367 = vmatpush1.msra.mxu0 0.0
    %2368 = vmatprep.subr.mxu0 0.0
    %2369 = vmatpush1.msra.mxu0 0.0
    %2370 = vmatprep.subr.mxu0 0.0
    %2371 = vmatpush1.msra.mxu0 0.0
    %2372 = vmatprep.subr.mxu0 0.0
    %2373 = vmatpush1.msra.mxu0 0.0
    %2374 = vmatprep.subr.mxu0 0.0
    %2375 = vmatpush1.msra.mxu0 0.0
    %2376 = vmatprep.subr.mxu0 0.0
    %2377 = vmatpush1.msra.mxu0 0.0
    %2378 = vmatprep.subr.mxu0 0.0
    %2379 = vmatpush1.msra.mxu0 0.0
    %2380 = vmatprep.subr.mxu0 0.0
    %2381 = vmatpush1.msra.mxu0 0.0
    %2382 = vmatprep.subr.mxu0 0.0
    %2383 = vmatpush1.msra.mxu0 0.0
    %2384 = vmatprep.subr.mxu0 0.0
    %2385 = vmatpush1.msra.mxu0 0.0
    %2386 = vmatprep.subr.mxu0 0.0
    %2387 = vmatpush1.msra.mxu0 0.0
    %2388 = vmatprep.subr.mxu0 0.0
    %2389 = vmatpush1.msra.mxu0 0.0
    %2390 = vmatprep.subr.mxu0 0.0
    %2391 = vmatpush1.msra.mxu0 0.0
    %2392 = vmatprep.mubr.f32.mxu0 0.0
    %2393 = vmatmul.mubr.f32.gmra.mrb[0].mxu0 %v2241
    %v2394 = vpop.f32.mrb[0].mxu0
    %v2395 = vadd.f32 0.0, %v2394
    %v2396 = vpop.f32.mrb[0].mxu0
    %2397 = vdwg.mxu0
    %v2398 = vmul.f32 %v2325, %v2325
    %v2399 = vsub.f32 %v2395, %v2398
    %v2400 = vadd.f32 %v2399, 1e-05
    %v2401 = vrsqrt.pop %v2400
    %v2402 = vmul.f32 %v2224, %v2401
    %v2403 = vmul.f32 %v2325, %v2402
    %v2404 = vsub.f32 %v2225, %v2403
    %v2405 = vlaneseq
    %v2406 = vshrl.u32 %v2405, 7
    %v2407 = vsub.s32 0, %v2406
    %v2408 = vrot.slane %v2402, %v2407
    %v2409 = vmul.f32 %v2222, %v2408
    %v2410 = vmul.f32 %v2223, %v2408
    %v2411 = vlaneseq
    %v2412 = vshrl.u32 %v2411, 7
    %v2413 = vsub.s32 0, %v2412
    %v2414 = vrot.slane %v2404, %v2413
    %v2415 = vadd.f32 %v2409, %v2414
    %v2416 = vadd.f32 %v2410, %v2414
    %v2417 = vmax.f32 %v2415, 0.0
    %v2418 = vmax.f32 %v2416, 0.0
    %v2419 = vld [vmem:[%s13] sm:$0xff]
    %v2420 = vld [vmem:[%s13 + $0x8] sm:$0xff]
    %v2421 = vld [vmem:[%s13 + $0x10] sm:$0xff]
    %v2422 = vld [vmem:[%s13 + $0x18] sm:$0xff]
    %v2423 = vld [vmem:[%s13 + $0x20] sm:$0xff]
    %v2424 = vld [vmem:[%s13 + $0x28] sm:$0xff]
    %v2425 = vld [vmem:[%s13 + $0x30] sm:$0xff]
    %v2426 = vld [vmem:[%s13 + $0x38] sm:$0xff]
    %v2427 = vld [vmem:[%s13 + $0x40] sm:$0xff]
    %v2428 = vld [vmem:[%s13 + $0x48] sm:$0xff]
    %v2429 = vld [vmem:[%s13 + $0x50] sm:$0xff]
    %v2430 = vld [vmem:[%s13 + $0x58] sm:$0xff]
    %v2431 = vld [vmem:[%s13 + $0x60] sm:$0xff]
    %v2432 = vld [vmem:[%s13 + $0x68] sm:$0xff]
    %v2433 = vld [vmem:[%s13 + $0x70] sm:$0xff]
    %v2434 = vld [vmem:[%s13 + $0x78] sm:$0xff]
    %v2435 = vld [vmem:[%s13 + $0x80] sm:$0xff]
    %v2436 = vld [vmem:[%s13 + $0x88] sm:$0xff]
    %v2437 = vld [vmem:[%s13 + $0x90] sm:$0xff]
    %v2438 = vld [vmem:[%s13 + $0x98] sm:$0xff]
    %v2439 = vld [vmem:[%s13 + $0xa0] sm:$0xff]
    %v2440 = vld [vmem:[%s13 + $0xa8] sm:$0xff]
    %v2441 = vld [vmem:[%s13 + $0xb0] sm:$0xff]
    %v2442 = vld [vmem:[%s13 + $0xb8] sm:$0xff]
    %v2443 = vld [vmem:[%s13 + $0xc0] sm:$0xff]
    %v2444 = vld [vmem:[%s13 + $0xc8] sm:$0xff]
    %v2445 = vld [vmem:[%s13 + $0xd0] sm:$0xff]
    %v2446 = vld [vmem:[%s13 + $0xd8] sm:$0xff]
    %v2447 = vld [vmem:[%s13 + $0xe0] sm:$0xff]
    %v2448 = vld [vmem:[%s13 + $0xe8] sm:$0xff]
    %v2449 = vld [vmem:[%s13 + $0xf0] sm:$0xff]
    %v2450 = vld [vmem:[%s13 + $0xf8] sm:$0xff]
    %v2451 = vld [vmem:[%s13 + $0x100] sm:$0xff]
    %v2452 = vld [vmem:[%s13 + $0x108] sm:$0xff]
    %v2453 = vld [vmem:[%s13 + $0x110] sm:$0xff]
    %v2454 = vld [vmem:[%s13 + $0x118] sm:$0xff]
    %v2455 = vld [vmem:[%s13 + $0x120] sm:$0xff]
    %v2456 = vld [vmem:[%s13 + $0x128] sm:$0xff]
    %v2457 = vld [vmem:[%s13 + $0x130] sm:$0xff]
    %v2458 = vld [vmem:[%s13 + $0x138] sm:$0xff]
    %v2459 = vld [vmem:[%s13 + $0x140] sm:$0xff]
    %v2460 = vld [vmem:[%s13 + $0x148] sm:$0xff]
    %v2461 = vld [vmem:[%s13 + $0x150] sm:$0xff]
    %v2462 = vld [vmem:[%s13 + $0x158] sm:$0xff]
    %v2463 = vld [vmem:[%s13 + $0x160] sm:$0xff]
    %v2464 = vld [vmem:[%s13 + $0x168] sm:$0xff]
    %v2465 = vld [vmem:[%s13 + $0x170] sm:$0xff]
    %v2466 = vld [vmem:[%s13 + $0x178] sm:$0xff]
    %v2467 = vld [vmem:[%s13 + $0x180] sm:$0xff]
    %v2468 = vld [vmem:[%s13 + $0x188] sm:$0xff]
    %v2469 = vld [vmem:[%s13 + $0x190] sm:$0xff]
    %v2470 = vld [vmem:[%s13 + $0x198] sm:$0xff]
    %v2471 = vld [vmem:[%s13 + $0x1a0] sm:$0xff]
    %v2472 = vld [vmem:[%s13 + $0x1a8] sm:$0xff]
    %v2473 = vld [vmem:[%s13 + $0x1b0] sm:$0xff]
    %v2474 = vld [vmem:[%s13 + $0x1b8] sm:$0xff]
    %v2475 = vld [vmem:[%s13 + $0x1c0] sm:$0xff]
    %v2476 = vld [vmem:[%s13 + $0x1c8] sm:$0xff]
    %v2477 = vld [vmem:[%s13 + $0x1d0] sm:$0xff]
    %v2478 = vld [vmem:[%s13 + $0x1d8] sm:$0xff]
    %v2479 = vld [vmem:[%s13 + $0x1e0] sm:$0xff]
    %v2480 = vld [vmem:[%s13 + $0x1e8] sm:$0xff]
    %v2481 = vld [vmem:[%s13 + $0x1f0] sm:$0xff]
    %v2482 = vld [vmem:[%s13 + $0x1f8] sm:$0xff]
    %v2483 = vld [vmem:[%s13 + $0x200] sm:$0xff]
    %v2484 = vld [vmem:[%s13 + $0x208] sm:$0xff]
    %v2485 = vld [vmem:[%s13 + $0x210] sm:$0xff]
    %v2486 = vld [vmem:[%s13 + $0x218] sm:$0xff]
    %v2487 = vld [vmem:[%s13 + $0x220] sm:$0xff]
    %v2488 = vld [vmem:[%s13 + $0x228] sm:$0xff]
    %v2489 = vld [vmem:[%s13 + $0x230] sm:$0xff]
    %v2490 = vld [vmem:[%s13 + $0x238] sm:$0xff]
    %v2491 = vld [vmem:[%s13 + $0x240] sm:$0xff]
    %v2492 = vld [vmem:[%s13 + $0x248] sm:$0xff]
    %v2493 = vld [vmem:[%s13 + $0x250] sm:$0xff]
    %v2494 = vld [vmem:[%s13 + $0x258] sm:$0xff]
    %v2495 = vld [vmem:[%s13 + $0x260] sm:$0xff]
    %v2496 = vld [vmem:[%s13 + $0x268] sm:$0xff]
    %v2497 = vld [vmem:[%s13 + $0x270] sm:$0xff]
    %v2498 = vld [vmem:[%s13 + $0x278] sm:$0xff]
    %v2499 = vld [vmem:[%s13 + $0x280] sm:$0xff]
    %v2500 = vld [vmem:[%s13 + $0x288] sm:$0xff]
    %v2501 = vld [vmem:[%s13 + $0x290] sm:$0xff]
    %v2502 = vld [vmem:[%s13 + $0x298] sm:$0xff]
    %v2503 = vld [vmem:[%s13 + $0x2a0] sm:$0xff]
    %v2504 = vld [vmem:[%s13 + $0x2a8] sm:$0xff]
    %v2505 = vld [vmem:[%s13 + $0x2b0] sm:$0xff]
    %v2506 = vld [vmem:[%s13 + $0x2b8] sm:$0xff]
    %v2507 = vld [vmem:[%s13 + $0x2c0] sm:$0xff]
    %v2508 = vld [vmem:[%s13 + $0x2c8] sm:$0xff]
    %v2509 = vld [vmem:[%s13 + $0x2d0] sm:$0xff]
    %v2510 = vld [vmem:[%s13 + $0x2d8] sm:$0xff]
    %v2511 = vld [vmem:[%s13 + $0x2e0] sm:$0xff]
    %v2512 = vld [vmem:[%s13 + $0x2e8] sm:$0xff]
    %v2513 = vld [vmem:[%s13 + $0x2f0] sm:$0xff]
    %v2514 = vld [vmem:[%s13 + $0x2f8] sm:$0xff]
    %v2515 = vld [vmem:[%s13 + $0x300] sm:$0xff]
    %v2516 = vld [vmem:[%s13 + $0x308] sm:$0xff]
    %v2517 = vld [vmem:[%s13 + $0x310] sm:$0xff]
    %v2518 = vld [vmem:[%s13 + $0x318] sm:$0xff]
    %v2519 = vld [vmem:[%s13 + $0x320] sm:$0xff]
    %v2520 = vld [vmem:[%s13 + $0x328] sm:$0xff]
    %v2521 = vld [vmem:[%s13 + $0x330] sm:$0xff]
    %v2522 = vld [vmem:[%s13 + $0x338] sm:$0xff]
    %v2523 = vld [vmem:[%s13 + $0x340] sm:$0xff]
    %v2524 = vld [vmem:[%s13 + $0x348] sm:$0xff]
    %v2525 = vld [vmem:[%s13 + $0x350] sm:$0xff]
    %v2526 = vld [vmem:[%s13 + $0x358] sm:$0xff]
    %v2527 = vld [vmem:[%s13 + $0x360] sm:$0xff]
    %v2528 = vld [vmem:[%s13 + $0x368] sm:$0xff]
    %v2529 = vld [vmem:[%s13 + $0x370] sm:$0xff]
    %v2530 = vld [vmem:[%s13 + $0x378] sm:$0xff]
    %v2531 = vld [vmem:[%s13 + $0x380] sm:$0xff]
    %v2532 = vld [vmem:[%s13 + $0x388] sm:$0xff]
    %v2533 = vld [vmem:[%s13 + $0x390] sm:$0xff]
    %v2534 = vld [vmem:[%s13 + $0x398] sm:$0xff]
    %v2535 = vld [vmem:[%s13 + $0x3a0] sm:$0xff]
    %v2536 = vld [vmem:[%s13 + $0x3a8] sm:$0xff]
    %v2537 = vld [vmem:[%s13 + $0x3b0] sm:$0xff]
    %v2538 = vld [vmem:[%s13 + $0x3b8] sm:$0xff]
    %v2539 = vld [vmem:[%s13 + $0x3c0] sm:$0xff]
    %v2540 = vld [vmem:[%s13 + $0x3c8] sm:$0xff]
    %v2541 = vld [vmem:[%s13 + $0x3d0] sm:$0xff]
    %v2542 = vld [vmem:[%s13 + $0x3d8] sm:$0xff]
    %v2543 = vld [vmem:[%s13 + $0x3e0] sm:$0xff]
    %v2544 = vld [vmem:[%s13 + $0x3e8] sm:$0xff]
    %v2545 = vld [vmem:[%s13 + $0x3f0] sm:$0xff]
    %v2546 = vld [vmem:[%s13 + $0x3f8] sm:$0xff]
    %v2547 = vld [vmem:[%s13 + $0x400] sm:$0xff]
    %v2548 = vld [vmem:[%s13 + $0x408] sm:$0xff]
    %v2549 = vld [vmem:[%s13 + $0x410] sm:$0xff]
    %v2550 = vld [vmem:[%s13 + $0x418] sm:$0xff]
    %v2551 = vld [vmem:[%s13 + $0x420] sm:$0xff]
    %v2552 = vld [vmem:[%s13 + $0x428] sm:$0xff]
    %v2553 = vld [vmem:[%s13 + $0x430] sm:$0xff]
    %v2554 = vld [vmem:[%s13 + $0x438] sm:$0xff]
    %v2555 = vld [vmem:[%s13 + $0x440] sm:$0xff]
    %v2556 = vld [vmem:[%s13 + $0x448] sm:$0xff]
    %v2557 = vld [vmem:[%s13 + $0x450] sm:$0xff]
    %v2558 = vld [vmem:[%s13 + $0x458] sm:$0xff]
    %v2559 = vld [vmem:[%s13 + $0x460] sm:$0xff]
    %v2560 = vld [vmem:[%s13 + $0x468] sm:$0xff]
    %v2561 = vld [vmem:[%s13 + $0x470] sm:$0xff]
    %v2562 = vld [vmem:[%s13 + $0x478] sm:$0xff]
    %v2563 = vld [vmem:[%s13 + $0x480] sm:$0xff]
    %v2564 = vld [vmem:[%s13 + $0x488] sm:$0xff]
    %v2565 = vld [vmem:[%s13 + $0x490] sm:$0xff]
    %v2566 = vld [vmem:[%s13 + $0x498] sm:$0xff]
    %v2567 = vld [vmem:[%s13 + $0x4a0] sm:$0xff]
    %v2568 = vld [vmem:[%s13 + $0x4a8] sm:$0xff]
    %v2569 = vld [vmem:[%s13 + $0x4b0] sm:$0xff]
    %v2570 = vld [vmem:[%s13 + $0x4b8] sm:$0xff]
    %v2571 = vld [vmem:[%s13 + $0x4c0] sm:$0xff]
    %v2572 = vld [vmem:[%s13 + $0x4c8] sm:$0xff]
    %v2573 = vld [vmem:[%s13 + $0x4d0] sm:$0xff]
    %v2574 = vld [vmem:[%s13 + $0x4d8] sm:$0xff]
    %v2575 = vld [vmem:[%s13 + $0x4e0] sm:$0xff]
    %v2576 = vld [vmem:[%s13 + $0x4e8] sm:$0xff]
    %v2577 = vld [vmem:[%s13 + $0x4f0] sm:$0xff]
    %v2578 = vld [vmem:[%s13 + $0x4f8] sm:$0xff]
    %v2579 = vld [vmem:[%s13 + $0x500] sm:$0xff]
    %v2580 = vld [vmem:[%s13 + $0x508] sm:$0xff]
    %v2581 = vld [vmem:[%s13 + $0x510] sm:$0xff]
    %v2582 = vld [vmem:[%s13 + $0x518] sm:$0xff]
    %v2583 = vld [vmem:[%s13 + $0x520] sm:$0xff]
    %v2584 = vld [vmem:[%s13 + $0x528] sm:$0xff]
    %v2585 = vld [vmem:[%s13 + $0x530] sm:$0xff]
    %v2586 = vld [vmem:[%s13 + $0x538] sm:$0xff]
    %v2587 = vld [vmem:[%s13 + $0x540] sm:$0xff]
    %v2588 = vld [vmem:[%s13 + $0x548] sm:$0xff]
    %v2589 = vld [vmem:[%s13 + $0x550] sm:$0xff]
    %v2590 = vld [vmem:[%s13 + $0x558] sm:$0xff]
    %v2591 = vld [vmem:[%s13 + $0x560] sm:$0xff]
    %v2592 = vld [vmem:[%s13 + $0x568] sm:$0xff]
    %v2593 = vld [vmem:[%s13 + $0x570] sm:$0xff]
    %v2594 = vld [vmem:[%s13 + $0x578] sm:$0xff]
    %v2595 = vld [vmem:[%s13 + $0x580] sm:$0xff]
    %v2596 = vld [vmem:[%s13 + $0x588] sm:$0xff]
    %v2597 = vld [vmem:[%s13 + $0x590] sm:$0xff]
    %v2598 = vld [vmem:[%s13 + $0x598] sm:$0xff]
    %v2599 = vld [vmem:[%s13 + $0x5a0] sm:$0xff]
    %v2600 = vld [vmem:[%s13 + $0x5a8] sm:$0xff]
    %v2601 = vld [vmem:[%s13 + $0x5b0] sm:$0xff]
    %v2602 = vld [vmem:[%s13 + $0x5b8] sm:$0xff]
    %v2603 = vld [vmem:[%s13 + $0x5c0] sm:$0xff]
    %v2604 = vld [vmem:[%s13 + $0x5c8] sm:$0xff]
    %v2605 = vld [vmem:[%s13 + $0x5d0] sm:$0xff]
    %v2606 = vld [vmem:[%s13 + $0x5d8] sm:$0xff]
    %v2607 = vld [vmem:[%s13 + $0x5e0] sm:$0xff]
    %v2608 = vld [vmem:[%s13 + $0x5e8] sm:$0xff]
    %v2609 = vld [vmem:[%s13 + $0x5f0] sm:$0xff]
    %v2610 = vld [vmem:[%s13 + $0x5f8] sm:$0xff]
    %v2611 = vld [vmem:[%s13 + $0x600] sm:$0xff]
    %v2612 = vld [vmem:[%s13 + $0x608] sm:$0xff]
    %v2613 = vld [vmem:[%s13 + $0x610] sm:$0xff]
    %v2614 = vld [vmem:[%s13 + $0x618] sm:$0xff]
    %v2615 = vld [vmem:[%s13 + $0x620] sm:$0xff]
    %v2616 = vld [vmem:[%s13 + $0x628] sm:$0xff]
    %v2617 = vld [vmem:[%s13 + $0x630] sm:$0xff]
    %v2618 = vld [vmem:[%s13 + $0x638] sm:$0xff]
    %v2619 = vld [vmem:[%s13 + $0x640] sm:$0xff]
    %v2620 = vld [vmem:[%s13 + $0x648] sm:$0xff]
    %v2621 = vld [vmem:[%s13 + $0x650] sm:$0xff]
    %v2622 = vld [vmem:[%s13 + $0x658] sm:$0xff]
    %v2623 = vld [vmem:[%s13 + $0x660] sm:$0xff]
    %v2624 = vld [vmem:[%s13 + $0x668] sm:$0xff]
    %v2625 = vld [vmem:[%s13 + $0x670] sm:$0xff]
    %v2626 = vld [vmem:[%s13 + $0x678] sm:$0xff]
    %v2627 = vld [vmem:[%s13 + $0x680] sm:$0xff]
    %v2628 = vld [vmem:[%s13 + $0x688] sm:$0xff]
    %v2629 = vld [vmem:[%s13 + $0x690] sm:$0xff]
    %v2630 = vld [vmem:[%s13 + $0x698] sm:$0xff]
    %v2631 = vld [vmem:[%s13 + $0x6a0] sm:$0xff]
    %v2632 = vld [vmem:[%s13 + $0x6a8] sm:$0xff]
    %v2633 = vld [vmem:[%s13 + $0x6b0] sm:$0xff]
    %v2634 = vld [vmem:[%s13 + $0x6b8] sm:$0xff]
    %v2635 = vld [vmem:[%s13 + $0x6c0] sm:$0xff]
    %v2636 = vld [vmem:[%s13 + $0x6c8] sm:$0xff]
    %v2637 = vld [vmem:[%s13 + $0x6d0] sm:$0xff]
    %v2638 = vld [vmem:[%s13 + $0x6d8] sm:$0xff]
    %v2639 = vld [vmem:[%s13 + $0x6e0] sm:$0xff]
    %v2640 = vld [vmem:[%s13 + $0x6e8] sm:$0xff]
    %v2641 = vld [vmem:[%s13 + $0x6f0] sm:$0xff]
    %v2642 = vld [vmem:[%s13 + $0x6f8] sm:$0xff]
    %v2643 = vld [vmem:[%s13 + $0x700] sm:$0xff]
    %v2644 = vld [vmem:[%s13 + $0x708] sm:$0xff]
    %v2645 = vld [vmem:[%s13 + $0x710] sm:$0xff]
    %v2646 = vld [vmem:[%s13 + $0x718] sm:$0xff]
    %v2647 = vld [vmem:[%s13 + $0x720] sm:$0xff]
    %v2648 = vld [vmem:[%s13 + $0x728] sm:$0xff]
    %v2649 = vld [vmem:[%s13 + $0x730] sm:$0xff]
    %v2650 = vld [vmem:[%s13 + $0x738] sm:$0xff]
    %v2651 = vld [vmem:[%s13 + $0x740] sm:$0xff]
    %v2652 = vld [vmem:[%s13 + $0x748] sm:$0xff]
    %v2653 = vld [vmem:[%s13 + $0x750] sm:$0xff]
    %v2654 = vld [vmem:[%s13 + $0x758] sm:$0xff]
    %v2655 = vld [vmem:[%s13 + $0x760] sm:$0xff]
    %v2656 = vld [vmem:[%s13 + $0x768] sm:$0xff]
    %v2657 = vld [vmem:[%s13 + $0x770] sm:$0xff]
    %v2658 = vld [vmem:[%s13 + $0x778] sm:$0xff]
    %v2659 = vld [vmem:[%s13 + $0x780] sm:$0xff]
    %v2660 = vld [vmem:[%s13 + $0x788] sm:$0xff]
    %v2661 = vld [vmem:[%s13 + $0x790] sm:$0xff]
    %v2662 = vld [vmem:[%s13 + $0x798] sm:$0xff]
    %v2663 = vld [vmem:[%s13 + $0x7a0] sm:$0xff]
    %v2664 = vld [vmem:[%s13 + $0x7a8] sm:$0xff]
    %v2665 = vld [vmem:[%s13 + $0x7b0] sm:$0xff]
    %v2666 = vld [vmem:[%s13 + $0x7b8] sm:$0xff]
    %v2667 = vld [vmem:[%s13 + $0x7c0] sm:$0xff]
    %v2668 = vld [vmem:[%s13 + $0x7c8] sm:$0xff]
    %v2669 = vld [vmem:[%s13 + $0x7d0] sm:$0xff]
    %v2670 = vld [vmem:[%s13 + $0x7d8] sm:$0xff]
    %v2671 = vld [vmem:[%s13 + $0x7e0] sm:$0xff]
    %v2672 = vld [vmem:[%s13 + $0x7e8] sm:$0xff]
    %v2673 = vld [vmem:[%s13 + $0x7f0] sm:$0xff]
    %v2674 = vld [vmem:[%s13 + $0x7f8] sm:$0xff]
    %2675 = vmatprep.subr.mxu0 %v2420
    %2676 = vmatpush1.msra.mxu0 %v2419
    %2677 = vmatprep.subr.mxu0 %v2436
    %2678 = vmatpush1.msra.mxu0 %v2435
    %2679 = vmatprep.subr.mxu0 %v2452
    %2680 = vmatpush1.msra.mxu0 %v2451
    %2681 = vmatprep.subr.mxu0 %v2468
    %2682 = vmatpush1.msra.mxu0 %v2467
    %2683 = vmatprep.subr.mxu0 %v2484
    %2684 = vmatpush1.msra.mxu0 %v2483
    %2685 = vmatprep.subr.mxu0 %v2500
    %2686 = vmatpush1.msra.mxu0 %v2499
    %2687 = vmatprep.subr.mxu0 %v2516
    %2688 = vmatpush1.msra.mxu0 %v2515
    %2689 = vmatprep.subr.mxu0 %v2532
    %2690 = vmatpush1.msra.mxu0 %v2531
    %2691 = vmatprep.subr.mxu0 %v2548
    %2692 = vmatpush1.msra.mxu0 %v2547
    %2693 = vmatprep.subr.mxu0 %v2564
    %2694 = vmatpush1.msra.mxu0 %v2563
    %2695 = vmatprep.subr.mxu0 %v2580
    %2696 = vmatpush1.msra.mxu0 %v2579
    %2697 = vmatprep.subr.mxu0 %v2596
    %2698 = vmatpush1.msra.mxu0 %v2595
    %2699 = vmatprep.subr.mxu0 %v2612
    %2700 = vmatpush1.msra.mxu0 %v2611
    %2701 = vmatprep.subr.mxu0 %v2628
    %2702 = vmatpush1.msra.mxu0 %v2627
    %2703 = vmatprep.subr.mxu0 %v2644
    %2704 = vmatpush1.msra.mxu0 %v2643
    %2705 = vmatprep.subr.mxu0 %v2660
    %2706 = vmatpush1.msra.mxu0 %v2659
    %2707 = vmatprep.subr.mxu0 0.0
    %2708 = vmatpush1.msra.mxu0 0.0
    %2709 = vmatprep.subr.mxu0 0.0
    %2710 = vmatpush1.msra.mxu0 0.0
    %2711 = vmatprep.subr.mxu0 0.0
    %2712 = vmatpush1.msra.mxu0 0.0
    %2713 = vmatprep.subr.mxu0 0.0
    %2714 = vmatpush1.msra.mxu0 0.0
    %2715 = vmatprep.subr.mxu0 0.0
    %2716 = vmatpush1.msra.mxu0 0.0
    %2717 = vmatprep.subr.mxu0 0.0
    %2718 = vmatpush1.msra.mxu0 0.0
    %2719 = vmatprep.subr.mxu0 0.0
    %2720 = vmatpush1.msra.mxu0 0.0
    %2721 = vmatprep.subr.mxu0 0.0
    %2722 = vmatpush1.msra.mxu0 0.0
    %2723 = vmatprep.subr.mxu0 0.0
    %2724 = vmatpush1.msra.mxu0 0.0
    %2725 = vmatprep.subr.mxu0 0.0
    %2726 = vmatpush1.msra.mxu0 0.0
    %2727 = vmatprep.subr.mxu0 0.0
    %2728 = vmatpush1.msra.mxu0 0.0
    %2729 = vmatprep.subr.mxu0 0.0
    %2730 = vmatpush1.msra.mxu0 0.0
    %2731 = vmatprep.subr.mxu0 0.0
    %2732 = vmatpush1.msra.mxu0 0.0
    %2733 = vmatprep.subr.mxu0 0.0
    %2734 = vmatpush1.msra.mxu0 0.0
    %2735 = vmatprep.subr.mxu0 0.0
    %2736 = vmatpush1.msra.mxu0 0.0
    %2737 = vmatprep.subr.mxu0 0.0
    %2738 = vmatpush1.msra.mxu0 0.0
    %2739 = vmatprep.mubr.f32.mxu0 0.0
    %2740 = vmatmul.mubr.f32.gmra.mrb[0].mxu0 %v2417
    %v2741 = vpop.f32.mrb[0].mxu0
    %v2742 = vadd.f32 0.0, %v2741
    %v2743 = vpop.f32.mrb[0].mxu0
    %v2744 = vadd.f32 0.0, %v2743
    %2745 = vmatprep.mubr.f32.mxu0 0.0
    %2746 = vmatmul.mubr.f32.gmra.mrb[0].mxu0 %v2418
    %v2747 = vpop.f32.mrb[0].mxu0
    %v2748 = vadd.f32 0.0, %v2747
    %v2749 = vpop.f32.mrb[0].mxu0
    %v2750 = vadd.f32 0.0, %v2749
    %2751 = vdwg.mxu0
    %2752 = vmatprep.subr.mxu0 %v2422
    %2753 = vmatpush1.msra.mxu0 %v2421
    %2754 = vmatprep.subr.mxu0 %v2438
    %2755 = vmatpush1.msra.mxu0 %v2437
    %2756 = vmatprep.subr.mxu0 %v2454
    %2757 = vmatpush1.msra.mxu0 %v2453
    %2758 = vmatprep.subr.mxu0 %v2470
    %2759 = vmatpush1.msra.mxu0 %v2469
    %2760 = vmatprep.subr.mxu0 %v2486
    %2761 = vmatpush1.msra.mxu0 %v2485
    %2762 = vmatprep.subr.mxu0 %v2502
    %2763 = vmatpush1.msra.mxu0 %v2501
    %2764 = vmatprep.subr.mxu0 %v2518
    %2765 = vmatpush1.msra.mxu0 %v2517
    %2766 = vmatprep.subr.mxu0 %v2534
    %2767 = vmatpush1.msra.mxu0 %v2533
    %2768 = vmatprep.subr.mxu0 %v2550
    %2769 = vmatpush1.msra.mxu0 %v2549
    %2770 = vmatprep.subr.mxu0 %v2566
    %2771 = vmatpush1.msra.mxu0 %v2565
    %2772 = vmatprep.subr.mxu0 %v2582
    %2773 = vmatpush1.msra.mxu0 %v2581
    %2774 = vmatprep.subr.mxu0 %v2598
    %2775 = vmatpush1.msra.mxu0 %v2597
    %2776 = vmatprep.subr.mxu0 %v2614
    %2777 = vmatpush1.msra.mxu0 %v2613
    %2778 = vmatprep.subr.mxu0 %v2630
    %2779 = vmatpush1.msra.mxu0 %v2629
    %2780 = vmatprep.subr.mxu0 %v2646
    %2781 = vmatpush1.msra.mxu0 %v2645
    %2782 = vmatprep.subr.mxu0 %v2662
    %2783 = vmatpush1.msra.mxu0 %v2661
    %2784 = vmatprep.subr.mxu0 0.0
    %2785 = vmatpush1.msra.mxu0 0.0
    %2786 = vmatprep.subr.mxu0 0.0
    %2787 = vmatpush1.msra.mxu0 0.0
    %2788 = vmatprep.subr.mxu0 0.0
    %2789 = vmatpush1.msra.mxu0 0.0
    %2790 = vmatprep.subr.mxu0 0.0
    %2791 = vmatpush1.msra.mxu0 0.0
    %2792 = vmatprep.subr.mxu0 0.0
    %2793 = vmatpush1.msra.mxu0 0.0
    %2794 = vmatprep.subr.mxu0 0.0
    %2795 = vmatpush1.msra.mxu0 0.0
    %2796 = vmatprep.subr.mxu0 0.0
    %2797 = vmatpush1.msra.mxu0 0.0
    %2798 = vmatprep.subr.mxu0 0.0
    %2799 = vmatpush1.msra.mxu0 0.0
    %2800 = vmatprep.subr.mxu0 0.0
    %2801 = vmatpush1.msra.mxu0 0.0
    %2802 = vmatprep.subr.mxu0 0.0
    %2803 = vmatpush1.msra.mxu0 0.0
    %2804 = vmatprep.subr.mxu0 0.0
    %2805 = vmatpush1.msra.mxu0 0.0
    %2806 = vmatprep.subr.mxu0 0.0
    %2807 = vmatpush1.msra.mxu0 0.0
    %2808 = vmatprep.subr.mxu0 0.0
    %2809 = vmatpush1.msra.mxu0 0.0
    %2810 = vmatprep.subr.mxu0 0.0
    %2811 = vmatpush1.msra.mxu0 0.0
    %2812 = vmatprep.subr.mxu0 0.0
    %2813 = vmatpush1.msra.mxu0 0.0
    %2814 = vmatprep.subr.mxu0 0.0
    %2815 = vmatpush1.msra.mxu0 0.0
    %2816 = vmatprep.mubr.f32.mxu0 0.0
    %2817 = vmatmul.mubr.f32.gmra.mrb[0].mxu0 %v2417
    %v2818 = vpop.f32.mrb[0].mxu0
    %v2819 = vadd.f32 0.0, %v2818
    %v2820 = vpop.f32.mrb[0].mxu0
    %v2821 = vadd.f32 0.0, %v2820
    %2822 = vmatprep.mubr.f32.mxu0 0.0
    %2823 = vmatmul.mubr.f32.gmra.mrb[0].mxu0 %v2418
    %v2824 = vpop.f32.mrb[0].mxu0
    %v2825 = vadd.f32 0.0, %v2824
    %v2826 = vpop.f32.mrb[0].mxu0
    %v2827 = vadd.f32 0.0, %v2826
    %2828 = vdwg.mxu0
    %2829 = vmatprep.subr.mxu0 %v2424
    %2830 = vmatpush1.msra.mxu0 %v2423
    %2831 = vmatprep.subr.mxu0 %v2440
    %2832 = vmatpush1.msra.mxu0 %v2439
    %2833 = vmatprep.subr.mxu0 %v2456
    %2834 = vmatpush1.msra.mxu0 %v2455
    %2835 = vmatprep.subr.mxu0 %v2472
    %2836 = vmatpush1.msra.mxu0 %v2471
    %2837 = vmatprep.subr.mxu0 %v2488
    %2838 = vmatpush1.msra.mxu0 %v2487
    %2839 = vmatprep.subr.mxu0 %v2504
    %2840 = vmatpush1.msra.mxu0 %v2503
    %2841 = vmatprep.subr.mxu0 %v2520
    %2842 = vmatpush1.msra.mxu0 %v2519
    %2843 = vmatprep.subr.mxu0 %v2536
    %2844 = vmatpush1.msra.mxu0 %v2535
    %2845 = vmatprep.subr.mxu0 %v2552
    %2846 = vmatpush1.msra.mxu0 %v2551
    %2847 = vmatprep.subr.mxu0 %v2568
    %2848 = vmatpush1.msra.mxu0 %v2567
    %2849 = vmatprep.subr.mxu0 %v2584
    %2850 = vmatpush1.msra.mxu0 %v2583
    %2851 = vmatprep.subr.mxu0 %v2600
    %2852 = vmatpush1.msra.mxu0 %v2599
    %2853 = vmatprep.subr.mxu0 %v2616
    %2854 = vmatpush1.msra.mxu0 %v2615
    %2855 = vmatprep.subr.mxu0 %v2632
    %2856 = vmatpush1.msra.mxu0 %v2631
    %2857 = vmatprep.subr.mxu0 %v2648
    %2858 = vmatpush1.msra.mxu0 %v2647
    %2859 = vmatprep.subr.mxu0 %v2664
    %2860 = vmatpush1.msra.mxu0 %v2663
    %2861 = vmatprep.subr.mxu0 0.0
    %2862 = vmatpush1.msra.mxu0 0.0
    %2863 = vmatprep.subr.mxu0 0.0
    %2864 = vmatpush1.msra.mxu0 0.0
    %2865 = vmatprep.subr.mxu0 0.0
    %2866 = vmatpush1.msra.mxu0 0.0
    %2867 = vmatprep.subr.mxu0 0.0
    %2868 = vmatpush1.msra.mxu0 0.0
    %2869 = vmatprep.subr.mxu0 0.0
    %2870 = vmatpush1.msra.mxu0 0.0
    %2871 = vmatprep.subr.mxu0 0.0
    %2872 = vmatpush1.msra.mxu0 0.0
    %2873 = vmatprep.subr.mxu0 0.0
    %2874 = vmatpush1.msra.mxu0 0.0
    %2875 = vmatprep.subr.mxu0 0.0
    %2876 = vmatpush1.msra.mxu0 0.0
    %2877 = vmatprep.subr.mxu0 0.0
    %2878 = vmatpush1.msra.mxu0 0.0
    %2879 = vmatprep.subr.mxu0 0.0
    %2880 = vmatpush1.msra.mxu0 0.0
    %2881 = vmatprep.subr.mxu0 0.0
    %2882 = vmatpush1.msra.mxu0 0.0
    %2883 = vmatprep.subr.mxu0 0.0
    %2884 = vmatpush1.msra.mxu0 0.0
    %2885 = vmatprep.subr.mxu0 0.0
    %2886 = vmatpush1.msra.mxu0 0.0
    %2887 = vmatprep.subr.mxu0 0.0
    %2888 = vmatpush1.msra.mxu0 0.0
    %2889 = vmatprep.subr.mxu0 0.0
    %2890 = vmatpush1.msra.mxu0 0.0
    %2891 = vmatprep.subr.mxu0 0.0
    %2892 = vmatpush1.msra.mxu0 0.0
    %2893 = vmatprep.mubr.f32.mxu0 0.0
    %2894 = vmatmul.mubr.f32.gmra.mrb[0].mxu0 %v2417
    %v2895 = vpop.f32.mrb[0].mxu0
    %v2896 = vadd.f32 0.0, %v2895
    %v2897 = vpop.f32.mrb[0].mxu0
    %v2898 = vadd.f32 0.0, %v2897
    %2899 = vmatprep.mubr.f32.mxu0 0.0
    %2900 = vmatmul.mubr.f32.gmra.mrb[0].mxu0 %v2418
    %v2901 = vpop.f32.mrb[0].mxu0
    %v2902 = vadd.f32 0.0, %v2901
    %v2903 = vpop.f32.mrb[0].mxu0
    %v2904 = vadd.f32 0.0, %v2903
    %2905 = vdwg.mxu0
    %2906 = vmatprep.subr.mxu0 %v2426
    %2907 = vmatpush1.msra.mxu0 %v2425
    %2908 = vmatprep.subr.mxu0 %v2442
    %2909 = vmatpush1.msra.mxu0 %v2441
    %2910 = vmatprep.subr.mxu0 %v2458
    %2911 = vmatpush1.msra.mxu0 %v2457
    %2912 = vmatprep.subr.mxu0 %v2474
    %2913 = vmatpush1.msra.mxu0 %v2473
    %2914 = vmatprep.subr.mxu0 %v2490
    %2915 = vmatpush1.msra.mxu0 %v2489
    %2916 = vmatprep.subr.mxu0 %v2506
    %2917 = vmatpush1.msra.mxu0 %v2505
    %2918 = vmatprep.subr.mxu0 %v2522
    %2919 = vmatpush1.msra.mxu0 %v2521
    %2920 = vmatprep.subr.mxu0 %v2538
    %2921 = vmatpush1.msra.mxu0 %v2537
    %2922 = vmatprep.subr.mxu0 %v2554
    %2923 = vmatpush1.msra.mxu0 %v2553
    %2924 = vmatprep.subr.mxu0 %v2570
    %2925 = vmatpush1.msra.mxu0 %v2569
    %2926 = vmatprep.subr.mxu0 %v2586
    %2927 = vmatpush1.msra.mxu0 %v2585
    %2928 = vmatprep.subr.mxu0 %v2602
    %2929 = vmatpush1.msra.mxu0 %v2601
    %2930 = vmatprep.subr.mxu0 %v2618
    %2931 = vmatpush1.msra.mxu0 %v2617
    %2932 = vmatprep.subr.mxu0 %v2634
    %2933 = vmatpush1.msra.mxu0 %v2633
    %2934 = vmatprep.subr.mxu0 %v2650
    %2935 = vmatpush1.msra.mxu0 %v2649
    %2936 = vmatprep.subr.mxu0 %v2666
    %2937 = vmatpush1.msra.mxu0 %v2665
    %2938 = vmatprep.subr.mxu0 0.0
    %2939 = vmatpush1.msra.mxu0 0.0
    %2940 = vmatprep.subr.mxu0 0.0
    %2941 = vmatpush1.msra.mxu0 0.0
    %2942 = vmatprep.subr.mxu0 0.0
    %2943 = vmatpush1.msra.mxu0 0.0
    %2944 = vmatprep.subr.mxu0 0.0
    %2945 = vmatpush1.msra.mxu0 0.0
    %2946 = vmatprep.subr.mxu0 0.0
    %2947 = vmatpush1.msra.mxu0 0.0
    %2948 = vmatprep.subr.mxu0 0.0
    %2949 = vmatpush1.msra.mxu0 0.0
    %2950 = vmatprep.subr.mxu0 0.0
    %2951 = vmatpush1.msra.mxu0 0.0
    %2952 = vmatprep.subr.mxu0 0.0
    %2953 = vmatpush1.msra.mxu0 0.0
    %2954 = vmatprep.subr.mxu0 0.0
    %2955 = vmatpush1.msra.mxu0 0.0
    %2956 = vmatprep.subr.mxu0 0.0
    %2957 = vmatpush1.msra.mxu0 0.0
    %2958 = vmatprep.subr.mxu0 0.0
    %2959 = vmatpush1.msra.mxu0 0.0
    %2960 = vmatprep.subr.mxu0 0.0
    %2961 = vmatpush1.msra.mxu0 0.0
    %2962 = vmatprep.subr.mxu0 0.0
    %2963 = vmatpush1.msra.mxu0 0.0
    %2964 = vmatprep.subr.mxu0 0.0
    %2965 = vmatpush1.msra.mxu0 0.0
    %2966 = vmatprep.subr.mxu0 0.0
    %2967 = vmatpush1.msra.mxu0 0.0
    %2968 = vmatprep.subr.mxu0 0.0
    %2969 = vmatpush1.msra.mxu0 0.0
    %2970 = vmatprep.mubr.f32.mxu0 0.0
    %2971 = vmatmul.mubr.f32.gmra.mrb[0].mxu0 %v2417
    %v2972 = vpop.f32.mrb[0].mxu0
    %v2973 = vadd.f32 0.0, %v2972
    %v2974 = vpop.f32.mrb[0].mxu0
    %v2975 = vadd.f32 0.0, %v2974
    %2976 = vmatprep.mubr.f32.mxu0 0.0
    %2977 = vmatmul.mubr.f32.gmra.mrb[0].mxu0 %v2418
    %v2978 = vpop.f32.mrb[0].mxu0
    %v2979 = vadd.f32 0.0, %v2978
    %v2980 = vpop.f32.mrb[0].mxu0
    %v2981 = vadd.f32 0.0, %v2980
    %2982 = vdwg.mxu0
    %2983 = vmatprep.subr.mxu0 %v2428
    %2984 = vmatpush1.msra.mxu0 %v2427
    %2985 = vmatprep.subr.mxu0 %v2444
    %2986 = vmatpush1.msra.mxu0 %v2443
    %2987 = vmatprep.subr.mxu0 %v2460
    %2988 = vmatpush1.msra.mxu0 %v2459
    %2989 = vmatprep.subr.mxu0 %v2476
    %2990 = vmatpush1.msra.mxu0 %v2475
    %2991 = vmatprep.subr.mxu0 %v2492
    %2992 = vmatpush1.msra.mxu0 %v2491
    %2993 = vmatprep.subr.mxu0 %v2508
    %2994 = vmatpush1.msra.mxu0 %v2507
    %2995 = vmatprep.subr.mxu0 %v2524
    %2996 = vmatpush1.msra.mxu0 %v2523
    %2997 = vmatprep.subr.mxu0 %v2540
    %2998 = vmatpush1.msra.mxu0 %v2539
    %2999 = vmatprep.subr.mxu0 %v2556
    %3000 = vmatpush1.msra.mxu0 %v2555
    %3001 = vmatprep.subr.mxu0 %v2572
    %3002 = vmatpush1.msra.mxu0 %v2571
    %3003 = vmatprep.subr.mxu0 %v2588
    %3004 = vmatpush1.msra.mxu0 %v2587
    %3005 = vmatprep.subr.mxu0 %v2604
    %3006 = vmatpush1.msra.mxu0 %v2603
    %3007 = vmatprep.subr.mxu0 %v2620
    %3008 = vmatpush1.msra.mxu0 %v2619
    %3009 = vmatprep.subr.mxu0 %v2636
    %3010 = vmatpush1.msra.mxu0 %v2635
    %3011 = vmatprep.subr.mxu0 %v2652
    %3012 = vmatpush1.msra.mxu0 %v2651
    %3013 = vmatprep.subr.mxu0 %v2668
    %3014 = vmatpush1.msra.mxu0 %v2667
    %3015 = vmatprep.subr.mxu0 0.0
    %3016 = vmatpush1.msra.mxu0 0.0
    %3017 = vmatprep.subr.mxu0 0.0
    %3018 = vmatpush1.msra.mxu0 0.0
    %3019 = vmatprep.subr.mxu0 0.0
    %3020 = vmatpush1.msra.mxu0 0.0
    %3021 = vmatprep.subr.mxu0 0.0
    %3022 = vmatpush1.msra.mxu0 0.0
    %3023 = vmatprep.subr.mxu0 0.0
    %3024 = vmatpush1.msra.mxu0 0.0
    %3025 = vmatprep.subr.mxu0 0.0
    %3026 = vmatpush1.msra.mxu0 0.0
    %3027 = vmatprep.subr.mxu0 0.0
    %3028 = vmatpush1.msra.mxu0 0.0
    %3029 = vmatprep.subr.mxu0 0.0
    %3030 = vmatpush1.msra.mxu0 0.0
    %3031 = vmatprep.subr.mxu0 0.0
    %3032 = vmatpush1.msra.mxu0 0.0
    %3033 = vmatprep.subr.mxu0 0.0
    %3034 = vmatpush1.msra.mxu0 0.0
    %3035 = vmatprep.subr.mxu0 0.0
    %3036 = vmatpush1.msra.mxu0 0.0
    %3037 = vmatprep.subr.mxu0 0.0
    %3038 = vmatpush1.msra.mxu0 0.0
    %3039 = vmatprep.subr.mxu0 0.0
    %3040 = vmatpush1.msra.mxu0 0.0
    %3041 = vmatprep.subr.mxu0 0.0
    %3042 = vmatpush1.msra.mxu0 0.0
    %3043 = vmatprep.subr.mxu0 0.0
    %3044 = vmatpush1.msra.mxu0 0.0
    %3045 = vmatprep.subr.mxu0 0.0
    %3046 = vmatpush1.msra.mxu0 0.0
    %3047 = vmatprep.mubr.f32.mxu0 0.0
    %3048 = vmatmul.mubr.f32.gmra.mrb[0].mxu0 %v2417
    %v3049 = vpop.f32.mrb[0].mxu0
    %v3050 = vadd.f32 0.0, %v3049
    %v3051 = vpop.f32.mrb[0].mxu0
    %v3052 = vadd.f32 0.0, %v3051
    %3053 = vmatprep.mubr.f32.mxu0 0.0
    %3054 = vmatmul.mubr.f32.gmra.mrb[0].mxu0 %v2418
    %v3055 = vpop.f32.mrb[0].mxu0
    %v3056 = vadd.f32 0.0, %v3055
    %v3057 = vpop.f32.mrb[0].mxu0
    %v3058 = vadd.f32 0.0, %v3057
    %3059 = vdwg.mxu0
    %3060 = vmatprep.subr.mxu0 %v2430
    %3061 = vmatpush1.msra.mxu0 %v2429
    %3062 = vmatprep.subr.mxu0 %v2446
    %3063 = vmatpush1.msra.mxu0 %v2445
    %3064 = vmatprep.subr.mxu0 %v2462
    %3065 = vmatpush1.msra.mxu0 %v2461
    %3066 = vmatprep.subr.mxu0 %v2478
    %3067 = vmatpush1.msra.mxu0 %v2477
    %3068 = vmatprep.subr.mxu0 %v2494
    %3069 = vmatpush1.msra.mxu0 %v2493
    %3070 = vmatprep.subr.mxu0 %v2510
    %3071 = vmatpush1.msra.mxu0 %v2509
    %3072 = vmatprep.subr.mxu0 %v2526
    %3073 = vmatpush1.msra.mxu0 %v2525
    %3074 = vmatprep.subr.mxu0 %v2542
    %3075 = vmatpush1.msra.mxu0 %v2541
    %3076 = vmatprep.subr.mxu0 %v2558
    %3077 = vmatpush1.msra.mxu0 %v2557
    %3078 = vmatprep.subr.mxu0 %v2574
    %3079 = vmatpush1.msra.mxu0 %v2573
    %3080 = vmatprep.subr.mxu0 %v2590
    %3081 = vmatpush1.msra.mxu0 %v2589
    %3082 = vmatprep.subr.mxu0 %v2606
    %3083 = vmatpush1.msra.mxu0 %v2605
    %3084 = vmatprep.subr.mxu0 %v2622
    %3085 = vmatpush1.msra.mxu0 %v2621
    %3086 = vmatprep.subr.mxu0 %v2638
    %3087 = vmatpush1.msra.mxu0 %v2637
    %3088 = vmatprep.subr.mxu0 %v2654
    %3089 = vmatpush1.msra.mxu0 %v2653
    %3090 = vmatprep.subr.mxu0 %v2670
    %3091 = vmatpush1.msra.mxu0 %v2669
    %3092 = vmatprep.subr.mxu0 0.0
    %3093 = vmatpush1.msra.mxu0 0.0
    %3094 = vmatprep.subr.mxu0 0.0
    %3095 = vmatpush1.msra.mxu0 0.0
    %3096 = vmatprep.subr.mxu0 0.0
    %3097 = vmatpush1.msra.mxu0 0.0
    %3098 = vmatprep.subr.mxu0 0.0
    %3099 = vmatpush1.msra.mxu0 0.0
    %3100 = vmatprep.subr.mxu0 0.0
    %3101 = vmatpush1.msra.mxu0 0.0
    %3102 = vmatprep.subr.mxu0 0.0
    %3103 = vmatpush1.msra.mxu0 0.0
    %3104 = vmatprep.subr.mxu0 0.0
    %3105 = vmatpush1.msra.mxu0 0.0
    %3106 = vmatprep.subr.mxu0 0.0
    %3107 = vmatpush1.msra.mxu0 0.0
    %3108 = vmatprep.subr.mxu0 0.0
    %3109 = vmatpush1.msra.mxu0 0.0
    %3110 = vmatprep.subr.mxu0 0.0
    %3111 = vmatpush1.msra.mxu0 0.0
    %3112 = vmatprep.subr.mxu0 0.0
    %3113 = vmatpush1.msra.mxu0 0.0
    %3114 = vmatprep.subr.mxu0 0.0
    %3115 = vmatpush1.msra.mxu0 0.0
    %3116 = vmatprep.subr.mxu0 0.0
    %3117 = vmatpush1.msra.mxu0 0.0
    %3118 = vmatprep.subr.mxu0 0.0
    %3119 = vmatpush1.msra.mxu0 0.0
    %3120 = vmatprep.subr.mxu0 0.0
    %3121 = vmatpush1.msra.mxu0 0.0
    %3122 = vmatprep.subr.mxu0 0.0
    %3123 = vmatpush1.msra.mxu0 0.0
    %3124 = vmatprep.mubr.f32.mxu0 0.0
    %3125 = vmatmul.mubr.f32.gmra.mrb[0].mxu0 %v2417
    %v3126 = vpop.f32.mrb[0].mxu0
    %v3127 = vadd.f32 0.0, %v3126
    %v3128 = vpop.f32.mrb[0].mxu0
    %v3129 = vadd.f32 0.0, %v3128
    %3130 = vmatprep.mubr.f32.mxu0 0.0
    %3131 = vmatmul.mubr.f32.gmra.mrb[0].mxu0 %v2418
    %v3132 = vpop.f32.mrb[0].mxu0
    %v3133 = vadd.f32 0.0, %v3132
    %v3134 = vpop.f32.mrb[0].mxu0
    %v3135 = vadd.f32 0.0, %v3134
    %3136 = vdwg.mxu0
    %3137 = vmatprep.subr.mxu0 %v2432
    %3138 = vmatpush1.msra.mxu0 %v2431
    %3139 = vmatprep.subr.mxu0 %v2448
    %3140 = vmatpush1.msra.mxu0 %v2447
    %3141 = vmatprep.subr.mxu0 %v2464
    %3142 = vmatpush1.msra.mxu0 %v2463
    %3143 = vmatprep.subr.mxu0 %v2480
    %3144 = vmatpush1.msra.mxu0 %v2479
    %3145 = vmatprep.subr.mxu0 %v2496
    %3146 = vmatpush1.msra.mxu0 %v2495
    %3147 = vmatprep.subr.mxu0 %v2512
    %3148 = vmatpush1.msra.mxu0 %v2511
    %3149 = vmatprep.subr.mxu0 %v2528
    %3150 = vmatpush1.msra.mxu0 %v2527
    %3151 = vmatprep.subr.mxu0 %v2544
    %3152 = vmatpush1.msra.mxu0 %v2543
    %3153 = vmatprep.subr.mxu0 %v2560
    %3154 = vmatpush1.msra.mxu0 %v2559
    %3155 = vmatprep.subr.mxu0 %v2576
    %3156 = vmatpush1.msra.mxu0 %v2575
    %3157 = vmatprep.subr.mxu0 %v2592
    %3158 = vmatpush1.msra.mxu0 %v2591
    %3159 = vmatprep.subr.mxu0 %v2608
    %3160 = vmatpush1.msra.mxu0 %v2607
    %3161 = vmatprep.subr.mxu0 %v2624
    %3162 = vmatpush1.msra.mxu0 %v2623
    %3163 = vmatprep.subr.mxu0 %v2640
    %3164 = vmatpush1.msra.mxu0 %v2639
    %3165 = vmatprep.subr.mxu0 %v2656
    %3166 = vmatpush1.msra.mxu0 %v2655
    %3167 = vmatprep.subr.mxu0 %v2672
    %3168 = vmatpush1.msra.mxu0 %v2671
    %3169 = vmatprep.subr.mxu0 0.0
    %3170 = vmatpush1.msra.mxu0 0.0
    %3171 = vmatprep.subr.mxu0 0.0
    %3172 = vmatpush1.msra.mxu0 0.0
    %3173 = vmatprep.subr.mxu0 0.0
    %3174 = vmatpush1.msra.mxu0 0.0
    %3175 = vmatprep.subr.mxu0 0.0
    %3176 = vmatpush1.msra.mxu0 0.0
    %3177 = vmatprep.subr.mxu0 0.0
    %3178 = vmatpush1.msra.mxu0 0.0
    %3179 = vmatprep.subr.mxu0 0.0
    %3180 = vmatpush1.msra.mxu0 0.0
    %3181 = vmatprep.subr.mxu0 0.0
    %3182 = vmatpush1.msra.mxu0 0.0
    %3183 = vmatprep.subr.mxu0 0.0
    %3184 = vmatpush1.msra.mxu0 0.0
    %3185 = vmatprep.subr.mxu0 0.0
    %3186 = vmatpush1.msra.mxu0 0.0
    %3187 = vmatprep.subr.mxu0 0.0
    %3188 = vmatpush1.msra.mxu0 0.0
    %3189 = vmatprep.subr.mxu0 0.0
    %3190 = vmatpush1.msra.mxu0 0.0
    %3191 = vmatprep.subr.mxu0 0.0
    %3192 = vmatpush1.msra.mxu0 0.0
    %3193 = vmatprep.subr.mxu0 0.0
    %3194 = vmatpush1.msra.mxu0 0.0
    %3195 = vmatprep.subr.mxu0 0.0
    %3196 = vmatpush1.msra.mxu0 0.0
    %3197 = vmatprep.subr.mxu0 0.0
    %3198 = vmatpush1.msra.mxu0 0.0
    %3199 = vmatprep.subr.mxu0 0.0
    %3200 = vmatpush1.msra.mxu0 0.0
    %3201 = vmatprep.mubr.f32.mxu0 0.0
    %3202 = vmatmul.mubr.f32.gmra.mrb[0].mxu0 %v2417
    %v3203 = vpop.f32.mrb[0].mxu0
    %v3204 = vadd.f32 0.0, %v3203
    %v3205 = vpop.f32.mrb[0].mxu0
    %v3206 = vadd.f32 0.0, %v3205
    %3207 = vmatprep.mubr.f32.mxu0 0.0
    %3208 = vmatmul.mubr.f32.gmra.mrb[0].mxu0 %v2418
    %v3209 = vpop.f32.mrb[0].mxu0
    %v3210 = vadd.f32 0.0, %v3209
    %v3211 = vpop.f32.mrb[0].mxu0
    %v3212 = vadd.f32 0.0, %v3211
    %3213 = vdwg.mxu0
    %3214 = vmatprep.subr.mxu0 %v2434
    %3215 = vmatpush1.msra.mxu0 %v2433
    %3216 = vmatprep.subr.mxu0 %v2450
    %3217 = vmatpush1.msra.mxu0 %v2449
    %3218 = vmatprep.subr.mxu0 %v2466
    %3219 = vmatpush1.msra.mxu0 %v2465
    %3220 = vmatprep.subr.mxu0 %v2482
    %3221 = vmatpush1.msra.mxu0 %v2481
    %3222 = vmatprep.subr.mxu0 %v2498
    %3223 = vmatpush1.msra.mxu0 %v2497
    %3224 = vmatprep.subr.mxu0 %v2514
    %3225 = vmatpush1.msra.mxu0 %v2513
    %3226 = vmatprep.subr.mxu0 %v2530
    %3227 = vmatpush1.msra.mxu0 %v2529
    %3228 = vmatprep.subr.mxu0 %v2546
    %3229 = vmatpush1.msra.mxu0 %v2545
    %3230 = vmatprep.subr.mxu0 %v2562
    %3231 = vmatpush1.msra.mxu0 %v2561
    %3232 = vmatprep.subr.mxu0 %v2578
    %3233 = vmatpush1.msra.mxu0 %v2577
    %3234 = vmatprep.subr.mxu0 %v2594
    %3235 = vmatpush1.msra.mxu0 %v2593
    %3236 = vmatprep.subr.mxu0 %v2610
    %3237 = vmatpush1.msra.mxu0 %v2609
    %3238 = vmatprep.subr.mxu0 %v2626
    %3239 = vmatpush1.msra.mxu0 %v2625
    %3240 = vmatprep.subr.mxu0 %v2642
    %3241 = vmatpush1.msra.mxu0 %v2641
    %3242 = vmatprep.subr.mxu0 %v2658
    %3243 = vmatpush1.msra.mxu0 %v2657
    %3244 = vmatprep.subr.mxu0 %v2674
    %3245 = vmatpush1.msra.mxu0 %v2673
    %3246 = vmatprep.subr.mxu0 0.0
    %3247 = vmatpush1.msra.mxu0 0.0
    %3248 = vmatprep.subr.mxu0 0.0
    %3249 = vmatpush1.msra.mxu0 0.0
    %3250 = vmatprep.subr.mxu0 0.0
    %3251 = vmatpush1.msra.mxu0 0.0
    %3252 = vmatprep.subr.mxu0 0.0
    %3253 = vmatpush1.msra.mxu0 0.0
    %3254 = vmatprep.subr.mxu0 0.0
    %3255 = vmatpush1.msra.mxu0 0.0
    %3256 = vmatprep.subr.mxu0 0.0
    %3257 = vmatpush1.msra.mxu0 0.0
    %3258 = vmatprep.subr.mxu0 0.0
    %3259 = vmatpush1.msra.mxu0 0.0
    %3260 = vmatprep.subr.mxu0 0.0
    %3261 = vmatpush1.msra.mxu0 0.0
    %3262 = vmatprep.subr.mxu0 0.0
    %3263 = vmatpush1.msra.mxu0 0.0
    %3264 = vmatprep.subr.mxu0 0.0
    %3265 = vmatpush1.msra.mxu0 0.0
    %3266 = vmatprep.subr.mxu0 0.0
    %3267 = vmatpush1.msra.mxu0 0.0
    %3268 = vmatprep.subr.mxu0 0.0
    %3269 = vmatpush1.msra.mxu0 0.0
    %3270 = vmatprep.subr.mxu0 0.0
    %3271 = vmatpush1.msra.mxu0 0.0
    %3272 = vmatprep.subr.mxu0 0.0
    %3273 = vmatpush1.msra.mxu0 0.0
    %3274 = vmatprep.subr.mxu0 0.0
    %3275 = vmatpush1.msra.mxu0 0.0
    %3276 = vmatprep.subr.mxu0 0.0
    %3277 = vmatpush1.msra.mxu0 0.0
    %3278 = vmatprep.mubr.f32.mxu0 0.0
    %3279 = vmatmul.mubr.f32.gmra.mrb[0].mxu0 %v2417
    %v3280 = vpop.f32.mrb[0].mxu0
    %v3281 = vadd.f32 0.0, %v3280
    %v3282 = vpop.f32.mrb[0].mxu0
    %v3283 = vadd.f32 0.0, %v3282
    %3284 = vmatprep.mubr.f32.mxu0 0.0
    %3285 = vmatmul.mubr.f32.gmra.mrb[0].mxu0 %v2418
    %v3286 = vpop.f32.mrb[0].mxu0
    %v3287 = vadd.f32 0.0, %v3286
    %v3288 = vpop.f32.mrb[0].mxu0
    %v3289 = vadd.f32 0.0, %v3288
    %3290 = vdwg.mxu0
    %v3291 = vld [vmem:[%s12] sm:$0x3]
    %s3292 = scalar_lea.vmem %s12, 2
    %v3293 = vld [vmem:[%s3292] sm:$0x3]
    %v3295 = vsel %vm81, %v3293, 0
    %3297 = vmatprep.subr.mxu0 %v2821
    %3298 = vmatpush1.msra.mxu0 %v2819
    %3299 = vmatprep.subr.mxu0 %v2827
    %3300 = vmatpush1.msra.mxu0 %v2825
    %3301 = vmatprep.subr.mxu0 0.0
    %3302 = vmatpush1.msra.mxu0 0.0
    %3303 = vmatprep.subr.mxu0 0.0
    %3304 = vmatpush1.msra.mxu0 0.0
    %3305 = vmatprep.subr.mxu0 0.0
    %3306 = vmatpush1.msra.mxu0 0.0
    %3307 = vmatprep.subr.mxu0 0.0
    %3308 = vmatpush1.msra.mxu0 0.0
    %3309 = vmatprep.subr.mxu0 0.0
    %3310 = vmatpush1.msra.mxu0 0.0
    %3311 = vmatprep.subr.mxu0 0.0
    %3312 = vmatpush1.msra.mxu0 0.0
    %3313 = vmatprep.subr.mxu0 0.0
    %3314 = vmatpush1.msra.mxu0 0.0
    %3315 = vmatprep.subr.mxu0 0.0
    %3316 = vmatpush1.msra.mxu0 0.0
    %3317 = vmatprep.subr.mxu0 0.0
    %3318 = vmatpush1.msra.mxu0 0.0
    %3319 = vmatprep.subr.mxu0 0.0
    %3320 = vmatpush1.msra.mxu0 0.0
    %3321 = vmatprep.subr.mxu0 0.0
    %3322 = vmatpush1.msra.mxu0 0.0
    %3323 = vmatprep.subr.mxu0 0.0
    %3324 = vmatpush1.msra.mxu0 0.0
    %3325 = vmatprep.subr.mxu0 0.0
    %3326 = vmatpush1.msra.mxu0 0.0
    %3327 = vmatprep.subr.mxu0 0.0
    %3328 = vmatpush1.msra.mxu0 0.0
    %3329 = vmatprep.subr.mxu0 0.0
    %3330 = vmatpush1.msra.mxu0 0.0
    %3331 = vmatprep.subr.mxu0 0.0
    %3332 = vmatpush1.msra.mxu0 0.0
    %3333 = vmatprep.subr.mxu0 0.0
    %3334 = vmatpush1.msra.mxu0 0.0
    %3335 = vmatprep.subr.mxu0 0.0
    %3336 = vmatpush1.msra.mxu0 0.0
    %3337 = vmatprep.subr.mxu0 0.0
    %3338 = vmatpush1.msra.mxu0 0.0
    %3339 = vmatprep.subr.mxu0 0.0
    %3340 = vmatpush1.msra.mxu0 0.0
    %3341 = vmatprep.subr.mxu0 0.0
    %3342 = vmatpush1.msra.mxu0 0.0
    %3343 = vmatprep.subr.mxu0 0.0
    %3344 = vmatpush1.msra.mxu0 0.0
    %3345 = vmatprep.subr.mxu0 0.0
    %3346 = vmatpush1.msra.mxu0 0.0
    %3347 = vmatprep.subr.mxu0 0.0
    %3348 = vmatpush1.msra.mxu0 0.0
    %3349 = vmatprep.subr.mxu0 0.0
    %3350 = vmatpush1.msra.mxu0 0.0
    %3351 = vmatprep.subr.mxu0 0.0
    %3352 = vmatpush1.msra.mxu0 0.0
    %3353 = vmatprep.subr.mxu0 0.0
    %3354 = vmatpush1.msra.mxu0 0.0
    %3355 = vmatprep.subr.mxu0 0.0
    %3356 = vmatpush1.msra.mxu0 0.0
    %3357 = vmatprep.subr.mxu0 0.0
    %3358 = vmatpush1.msra.mxu0 0.0
    %3359 = vmatprep.subr.mxu0 0.0
    %3360 = vmatpush1.msra.mxu0 0.0
    %3361 = vmatprep.mubr.f32.mxu0 0.0
    %3362 = vmatmul.mubr.f32.gmra.mrb[0].mxu0 %v3295
    %v3363 = vpop.f32.mrb[0].mxu0
    %v3364 = vadd.f32 0.0, %v3363
    %v3365 = vpop.f32.mrb[0].mxu0
    %v3366 = vadd.f32 0.0, %v3365
    %3367 = vdwg.mxu0
    %v3369 = vsel %vm81, %v3291, 0
    %3371 = vmatprep.subr.mxu0 %v2744
    %3372 = vmatpush1.msra.mxu0 %v2742
    %3373 = vmatprep.subr.mxu0 %v2750
    %3374 = vmatpush1.msra.mxu0 %v2748
    %3375 = vmatprep.subr.mxu0 0.0
    %3376 = vmatpush1.msra.mxu0 0.0
    %3377 = vmatprep.subr.mxu0 0.0
    %3378 = vmatpush1.msra.mxu0 0.0
    %3379 = vmatprep.subr.mxu0 0.0
    %3380 = vmatpush1.msra.mxu0 0.0
    %3381 = vmatprep.subr.mxu0 0.0
    %3382 = vmatpush1.msra.mxu0 0.0
    %3383 = vmatprep.subr.mxu0 0.0
    %3384 = vmatpush1.msra.mxu0 0.0
    %3385 = vmatprep.subr.mxu0 0.0
    %3386 = vmatpush1.msra.mxu0 0.0
    %3387 = vmatprep.subr.mxu0 0.0
    %3388 = vmatpush1.msra.mxu0 0.0
    %3389 = vmatprep.subr.mxu0 0.0
    %3390 = vmatpush1.msra.mxu0 0.0
    %3391 = vmatprep.subr.mxu0 0.0
    %3392 = vmatpush1.msra.mxu0 0.0
    %3393 = vmatprep.subr.mxu0 0.0
    %3394 = vmatpush1.msra.mxu0 0.0
    %3395 = vmatprep.subr.mxu0 0.0
    %3396 = vmatpush1.msra.mxu0 0.0
    %3397 = vmatprep.subr.mxu0 0.0
    %3398 = vmatpush1.msra.mxu0 0.0
    %3399 = vmatprep.subr.mxu0 0.0
    %3400 = vmatpush1.msra.mxu0 0.0
    %3401 = vmatprep.subr.mxu0 0.0
    %3402 = vmatpush1.msra.mxu0 0.0
    %3403 = vmatprep.subr.mxu0 0.0
    %3404 = vmatpush1.msra.mxu0 0.0
    %3405 = vmatprep.subr.mxu0 0.0
    %3406 = vmatpush1.msra.mxu0 0.0
    %3407 = vmatprep.subr.mxu0 0.0
    %3408 = vmatpush1.msra.mxu0 0.0
    %3409 = vmatprep.subr.mxu0 0.0
    %3410 = vmatpush1.msra.mxu0 0.0
    %3411 = vmatprep.subr.mxu0 0.0
    %3412 = vmatpush1.msra.mxu0 0.0
    %3413 = vmatprep.subr.mxu0 0.0
    %3414 = vmatpush1.msra.mxu0 0.0
    %3415 = vmatprep.subr.mxu0 0.0
    %3416 = vmatpush1.msra.mxu0 0.0
    %3417 = vmatprep.subr.mxu0 0.0
    %3418 = vmatpush1.msra.mxu0 0.0
    %3419 = vmatprep.subr.mxu0 0.0
    %3420 = vmatpush1.msra.mxu0 0.0
    %3421 = vmatprep.subr.mxu0 0.0
    %3422 = vmatpush1.msra.mxu0 0.0
    %3423 = vmatprep.subr.mxu0 0.0
    %3424 = vmatpush1.msra.mxu0 0.0
    %3425 = vmatprep.subr.mxu0 0.0
    %3426 = vmatpush1.msra.mxu0 0.0
    %3427 = vmatprep.subr.mxu0 0.0
    %3428 = vmatpush1.msra.mxu0 0.0
    %3429 = vmatprep.subr.mxu0 0.0
    %3430 = vmatpush1.msra.mxu0 0.0
    %3431 = vmatprep.subr.mxu0 0.0
    %3432 = vmatpush1.msra.mxu0 0.0
    %3433 = vmatprep.subr.mxu0 0.0
    %3434 = vmatpush1.msra.mxu0 0.0
    %3435 = vmatprep.mubr.f32.mxu0 0.0
    %3436 = vmatmul.mubr.f32.gmra.mrb[0].mxu0 %v3369
    %v3437 = vpop.f32.mrb[0].mxu0
    %v3438 = vadd.f32 %v3364, %v3437
    %v3439 = vpop.f32.mrb[0].mxu0
    %v3440 = vadd.f32 %v3366, %v3439
    %3441 = vdwg.mxu0
    %s3442 = scalar_lea.vmem %s12, 4
    %v3443 = vld [vmem:[%s3442] sm:$0x3]
    %v3445 = vsel %vm81, %v3443, 0
    %3447 = vmatprep.subr.mxu0 %v2898
    %3448 = vmatpush1.msra.mxu0 %v2896
    %3449 = vmatprep.subr.mxu0 %v2904
    %3450 = vmatpush1.msra.mxu0 %v2902
    %3451 = vmatprep.subr.mxu0 0.0
    %3452 = vmatpush1.msra.mxu0 0.0
    %3453 = vmatprep.subr.mxu0 0.0
    %3454 = vmatpush1.msra.mxu0 0.0
    %3455 = vmatprep.subr.mxu0 0.0
    %3456 = vmatpush1.msra.mxu0 0.0
    %3457 = vmatprep.subr.mxu0 0.0
    %3458 = vmatpush1.msra.mxu0 0.0
    %3459 = vmatprep.subr.mxu0 0.0
    %3460 = vmatpush1.msra.mxu0 0.0
    %3461 = vmatprep.subr.mxu0 0.0
    %3462 = vmatpush1.msra.mxu0 0.0
    %3463 = vmatprep.subr.mxu0 0.0
    %3464 = vmatpush1.msra.mxu0 0.0
    %3465 = vmatprep.subr.mxu0 0.0
    %3466 = vmatpush1.msra.mxu0 0.0
    %3467 = vmatprep.subr.mxu0 0.0
    %3468 = vmatpush1.msra.mxu0 0.0
    %3469 = vmatprep.subr.mxu0 0.0
    %3470 = vmatpush1.msra.mxu0 0.0
    %3471 = vmatprep.subr.mxu0 0.0
    %3472 = vmatpush1.msra.mxu0 0.0
    %3473 = vmatprep.subr.mxu0 0.0
    %3474 = vmatpush1.msra.mxu0 0.0
    %3475 = vmatprep.subr.mxu0 0.0
    %3476 = vmatpush1.msra.mxu0 0.0
    %3477 = vmatprep.subr.mxu0 0.0
    %3478 = vmatpush1.msra.mxu0 0.0
    %3479 = vmatprep.subr.mxu0 0.0
    %3480 = vmatpush1.msra.mxu0 0.0
    %3481 = vmatprep.subr.mxu0 0.0
    %3482 = vmatpush1.msra.mxu0 0.0
    %3483 = vmatprep.subr.mxu0 0.0
    %3484 = vmatpush1.msra.mxu0 0.0
    %3485 = vmatprep.subr.mxu0 0.0
    %3486 = vmatpush1.msra.mxu0 0.0
    %3487 = vmatprep.subr.mxu0 0.0
    %3488 = vmatpush1.msra.mxu0 0.0
    %3489 = vmatprep.subr.mxu0 0.0
    %3490 = vmatpush1.msra.mxu0 0.0
    %3491 = vmatprep.subr.mxu0 0.0
    %3492 = vmatpush1.msra.mxu0 0.0
    %3493 = vmatprep.subr.mxu0 0.0
    %3494 = vmatpush1.msra.mxu0 0.0
    %3495 = vmatprep.subr.mxu0 0.0
    %3496 = vmatpush1.msra.mxu0 0.0
    %3497 = vmatprep.subr.mxu0 0.0
    %3498 = vmatpush1.msra.mxu0 0.0
    %3499 = vmatprep.subr.mxu0 0.0
    %3500 = vmatpush1.msra.mxu0 0.0
    %3501 = vmatprep.subr.mxu0 0.0
    %3502 = vmatpush1.msra.mxu0 0.0
    %3503 = vmatprep.subr.mxu0 0.0
    %3504 = vmatpush1.msra.mxu0 0.0
    %3505 = vmatprep.subr.mxu0 0.0
    %3506 = vmatpush1.msra.mxu0 0.0
    %3507 = vmatprep.subr.mxu0 0.0
    %3508 = vmatpush1.msra.mxu0 0.0
    %3509 = vmatprep.subr.mxu0 0.0
    %3510 = vmatpush1.msra.mxu0 0.0
    %3511 = vmatprep.mubr.f32.mxu0 0.0
    %3512 = vmatmul.mubr.f32.gmra.mrb[0].mxu0 %v3445
    %v3513 = vpop.f32.mrb[0].mxu0
    %v3514 = vadd.f32 0.0, %v3513
    %v3515 = vpop.f32.mrb[0].mxu0
    %v3516 = vadd.f32 0.0, %v3515
    %3517 = vdwg.mxu0
    %v3518 = vadd.f32 %v3438, %v3514
    %v3519 = vadd.f32 %v3440, %v3516
    %s3520 = scalar_lea.vmem %s12, 6
    %v3521 = vld [vmem:[%s3520] sm:$0x3]
    %v3523 = vsel %vm81, %v3521, 0
    %3525 = vmatprep.subr.mxu0 %v2975
    %3526 = vmatpush1.msra.mxu0 %v2973
    %3527 = vmatprep.subr.mxu0 %v2981
    %3528 = vmatpush1.msra.mxu0 %v2979
    %3529 = vmatprep.subr.mxu0 0.0
    %3530 = vmatpush1.msra.mxu0 0.0
    %3531 = vmatprep.subr.mxu0 0.0
    %3532 = vmatpush1.msra.mxu0 0.0
    %3533 = vmatprep.subr.mxu0 0.0
    %3534 = vmatpush1.msra.mxu0 0.0
    %3535 = vmatprep.subr.mxu0 0.0
    %3536 = vmatpush1.msra.mxu0 0.0
    %3537 = vmatprep.subr.mxu0 0.0
    %3538 = vmatpush1.msra.mxu0 0.0
    %3539 = vmatprep.subr.mxu0 0.0
    %3540 = vmatpush1.msra.mxu0 0.0
    %3541 = vmatprep.subr.mxu0 0.0
    %3542 = vmatpush1.msra.mxu0 0.0
    %3543 = vmatprep.subr.mxu0 0.0
    %3544 = vmatpush1.msra.mxu0 0.0
    %3545 = vmatprep.subr.mxu0 0.0
    %3546 = vmatpush1.msra.mxu0 0.0
    %3547 = vmatprep.subr.mxu0 0.0
    %3548 = vmatpush1.msra.mxu0 0.0
    %3549 = vmatprep.subr.mxu0 0.0
    %3550 = vmatpush1.msra.mxu0 0.0
    %3551 = vmatprep.subr.mxu0 0.0
    %3552 = vmatpush1.msra.mxu0 0.0
    %3553 = vmatprep.subr.mxu0 0.0
    %3554 = vmatpush1.msra.mxu0 0.0
    %3555 = vmatprep.subr.mxu0 0.0
    %3556 = vmatpush1.msra.mxu0 0.0
    %3557 = vmatprep.subr.mxu0 0.0
    %3558 = vmatpush1.msra.mxu0 0.0
    %3559 = vmatprep.subr.mxu0 0.0
    %3560 = vmatpush1.msra.mxu0 0.0
    %3561 = vmatprep.subr.mxu0 0.0
    %3562 = vmatpush1.msra.mxu0 0.0
    %3563 = vmatprep.subr.mxu0 0.0
    %3564 = vmatpush1.msra.mxu0 0.0
    %3565 = vmatprep.subr.mxu0 0.0
    %3566 = vmatpush1.msra.mxu0 0.0
    %3567 = vmatprep.subr.mxu0 0.0
    %3568 = vmatpush1.msra.mxu0 0.0
    %3569 = vmatprep.subr.mxu0 0.0
    %3570 = vmatpush1.msra.mxu0 0.0
    %3571 = vmatprep.subr.mxu0 0.0
    %3572 = vmatpush1.msra.mxu0 0.0
    %3573 = vmatprep.subr.mxu0 0.0
    %3574 = vmatpush1.msra.mxu0 0.0
    %3575 = vmatprep.subr.mxu0 0.0
    %3576 = vmatpush1.msra.mxu0 0.0
    %3577 = vmatprep.subr.mxu0 0.0
    %3578 = vmatpush1.msra.mxu0 0.0
    %3579 = vmatprep.subr.mxu0 0.0
    %3580 = vmatpush1.msra.mxu0 0.0
    %3581 = vmatprep.subr.mxu0 0.0
    %3582 = vmatpush1.msra.mxu0 0.0
    %3583 = vmatprep.subr.mxu0 0.0
    %3584 = vmatpush1.msra.mxu0 0.0
    %3585 = vmatprep.subr.mxu0 0.0
    %3586 = vmatpush1.msra.mxu0 0.0
    %3587 = vmatprep.subr.mxu0 0.0
    %3588 = vmatpush1.msra.mxu0 0.0
    %3589 = vmatprep.mubr.f32.mxu0 0.0
    %3590 = vmatmul.mubr.f32.gmra.mrb[0].mxu0 %v3523
    %v3591 = vpop.f32.mrb[0].mxu0
    %v3592 = vadd.f32 0.0, %v3591
    %v3593 = vpop.f32.mrb[0].mxu0
    %v3594 = vadd.f32 0.0, %v3593
    %3595 = vdwg.mxu0
    %v3596 = vadd.f32 %v3518, %v3592
    %v3597 = vadd.f32 %v3519, %v3594
    %s3598 = scalar_lea.vmem %s12, 8
    %v3599 = vld [vmem:[%s3598] sm:$0x3]
    %v3601 = vsel %vm81, %v3599, 0
    %3603 = vmatprep.subr.mxu0 %v3052
    %3604 = vmatpush1.msra.mxu0 %v3050
    %3605 = vmatprep.subr.mxu0 %v3058
    %3606 = vmatpush1.msra.mxu0 %v3056
    %3607 = vmatprep.subr.mxu0 0.0
    %3608 = vmatpush1.msra.mxu0 0.0
    %3609 = vmatprep.subr.mxu0 0.0
    %3610 = vmatpush1.msra.mxu0 0.0
    %3611 = vmatprep.subr.mxu0 0.0
    %3612 = vmatpush1.msra.mxu0 0.0
    %3613 = vmatprep.subr.mxu0 0.0
    %3614 = vmatpush1.msra.mxu0 0.0
    %3615 = vmatprep.subr.mxu0 0.0
    %3616 = vmatpush1.msra.mxu0 0.0
    %3617 = vmatprep.subr.mxu0 0.0
    %3618 = vmatpush1.msra.mxu0 0.0
    %3619 = vmatprep.subr.mxu0 0.0
    %3620 = vmatpush1.msra.mxu0 0.0
    %3621 = vmatprep.subr.mxu0 0.0
    %3622 = vmatpush1.msra.mxu0 0.0
    %3623 = vmatprep.subr.mxu0 0.0
    %3624 = vmatpush1.msra.mxu0 0.0
    %3625 = vmatprep.subr.mxu0 0.0
    %3626 = vmatpush1.msra.mxu0 0.0
    %3627 = vmatprep.subr.mxu0 0.0
    %3628 = vmatpush1.msra.mxu0 0.0
    %3629 = vmatprep.subr.mxu0 0.0
    %3630 = vmatpush1.msra.mxu0 0.0
    %3631 = vmatprep.subr.mxu0 0.0
    %3632 = vmatpush1.msra.mxu0 0.0
    %3633 = vmatprep.subr.mxu0 0.0
    %3634 = vmatpush1.msra.mxu0 0.0
    %3635 = vmatprep.subr.mxu0 0.0
    %3636 = vmatpush1.msra.mxu0 0.0
    %3637 = vmatprep.subr.mxu0 0.0
    %3638 = vmatpush1.msra.mxu0 0.0
    %3639 = vmatprep.subr.mxu0 0.0
    %3640 = vmatpush1.msra.mxu0 0.0
    %3641 = vmatprep.subr.mxu0 0.0
    %3642 = vmatpush1.msra.mxu0 0.0
    %3643 = vmatprep.subr.mxu0 0.0
    %3644 = vmatpush1.msra.mxu0 0.0
    %3645 = vmatprep.subr.mxu0 0.0
    %3646 = vmatpush1.msra.mxu0 0.0
    %3647 = vmatprep.subr.mxu0 0.0
    %3648 = vmatpush1.msra.mxu0 0.0
    %3649 = vmatprep.subr.mxu0 0.0
    %3650 = vmatpush1.msra.mxu0 0.0
    %3651 = vmatprep.subr.mxu0 0.0
    %3652 = vmatpush1.msra.mxu0 0.0
    %3653 = vmatprep.subr.mxu0 0.0
    %3654 = vmatpush1.msra.mxu0 0.0
    %3655 = vmatprep.subr.mxu0 0.0
    %3656 = vmatpush1.msra.mxu0 0.0
    %3657 = vmatprep.subr.mxu0 0.0
    %3658 = vmatpush1.msra.mxu0 0.0
    %3659 = vmatprep.subr.mxu0 0.0
    %3660 = vmatpush1.msra.mxu0 0.0
    %3661 = vmatprep.subr.mxu0 0.0
    %3662 = vmatpush1.msra.mxu0 0.0
    %3663 = vmatprep.subr.mxu0 0.0
    %3664 = vmatpush1.msra.mxu0 0.0
    %3665 = vmatprep.subr.mxu0 0.0
    %3666 = vmatpush1.msra.mxu0 0.0
    %3667 = vmatprep.mubr.f32.mxu0 0.0
    %3668 = vmatmul.mubr.f32.gmra.mrb[0].mxu0 %v3601
    %v3669 = vpop.f32.mrb[0].mxu0
    %v3670 = vadd.f32 0.0, %v3669
    %v3671 = vpop.f32.mrb[0].mxu0
    %v3672 = vadd.f32 0.0, %v3671
    %3673 = vdwg.mxu0
    %v3674 = vadd.f32 %v3596, %v3670
    %v3675 = vadd.f32 %v3597, %v3672
    %s3676 = scalar_lea.vmem %s12, 10
    %v3677 = vld [vmem:[%s3676] sm:$0x3]
    %v3679 = vsel %vm81, %v3677, 0
    %3681 = vmatprep.subr.mxu0 %v3129
    %3682 = vmatpush1.msra.mxu0 %v3127
    %3683 = vmatprep.subr.mxu0 %v3135
    %3684 = vmatpush1.msra.mxu0 %v3133
    %3685 = vmatprep.subr.mxu0 0.0
    %3686 = vmatpush1.msra.mxu0 0.0
    %3687 = vmatprep.subr.mxu0 0.0
    %3688 = vmatpush1.msra.mxu0 0.0
    %3689 = vmatprep.subr.mxu0 0.0
    %3690 = vmatpush1.msra.mxu0 0.0
    %3691 = vmatprep.subr.mxu0 0.0
    %3692 = vmatpush1.msra.mxu0 0.0
    %3693 = vmatprep.subr.mxu0 0.0
    %3694 = vmatpush1.msra.mxu0 0.0
    %3695 = vmatprep.subr.mxu0 0.0
    %3696 = vmatpush1.msra.mxu0 0.0
    %3697 = vmatprep.subr.mxu0 0.0
    %3698 = vmatpush1.msra.mxu0 0.0
    %3699 = vmatprep.subr.mxu0 0.0
    %3700 = vmatpush1.msra.mxu0 0.0
    %3701 = vmatprep.subr.mxu0 0.0
    %3702 = vmatpush1.msra.mxu0 0.0
    %3703 = vmatprep.subr.mxu0 0.0
    %3704 = vmatpush1.msra.mxu0 0.0
    %3705 = vmatprep.subr.mxu0 0.0
    %3706 = vmatpush1.msra.mxu0 0.0
    %3707 = vmatprep.subr.mxu0 0.0
    %3708 = vmatpush1.msra.mxu0 0.0
    %3709 = vmatprep.subr.mxu0 0.0
    %3710 = vmatpush1.msra.mxu0 0.0
    %3711 = vmatprep.subr.mxu0 0.0
    %3712 = vmatpush1.msra.mxu0 0.0
    %3713 = vmatprep.subr.mxu0 0.0
    %3714 = vmatpush1.msra.mxu0 0.0
    %3715 = vmatprep.subr.mxu0 0.0
    %3716 = vmatpush1.msra.mxu0 0.0
    %3717 = vmatprep.subr.mxu0 0.0
    %3718 = vmatpush1.msra.mxu0 0.0
    %3719 = vmatprep.subr.mxu0 0.0
    %3720 = vmatpush1.msra.mxu0 0.0
    %3721 = vmatprep.subr.mxu0 0.0
    %3722 = vmatpush1.msra.mxu0 0.0
    %3723 = vmatprep.subr.mxu0 0.0
    %3724 = vmatpush1.msra.mxu0 0.0
    %3725 = vmatprep.subr.mxu0 0.0
    %3726 = vmatpush1.msra.mxu0 0.0
    %3727 = vmatprep.subr.mxu0 0.0
    %3728 = vmatpush1.msra.mxu0 0.0
    %3729 = vmatprep.subr.mxu0 0.0
    %3730 = vmatpush1.msra.mxu0 0.0
    %3731 = vmatprep.subr.mxu0 0.0
    %3732 = vmatpush1.msra.mxu0 0.0
    %3733 = vmatprep.subr.mxu0 0.0
    %3734 = vmatpush1.msra.mxu0 0.0
    %3735 = vmatprep.subr.mxu0 0.0
    %3736 = vmatpush1.msra.mxu0 0.0
    %3737 = vmatprep.subr.mxu0 0.0
    %3738 = vmatpush1.msra.mxu0 0.0
    %3739 = vmatprep.subr.mxu0 0.0
    %3740 = vmatpush1.msra.mxu0 0.0
    %3741 = vmatprep.subr.mxu0 0.0
    %3742 = vmatpush1.msra.mxu0 0.0
    %3743 = vmatprep.subr.mxu0 0.0
    %3744 = vmatpush1.msra.mxu0 0.0
    %3745 = vmatprep.mubr.f32.mxu0 0.0
    %3746 = vmatmul.mubr.f32.gmra.mrb[0].mxu0 %v3679
    %v3747 = vpop.f32.mrb[0].mxu0
    %v3748 = vadd.f32 0.0, %v3747
    %v3749 = vpop.f32.mrb[0].mxu0
    %v3750 = vadd.f32 0.0, %v3749
    %3751 = vdwg.mxu0
    %v3752 = vadd.f32 %v3674, %v3748
    %v3753 = vadd.f32 %v3675, %v3750
    %s3754 = scalar_lea.vmem %s12, 12
    %v3755 = vld [vmem:[%s3754] sm:$0x3]
    %v3757 = vsel %vm81, %v3755, 0
    %3759 = vmatprep.subr.mxu0 %v3206
    %3760 = vmatpush1.msra.mxu0 %v3204
    %3761 = vmatprep.subr.mxu0 %v3212
    %3762 = vmatpush1.msra.mxu0 %v3210
    %3763 = vmatprep.subr.mxu0 0.0
    %3764 = vmatpush1.msra.mxu0 0.0
    %3765 = vmatprep.subr.mxu0 0.0
    %3766 = vmatpush1.msra.mxu0 0.0
    %3767 = vmatprep.subr.mxu0 0.0
    %3768 = vmatpush1.msra.mxu0 0.0
    %3769 = vmatprep.subr.mxu0 0.0
    %3770 = vmatpush1.msra.mxu0 0.0
    %3771 = vmatprep.subr.mxu0 0.0
    %3772 = vmatpush1.msra.mxu0 0.0
    %3773 = vmatprep.subr.mxu0 0.0
    %3774 = vmatpush1.msra.mxu0 0.0
    %3775 = vmatprep.subr.mxu0 0.0
    %3776 = vmatpush1.msra.mxu0 0.0
    %3777 = vmatprep.subr.mxu0 0.0
    %3778 = vmatpush1.msra.mxu0 0.0
    %3779 = vmatprep.subr.mxu0 0.0
    %3780 = vmatpush1.msra.mxu0 0.0
    %3781 = vmatprep.subr.mxu0 0.0
    %3782 = vmatpush1.msra.mxu0 0.0
    %3783 = vmatprep.subr.mxu0 0.0
    %3784 = vmatpush1.msra.mxu0 0.0
    %3785 = vmatprep.subr.mxu0 0.0
    %3786 = vmatpush1.msra.mxu0 0.0
    %3787 = vmatprep.subr.mxu0 0.0
    %3788 = vmatpush1.msra.mxu0 0.0
    %3789 = vmatprep.subr.mxu0 0.0
    %3790 = vmatpush1.msra.mxu0 0.0
    %3791 = vmatprep.subr.mxu0 0.0
    %3792 = vmatpush1.msra.mxu0 0.0
    %3793 = vmatprep.subr.mxu0 0.0
    %3794 = vmatpush1.msra.mxu0 0.0
    %3795 = vmatprep.subr.mxu0 0.0
    %3796 = vmatpush1.msra.mxu0 0.0
    %3797 = vmatprep.subr.mxu0 0.0
    %3798 = vmatpush1.msra.mxu0 0.0
    %3799 = vmatprep.subr.mxu0 0.0
    %3800 = vmatpush1.msra.mxu0 0.0
    %3801 = vmatprep.subr.mxu0 0.0
    %3802 = vmatpush1.msra.mxu0 0.0
    %3803 = vmatprep.subr.mxu0 0.0
    %3804 = vmatpush1.msra.mxu0 0.0
    %3805 = vmatprep.subr.mxu0 0.0
    %3806 = vmatpush1.msra.mxu0 0.0
    %3807 = vmatprep.subr.mxu0 0.0
    %3808 = vmatpush1.msra.mxu0 0.0
    %3809 = vmatprep.subr.mxu0 0.0
    %3810 = vmatpush1.msra.mxu0 0.0
    %3811 = vmatprep.subr.mxu0 0.0
    %3812 = vmatpush1.msra.mxu0 0.0
    %3813 = vmatprep.subr.mxu0 0.0
    %3814 = vmatpush1.msra.mxu0 0.0
    %3815 = vmatprep.subr.mxu0 0.0
    %3816 = vmatpush1.msra.mxu0 0.0
    %3817 = vmatprep.subr.mxu0 0.0
    %3818 = vmatpush1.msra.mxu0 0.0
    %3819 = vmatprep.subr.mxu0 0.0
    %3820 = vmatpush1.msra.mxu0 0.0
    %3821 = vmatprep.subr.mxu0 0.0
    %3822 = vmatpush1.msra.mxu0 0.0
    %3823 = vmatprep.mubr.f32.mxu0 0.0
    %3824 = vmatmul.mubr.f32.gmra.mrb[0].mxu0 %v3757
    %v3825 = vpop.f32.mrb[0].mxu0
    %v3826 = vadd.f32 0.0, %v3825
    %v3827 = vpop.f32.mrb[0].mxu0
    %v3828 = vadd.f32 0.0, %v3827
    %3829 = vdwg.mxu0
    %v3830 = vadd.f32 %v3752, %v3826
    %v3831 = vadd.f32 %v3753, %v3828
    %s3832 = scalar_lea.vmem %s12, 14
    %v3833 = vld [vmem:[%s3832] sm:$0x3]
    %v3835 = vsel %vm81, %v3833, 0
    %3837 = vmatprep.subr.mxu0 %v3283
    %3838 = vmatpush1.msra.mxu0 %v3281
    %3839 = vmatprep.subr.mxu0 %v3289
    %3840 = vmatpush1.msra.mxu0 %v3287
    %3841 = vmatprep.subr.mxu0 0.0
    %3842 = vmatpush1.msra.mxu0 0.0
    %3843 = vmatprep.subr.mxu0 0.0
    %3844 = vmatpush1.msra.mxu0 0.0
    %3845 = vmatprep.subr.mxu0 0.0
    %3846 = vmatpush1.msra.mxu0 0.0
    %3847 = vmatprep.subr.mxu0 0.0
    %3848 = vmatpush1.msra.mxu0 0.0
    %3849 = vmatprep.subr.mxu0 0.0
    %3850 = vmatpush1.msra.mxu0 0.0
    %3851 = vmatprep.subr.mxu0 0.0
    %3852 = vmatpush1.msra.mxu0 0.0
    %3853 = vmatprep.subr.mxu0 0.0
    %3854 = vmatpush1.msra.mxu0 0.0
    %3855 = vmatprep.subr.mxu0 0.0
    %3856 = vmatpush1.msra.mxu0 0.0
    %3857 = vmatprep.subr.mxu0 0.0
    %3858 = vmatpush1.msra.mxu0 0.0
    %3859 = vmatprep.subr.mxu0 0.0
    %3860 = vmatpush1.msra.mxu0 0.0
    %3861 = vmatprep.subr.mxu0 0.0
    %3862 = vmatpush1.msra.mxu0 0.0
    %3863 = vmatprep.subr.mxu0 0.0
    %3864 = vmatpush1.msra.mxu0 0.0
    %3865 = vmatprep.subr.mxu0 0.0
    %3866 = vmatpush1.msra.mxu0 0.0
    %3867 = vmatprep.subr.mxu0 0.0
    %3868 = vmatpush1.msra.mxu0 0.0
    %3869 = vmatprep.subr.mxu0 0.0
    %3870 = vmatpush1.msra.mxu0 0.0
    %3871 = vmatprep.subr.mxu0 0.0
    %3872 = vmatpush1.msra.mxu0 0.0
    %3873 = vmatprep.subr.mxu0 0.0
    %3874 = vmatpush1.msra.mxu0 0.0
    %3875 = vmatprep.subr.mxu0 0.0
    %3876 = vmatpush1.msra.mxu0 0.0
    %3877 = vmatprep.subr.mxu0 0.0
    %3878 = vmatpush1.msra.mxu0 0.0
    %3879 = vmatprep.subr.mxu0 0.0
    %3880 = vmatpush1.msra.mxu0 0.0
    %3881 = vmatprep.subr.mxu0 0.0
    %3882 = vmatpush1.msra.mxu0 0.0
    %3883 = vmatprep.subr.mxu0 0.0
    %3884 = vmatpush1.msra.mxu0 0.0
    %3885 = vmatprep.subr.mxu0 0.0
    %3886 = vmatpush1.msra.mxu0 0.0
    %3887 = vmatprep.subr.mxu0 0.0
    %3888 = vmatpush1.msra.mxu0 0.0
    %3889 = vmatprep.subr.mxu0 0.0
    %3890 = vmatpush1.msra.mxu0 0.0
    %3891 = vmatprep.subr.mxu0 0.0
    %3892 = vmatpush1.msra.mxu0 0.0
    %3893 = vmatprep.subr.mxu0 0.0
    %3894 = vmatpush1.msra.mxu0 0.0
    %3895 = vmatprep.subr.mxu0 0.0
    %3896 = vmatpush1.msra.mxu0 0.0
    %3897 = vmatprep.subr.mxu0 0.0
    %3898 = vmatpush1.msra.mxu0 0.0
    %3899 = vmatprep.subr.mxu0 0.0
    %3900 = vmatpush1.msra.mxu0 0.0
    %3901 = vmatprep.mubr.f32.mxu0 0.0
    %3902 = vmatmul.mubr.f32.gmra.mrb[0].mxu0 %v3835
    %v3903 = vpop.f32.mrb[0].mxu0
    %v3904 = vadd.f32 0.0, %v3903
    %v3905 = vpop.f32.mrb[0].mxu0
    %v3906 = vadd.f32 0.0, %v3905
    %3907 = vdwg.mxu0
    %v3908 = vadd.f32 %v3830, %v3904
    %v3909 = vadd.f32 %v3831, %v3906
    %s3910 = sld [smem:[#allocation2 + $0x9]]
    %v3911 = vstv %s3910
    %v3912 = vadd.f32 %v3908, %v3911
    %v3913 = vadd.f32 %v3909, %v3911
    %v3914 = vtanh.pop %v3912
    %v3915 = vtanh.pop %v3913
    %v3918 = vcombine.low %v3914, %v3915
    %v3920 = vunpack.c.l.s4 1983009808
    %v3921 = vunpack.c.0.s8 %v3920
    %v3922 = vlaneseq
    %v3923 = vshrl.u32 %v3922, 7
    %v3924 = vsub.s32 %v3921, %v3923
    %v3925 = vrot.slane %v3918, %v3924
    %3927 = vst [vmem:[%s16] sm:$0xf] %v3925
    // Predicated region
    $region70: #{vqvae_forward.1} parent=1 // pred_check
      _
    $region71: #{vqvae_forward.1} parent=1 // pred_check_branch
      %3929 = sbr.rel (0) target = $region73
    $region72: #{vqvae_forward.1} parent=1 // pred_region
      _
    $region73: #{vqvae_forward.1} parent=1 // pred_fallthru
      _
    // Predicated region
    $region74: #{vqvae_forward.1} parent=1 // pred_check
      _
    $region75: #{vqvae_forward.1} parent=1 // pred_check_branch
      %3931 = sbr.rel (0) target = $region77
    $region76: #{vqvae_forward.1} parent=1 // pred_region
      %s3933 = ssub.s32 16, 16
      %3934 = vsyncadd [#allocation3], %s3933
      %3937 = dma.smem_to_hbm [#allocation5], 16, %s17, [#allocation3]
    $region77: #{vqvae_forward.1} parent=1 // pred_fallthru
      _
    // Predicated region
    $region78: #{vqvae_forward.1} parent=1 // pred_check
      _
    $region79: #{vqvae_forward.1} parent=1 // pred_check_branch
      %3939 = sbr.rel (0) target = $region81
    $region80: #{vqvae_forward.1} parent=1 // pred_region
      _
    $region81: #{vqvae_forward.1} parent=1 // pred_fallthru
      _
    // Predicated region
    $region82: #{vqvae_forward.1} parent=1 // pred_check
      _
    $region83: #{vqvae_forward.1} parent=1 // pred_check_branch
      %3941 = sbr.rel (0) target = $region85
    $region84: #{vqvae_forward.1} parent=1 // pred_region
      %3942 = dma.done [#allocation3], 16
    $region85: #{vqvae_forward.1} parent=1 // pred_fallthru
      _
    %3943 = sfence
    %3944 = vsyncpa [#allocation3], 1
    %3945 = vsyncpa [#allocation4], 1

</llo_original>
